<compile_context>
chip_gen: v6e
topology: v6e:2x2x1
jax: 0.10.0
libtpu: 0.0.40
codegen_flags: <defaults>
</compile_context>

<pallas_src>
import functools

import jax
import jax.numpy as jnp
import numpy as np
from jax.experimental import pallas as pl
from jax.experimental.pallas import tpu as pltpu


# ----------------------------------------------------------------------------
# Fused kernel
# ----------------------------------------------------------------------------
def _make_fused_tcn_kernel(layer_cfgs, kernel_size, out_lanes):
    """layer_cfgs: tuple of (c_in, c_out, dilation, has_residual_conv)."""
    K = kernel_size

    def kernel(*refs):
        x_ref = refs[0]          # (1, Cin0, T)
        o_ref = refs[-1]         # (1, 1, out_lanes)
        prefs = refs[1:-1]       # flat parameter refs

        h = x_ref[0].astype(jnp.float32)          # (Cin0, T) for this batch elem
        idx = 0
        for (c_in, c_out, dil, has_res) in layer_cfgs:
            pad = (K - 1) * dil
            l_in = h.shape[-1]

            w1_ref = prefs[idx]                   # (K, c_out, c_in)
            b1 = prefs[idx + 1][...]              # (c_out, 1)
            w2_ref = prefs[idx + 2]               # (K, c_out, c_out)
            b2 = prefs[idx + 3][...]              # (c_out, 1)

            # ---- residual branch (1x1 conv if channel count changes) ----
            if has_res:
                rw = prefs[idx + 4][...]          # (c_out, c_in)
                rb = prefs[idx + 5][...]          # (c_out, 1)
                res = jnp.dot(rw, h, preferred_element_type=jnp.float32) + rb
                idx += 6
            else:
                res = h
                idx += 4

            # ---- conv1 (+ReLU): padding synthesized in VMEM ----
            zpad_in = jnp.zeros((c_in, pad), jnp.float32)
            hp = jnp.concatenate([zpad_in, h, zpad_in], axis=-1)   # (c_in, l_in+2p)
            l1 = l_in + pad
            acc1 = jnp.zeros((c_out, l1), jnp.float32)
            for j in range(K):                                     # K=3: static unroll
                acc1 = acc1 + jnp.dot(w1_ref[j],
                                      hp[:, j * dil: j * dil + l1],
                                      preferred_element_type=jnp.float32)
            out1 = jnp.maximum(acc1 + b1, 0.0)
            # TODO(synk): nn.Dropout is stochastic; identity in eval mode.

            # ---- conv2 (+ReLU), chomp fused: only first l_in+pad outputs ----
            zpad_mid = jnp.zeros((c_out, pad), jnp.float32)
            hp2 = jnp.concatenate([zpad_mid, out1], axis=-1)       # (c_out, l_in+2p)
            l2 = l_in + pad
            acc2 = jnp.zeros((c_out, l2), jnp.float32)
            for j in range(K):
                acc2 = acc2 + jnp.dot(w2_ref[j],
                                      hp2[:, j * dil: j * dil + l2],
                                      preferred_element_type=jnp.float32)
            out2 = jnp.maximum(acc2 + b2, 0.0)

            # ---- residual add + ReLU epilogue (residual zero-padded to l2) ----
            res_p = jnp.concatenate(
                [res, jnp.zeros((c_out, l2 - l_in), jnp.float32)], axis=-1)
            h = jnp.maximum(out2 + res_p, 0.0)

        # ---- final: last time step -> Linear(hidden, 1), fused in epilogue ----
        w_out = prefs[idx][...]                   # (1, hidden)
        b_out = prefs[idx + 1][...]               # (1, 1)
        last = h[:, h.shape[-1] - 1:]             # (hidden, 1)
        pred = jnp.dot(w_out, last, preferred_element_type=jnp.float32) + b_out
        # lane-dense (unmasked) store; wrapper slices column 0
        o_ref[...] = jnp.broadcast_to(
            pred.reshape(1, 1, 1), (1, 1, out_lanes)).astype(o_ref.dtype)

    return kernel


# ----------------------------------------------------------------------------
# Parameter helpers
# ----------------------------------------------------------------------------
def weight_norm(v, g):
    """PyTorch nn.utils.weight_norm with dim=0: w = g * v / ||v||_{dims 1,2}."""
    norm = jnp.sqrt(jnp.sum(v * v, axis=(1, 2), keepdims=True))
    return (g.reshape(-1, 1, 1) / norm) * v


def init_params(key, input_size, hidden, kernel_size, num_layers):
    params = []
    for i in range(num_layers):
        in_ch = input_size if i == 0 else hidden
        out_ch = hidden
        keys = jax.random.split(jax.random.fold_in(key, i), 8)
        blk = {
            "v1": 0.1 * jax.random.normal(keys[0], (out_ch, in_ch, kernel_size), jnp.float32),
            "g1": 1.0 + 0.05 * jax.random.normal(keys[1], (out_ch,), jnp.float32),
            "b1": 0.1 * jax.random.normal(keys[2], (out_ch,), jnp.float32),
            "v2": 0.1 * jax.random.normal(keys[3], (out_ch, out_ch, kernel_size), jnp.float32),
            "g2": 1.0 + 0.05 * jax.random.normal(keys[4], (out_ch,), jnp.float32),
            "b2": 0.1 * jax.random.normal(keys[5], (out_ch,), jnp.float32),
        }
        if in_ch != out_ch:
            blk["rw"] = 0.1 * jax.random.normal(keys[6], (out_ch, in_ch, 1), jnp.float32)
            blk["rb"] = 0.1 * jax.random.normal(keys[7], (out_ch,), jnp.float32)
        params.append(blk)
    klin = jax.random.split(jax.random.fold_in(key, 1000), 2)
    out_layer = {
        "w": 0.1 * jax.random.normal(klin[0], (1, hidden), jnp.float32),
        "b": 0.1 * jax.random.normal(klin[1], (1,), jnp.float32),
    }
    return params, out_layer


# ----------------------------------------------------------------------------
# Forward pass: one fused pallas_call
# ----------------------------------------------------------------------------
def temporal_conv_net_forward(x, params, out_layer, kernel_size=3):
    """x: (B, T, input_size) -> (B, 1). Mirrors TemporalConvNet.forward (eval)."""
    B, T, C0 = x.shape
    K = kernel_size
    h0 = jnp.transpose(x, (0, 2, 1)).astype(jnp.float32)  # (B, C, T), like permute

    # Flatten parameters (weight-norm applied, tap axis first) in a fixed order.
    flat = []
    cfgs = []
    for i, blk in enumerate(params):
        dil = 2 ** i
        c_out, c_in, _ = blk["v1"].shape
        w1 = weight_norm(blk["v1"], blk["g1"])             # (c_out, c_in, K)
        w2 = weight_norm(blk["v2"], blk["g2"])
        flat += [jnp.transpose(w1, (2, 0, 1)),             # (K, c_out, c_in)
                 blk["b1"].reshape(c_out, 1),
                 jnp.transpose(w2, (2, 0, 1)),             # (K, c_out, c_out)
                 blk["b2"].reshape(c_out, 1)]
        has_res = "rw" in blk
        if has_res:
            flat += [blk["rw"][:, :, 0], blk["rb"].reshape(c_out, 1)]
        cfgs.append((c_in, c_out, dil, has_res))
    hidden = cfgs[-1][1]
    flat += [out_layer["w"].reshape(1, hidden), out_layer["b"].reshape(1, 1)]

    OUT_LANES = 128
    kernel = _make_fused_tcn_kernel(tuple(cfgs), K, OUT_LANES)

    in_specs = [pl.BlockSpec((1, C0, T), lambda b: (b, 0, 0))]
    for p in flat:
        in_specs.append(pl.BlockSpec(p.shape, lambda b, _n=p.ndim: (0,) * _n))

    y_wide = pl.pallas_call(
        kernel,
        out_shape=jax.ShapeDtypeStruct((B, 1, OUT_LANES), jnp.float32),
        grid=(B,),
        in_specs=in_specs,
        out_specs=pl.BlockSpec((1, 1, OUT_LANES), lambda b: (b, 0, 0)),
        compiler_params=pltpu.CompilerParams(
            dimension_semantics=("parallel",)),
    )(h0, *flat)

    return y_wide[:, 0, :1]                                # (B, 1)


# ----------------------------------------------------------------------------
# Pure-JAX reference (correctness check only)
# ----------------------------------------------------------------------------
def _conv1d_ref(x, w, b, dilation, padding):
    out = jax.lax.conv_general_dilated(
        x, w, window_strides=(1,), padding=[(padding, padding)],
        rhs_dilation=(dilation,), dimension_numbers=("NCH", "OIH", "NCH"))
    return out + b[None, :, None]


def _forward_ref(x, params, out_layer, kernel_size=3):
    h = jnp.transpose(x, (0, 2, 1))
    for i, blk in enumerate(params):
        dilation = 2 ** i
        padding = (kernel_size - 1) * dilation
        if "rw" in blk:
            residual = _conv1d_ref(h, blk["rw"], blk["rb"], 1, 0)
        else:
            residual = h
        w1 = weight_norm(blk["v1"], blk["g1"])
        w2 = weight_norm(blk["v2"], blk["g2"])
        out = jax.nn.relu(_conv1d_ref(h, w1, blk["b1"], dilation, padding))
        out = jax.nn.relu(_conv1d_ref(out, w2, blk["b2"], dilation, padding))
        if padding > 0:
            out = out[:, :, :-padding]
        Lout, Lres = out.shape[2], residual.shape[2]
        if Lres > Lout:
            residual = residual[:, :, :Lout]
        elif Lres < Lout:
            residual = jnp.pad(residual, ((0, 0), (0, 0), (0, Lout - Lres)))
        h = jax.nn.relu(out + residual)
    last = h[:, :, -1]
    return last @ out_layer["w"].T + out_layer["b"]


# ----------------------------------------------------------------------------
if __name__ == "__main__":
    B, T = 2, 16
    input_size, hidden, kernel_size, num_layers = 4, 8, 3, 4

    key = jax.random.PRNGKey(0)
    kx, kp = jax.random.split(key)
    x = jax.random.normal(kx, (B, T, input_size), jnp.float32)
    params, out_layer = init_params(kp, input_size, hidden, kernel_size, num_layers)

    fwd = jax.jit(functools.partial(temporal_conv_net_forward,
                                    kernel_size=kernel_size))
    y = fwd(x, params, out_layer)
    jax.block_until_ready(y)

    y_ref = _forward_ref(x, params, out_layer, kernel_size)
    np.testing.assert_allclose(np.asarray(y), np.asarray(y_ref),
                               rtol=1e-4, atol=1e-4)
    assert y.shape == (B, 1)
    print("KERNEL_OK")
</pallas_src>

<mosaic_0001>
module attributes {stable_mosaic.version = 11 : i64} {
  func.func @kernel(%arg0: i32, %arg1: memref<1x4x16xf32, #tpu.memory_space<vmem>>, %arg2: memref<3x8x4xf32, #tpu.memory_space<vmem>>, %arg3: memref<8x1xf32, #tpu.memory_space<vmem>>, %arg4: memref<3x8x8xf32, #tpu.memory_space<vmem>>, %arg5: memref<8x1xf32, #tpu.memory_space<vmem>>, %arg6: memref<8x4xf32, #tpu.memory_space<vmem>>, %arg7: memref<8x1xf32, #tpu.memory_space<vmem>>, %arg8: memref<3x8x8xf32, #tpu.memory_space<vmem>>, %arg9: memref<8x1xf32, #tpu.memory_space<vmem>>, %arg10: memref<3x8x8xf32, #tpu.memory_space<vmem>>, %arg11: memref<8x1xf32, #tpu.memory_space<vmem>>, %arg12: memref<3x8x8xf32, #tpu.memory_space<vmem>>, %arg13: memref<8x1xf32, #tpu.memory_space<vmem>>, %arg14: memref<3x8x8xf32, #tpu.memory_space<vmem>>, %arg15: memref<8x1xf32, #tpu.memory_space<vmem>>, %arg16: memref<3x8x8xf32, #tpu.memory_space<vmem>>, %arg17: memref<8x1xf32, #tpu.memory_space<vmem>>, %arg18: memref<3x8x8xf32, #tpu.memory_space<vmem>>, %arg19: memref<8x1xf32, #tpu.memory_space<vmem>>, %arg20: memref<1x8xf32, #tpu.memory_space<vmem>>, %arg21: memref<1x1xf32, #tpu.memory_space<vmem>>, %arg22: memref<1x1x128xf32, #tpu.memory_space<vmem>>) attributes {dimension_semantics = [#tpu.dimension_semantics<parallel>], iteration_bounds = array<i64: 2>, scalar_prefetch = 0 : i64, scratch_operands = 0 : i64, tpu.core_type = #tpu.core_type<tc>, window_params = [{transform_indices = @transform_0, window_bounds = array<i64: 1, 4, 16>}, {pipeline_mode = #tpu.pipeline_mode<synchronous>, transform_indices = @transform_1, window_bounds = array<i64: 3, 8, 4>}, {pipeline_mode = #tpu.pipeline_mode<synchronous>, transform_indices = @transform_2, window_bounds = array<i64: 8, 1>}, {pipeline_mode = #tpu.pipeline_mode<synchronous>, transform_indices = @transform_3, window_bounds = array<i64: 3, 8, 8>}, {pipeline_mode = #tpu.pipeline_mode<synchronous>, transform_indices = @transform_4, window_bounds = array<i64: 8, 1>}, {pipeline_mode = #tpu.pipeline_mode<synchronous>, transform_indices = @transform_5, window_bounds = array<i64: 8, 4>}, {pipeline_mode = #tpu.pipeline_mode<synchronous>, transform_indices = @transform_6, window_bounds = array<i64: 8, 1>}, {pipeline_mode = #tpu.pipeline_mode<synchronous>, transform_indices = @transform_7, window_bounds = array<i64: 3, 8, 8>}, {pipeline_mode = #tpu.pipeline_mode<synchronous>, transform_indices = @transform_8, window_bounds = array<i64: 8, 1>}, {pipeline_mode = #tpu.pipeline_mode<synchronous>, transform_indices = @transform_9, window_bounds = array<i64: 3, 8, 8>}, {pipeline_mode = #tpu.pipeline_mode<synchronous>, transform_indices = @transform_10, window_bounds = array<i64: 8, 1>}, {pipeline_mode = #tpu.pipeline_mode<synchronous>, transform_indices = @transform_11, window_bounds = array<i64: 3, 8, 8>}, {pipeline_mode = #tpu.pipeline_mode<synchronous>, transform_indices = @transform_12, window_bounds = array<i64: 8, 1>}, {pipeline_mode = #tpu.pipeline_mode<synchronous>, transform_indices = @transform_13, window_bounds = array<i64: 3, 8, 8>}, {pipeline_mode = #tpu.pipeline_mode<synchronous>, transform_indices = @transform_14, window_bounds = array<i64: 8, 1>}, {pipeline_mode = #tpu.pipeline_mode<synchronous>, transform_indices = @transform_15, window_bounds = array<i64: 3, 8, 8>}, {pipeline_mode = #tpu.pipeline_mode<synchronous>, transform_indices = @transform_16, window_bounds = array<i64: 8, 1>}, {pipeline_mode = #tpu.pipeline_mode<synchronous>, transform_indices = @transform_17, window_bounds = array<i64: 3, 8, 8>}, {pipeline_mode = #tpu.pipeline_mode<synchronous>, transform_indices = @transform_18, window_bounds = array<i64: 8, 1>}, {pipeline_mode = #tpu.pipeline_mode<synchronous>, transform_indices = @transform_19, window_bounds = array<i64: 1, 8>}, {pipeline_mode = #tpu.pipeline_mode<synchronous>, transform_indices = @transform_20, window_bounds = array<i64: 1, 1>}, {transform_indices = @transform_21, window_bounds = array<i64: 1, 1, 128>}]} {
    %c0 = arith.constant 0 : index
    %c0_0 = arith.constant 0 : index
    %c0_1 = arith.constant 0 : index
    %0 = vector.load %arg1[%c0, %c0_0, %c0_1] : memref<1x4x16xf32, #tpu.memory_space<vmem>>, vector<1x4x16xf32>
    %1 = vector.shape_cast %0 : vector<1x4x16xf32> to vector<4x16xf32>
    %c0_2 = arith.constant 0 : index
    %c0_3 = arith.constant 0 : index
    %2 = vector.load %arg3[%c0_2, %c0_3] : memref<8x1xf32, #tpu.memory_space<vmem>>, vector<8x1xf32>
    %c0_4 = arith.constant 0 : index
    %c0_5 = arith.constant 0 : index
    %3 = vector.load %arg5[%c0_4, %c0_5] : memref<8x1xf32, #tpu.memory_space<vmem>>, vector<8x1xf32>
    %c0_6 = arith.constant 0 : index
    %c0_7 = arith.constant 0 : index
    %4 = vector.load %arg6[%c0_6, %c0_7] : memref<8x4xf32, #tpu.memory_space<vmem>>, vector<8x4xf32>
    %c0_8 = arith.constant 0 : index
    %c0_9 = arith.constant 0 : index
    %5 = vector.load %arg7[%c0_8, %c0_9] : memref<8x1xf32, #tpu.memory_space<vmem>>, vector<8x1xf32>
    %cst = arith.constant dense<0.000000e+00> : vector<8x16xf32>
    %6 = tpu.matmul %4, %1, %cst {dimension_numbers = #tpu.dot_dimension_numbers<[1], [0], [0], [1], [0, 0, 1, 1], [], []>} : vector<8x4xf32>, vector<4x16xf32>, vector<8x16xf32> -> vector<8x16xf32>
    %7 = vector.broadcast %5 : vector<8x1xf32> to vector<8x16xf32>
    %8 = arith.addf %6, %7 : vector<8x16xf32>
    %cst_10 = arith.constant 0.000000e+00 : f32
    %9 = vector.broadcast %cst_10 : f32 to vector<4x2xf32>
    %10 = tpu.concatenate %9, %1, %9 in 1 : vector<4x2xf32>, vector<4x16xf32>, vector<4x2xf32> -> vector<4x20xf32>
    %cst_11 = arith.constant 0.000000e+00 : f32
    %11 = vector.broadcast %cst_11 : f32 to vector<8x18xf32>
    %c0_12 = arith.constant 0 : index
    %c0_13 = arith.constant 0 : index
    %c0_14 = arith.constant 0 : index
    %12 = vector.load %arg2[%c0_12, %c0_13, %c0_14] : memref<3x8x4xf32, #tpu.memory_space<vmem>>, vector<1x8x4xf32>
    %13 = vector.shape_cast %12 : vector<1x8x4xf32> to vector<8x4xf32>
    %14 = vector.extract_strided_slice %10 {offsets = [0, 0], sizes = [4, 18], strides = [1, 1]} : vector<4x20xf32> to vector<4x18xf32>
    %cst_15 = arith.constant dense<0.000000e+00> : vector<8x18xf32>
    %15 = tpu.matmul %13, %14, %cst_15 {dimension_numbers = #tpu.dot_dimension_numbers<[1], [0], [0], [1], [0, 0, 1, 1], [], []>} : vector<8x4xf32>, vector<4x18xf32>, vector<8x18xf32> -> vector<8x18xf32>
    %16 = arith.addf %11, %15 : vector<8x18xf32>
    %c1 = arith.constant 1 : index
    %c0_16 = arith.constant 0 : index
    %c0_17 = arith.constant 0 : index
    %17 = vector.load %arg2[%c1, %c0_16, %c0_17] : memref<3x8x4xf32, #tpu.memory_space<vmem>>, vector<1x8x4xf32>
    %18 = vector.shape_cast %17 : vector<1x8x4xf32> to vector<8x4xf32>
    %19 = vector.extract_strided_slice %10 {offsets = [0, 1], sizes = [4, 18], strides = [1, 1]} : vector<4x20xf32> to vector<4x18xf32>
    %cst_18 = arith.constant dense<0.000000e+00> : vector<8x18xf32>
    %20 = tpu.matmul %18, %19, %cst_18 {dimension_numbers = #tpu.dot_dimension_numbers<[1], [0], [0], [1], [0, 0, 1, 1], [], []>} : vector<8x4xf32>, vector<4x18xf32>, vector<8x18xf32> -> vector<8x18xf32>
    %21 = arith.addf %16, %20 : vector<8x18xf32>
    %c2 = arith.constant 2 : index
    %c0_19 = arith.constant 0 : index
    %c0_20 = arith.constant 0 : index
    %22 = vector.load %arg2[%c2, %c0_19, %c0_20] : memref<3x8x4xf32, #tpu.memory_space<vmem>>, vector<1x8x4xf32>
    %23 = vector.shape_cast %22 : vector<1x8x4xf32> to vector<8x4xf32>
    %24 = vector.extract_strided_slice %10 {offsets = [0, 2], sizes = [4, 18], strides = [1, 1]} : vector<4x20xf32> to vector<4x18xf32>
    %cst_21 = arith.constant dense<0.000000e+00> : vector<8x18xf32>
    %25 = tpu.matmul %23, %24, %cst_21 {dimension_numbers = #tpu.dot_dimension_numbers<[1], [0], [0], [1], [0, 0, 1, 1], [], []>} : vector<8x4xf32>, vector<4x18xf32>, vector<8x18xf32> -> vector<8x18xf32>
    %26 = arith.addf %21, %25 : vector<8x18xf32>
    %27 = vector.broadcast %2 : vector<8x1xf32> to vector<8x18xf32>
    %28 = arith.addf %26, %27 : vector<8x18xf32>
    %cst_22 = arith.constant 0.000000e+00 : f32
    %29 = vector.broadcast %cst_22 : f32 to vector<8x18xf32>
    %30 = arith.maximumf %28, %29 : vector<8x18xf32>
    %cst_23 = arith.constant 0.000000e+00 : f32
    %31 = vector.broadcast %cst_23 : f32 to vector<8x2xf32>
    %32 = tpu.concatenate %31, %30 in 1 : vector<8x2xf32>, vector<8x18xf32> -> vector<8x20xf32>
    %cst_24 = arith.constant 0.000000e+00 : f32
    %33 = vector.broadcast %cst_24 : f32 to vector<8x18xf32>
    %c0_25 = arith.constant 0 : index
    %c0_26 = arith.constant 0 : index
    %c0_27 = arith.constant 0 : index
    %34 = vector.load %arg4[%c0_25, %c0_26, %c0_27] : memref<3x8x8xf32, #tpu.memory_space<vmem>>, vector<1x8x8xf32>
    %35 = vector.shape_cast %34 : vector<1x8x8xf32> to vector<8x8xf32>
    %36 = vector.extract_strided_slice %32 {offsets = [0, 0], sizes = [8, 18], strides = [1, 1]} : vector<8x20xf32> to vector<8x18xf32>
    %cst_28 = arith.constant dense<0.000000e+00> : vector<8x18xf32>
    %37 = tpu.matmul %35, %36, %cst_28 {dimension_numbers = #tpu.dot_dimension_numbers<[1], [0], [0], [1], [0, 0, 1, 1], [], []>} : vector<8x8xf32>, vector<8x18xf32>, vector<8x18xf32> -> vector<8x18xf32>
    %38 = arith.addf %33, %37 : vector<8x18xf32>
    %c1_29 = arith.constant 1 : index
    %c0_30 = arith.constant 0 : index
    %c0_31 = arith.constant 0 : index
    %39 = vector.load %arg4[%c1_29, %c0_30, %c0_31] : memref<3x8x8xf32, #tpu.memory_space<vmem>>, vector<1x8x8xf32>
    %40 = vector.shape_cast %39 : vector<1x8x8xf32> to vector<8x8xf32>
    %41 = vector.extract_strided_slice %32 {offsets = [0, 1], sizes = [8, 18], strides = [1, 1]} : vector<8x20xf32> to vector<8x18xf32>
    %cst_32 = arith.constant dense<0.000000e+00> : vector<8x18xf32>
    %42 = tpu.matmul %40, %41, %cst_32 {dimension_numbers = #tpu.dot_dimension_numbers<[1], [0], [0], [1], [0, 0, 1, 1], [], []>} : vector<8x8xf32>, vector<8x18xf32>, vector<8x18xf32> -> vector<8x18xf32>
    %43 = arith.addf %38, %42 : vector<8x18xf32>
    %c2_33 = arith.constant 2 : index
    %c0_34 = arith.constant 0 : index
    %c0_35 = arith.constant 0 : index
    %44 = vector.load %arg4[%c2_33, %c0_34, %c0_35] : memref<3x8x8xf32, #tpu.memory_space<vmem>>, vector<1x8x8xf32>
    %45 = vector.shape_cast %44 : vector<1x8x8xf32> to vector<8x8xf32>
    %46 = vector.extract_strided_slice %32 {offsets = [0, 2], sizes = [8, 18], strides = [1, 1]} : vector<8x20xf32> to vector<8x18xf32>
    %cst_36 = arith.constant dense<0.000000e+00> : vector<8x18xf32>
    %47 = tpu.matmul %45, %46, %cst_36 {dimension_numbers = #tpu.dot_dimension_numbers<[1], [0], [0], [1], [0, 0, 1, 1], [], []>} : vector<8x8xf32>, vector<8x18xf32>, vector<8x18xf32> -> vector<8x18xf32>
    %48 = arith.addf %43, %47 : vector<8x18xf32>
    %49 = vector.broadcast %3 : vector<8x1xf32> to vector<8x18xf32>
    %50 = arith.addf %48, %49 : vector<8x18xf32>
    %cst_37 = arith.constant 0.000000e+00 : f32
    %51 = vector.broadcast %cst_37 : f32 to vector<8x18xf32>
    %52 = arith.maximumf %50, %51 : vector<8x18xf32>
    %cst_38 = arith.constant 0.000000e+00 : f32
    %53 = vector.broadcast %cst_38 : f32 to vector<8x2xf32>
    %54 = tpu.concatenate %8, %53 in 1 : vector<8x16xf32>, vector<8x2xf32> -> vector<8x18xf32>
    %55 = arith.addf %52, %54 : vector<8x18xf32>
    %cst_39 = arith.constant 0.000000e+00 : f32
    %56 = vector.broadcast %cst_39 : f32 to vector<8x18xf32>
    %57 = arith.maximumf %55, %56 : vector<8x18xf32>
    %c0_40 = arith.constant 0 : index
    %c0_41 = arith.constant 0 : index
    %58 = vector.load %arg9[%c0_40, %c0_41] : memref<8x1xf32, #tpu.memory_space<vmem>>, vector<8x1xf32>
    %c0_42 = arith.constant 0 : index
    %c0_43 = arith.constant 0 : index
    %59 = vector.load %arg11[%c0_42, %c0_43] : memref<8x1xf32, #tpu.memory_space<vmem>>, vector<8x1xf32>
    %cst_44 = arith.constant 0.000000e+00 : f32
    %60 = vector.broadcast %cst_44 : f32 to vector<8x4xf32>
    %61 = tpu.concatenate %60, %57, %60 in 1 : vector<8x4xf32>, vector<8x18xf32>, vector<8x4xf32> -> vector<8x26xf32>
    %cst_45 = arith.constant 0.000000e+00 : f32
    %62 = vector.broadcast %cst_45 : f32 to vector<8x22xf32>
    %c0_46 = arith.constant 0 : index
    %c0_47 = arith.constant 0 : index
    %c0_48 = arith.constant 0 : index
    %63 = vector.load %arg8[%c0_46, %c0_47, %c0_48] : memref<3x8x8xf32, #tpu.memory_space<vmem>>, vector<1x8x8xf32>
    %64 = vector.shape_cast %63 : vector<1x8x8xf32> to vector<8x8xf32>
    %65 = vector.extract_strided_slice %61 {offsets = [0, 0], sizes = [8, 22], strides = [1, 1]} : vector<8x26xf32> to vector<8x22xf32>
    %cst_49 = arith.constant dense<0.000000e+00> : vector<8x22xf32>
    %66 = tpu.matmul %64, %65, %cst_49 {dimension_numbers = #tpu.dot_dimension_numbers<[1], [0], [0], [1], [0, 0, 1, 1], [], []>} : vector<8x8xf32>, vector<8x22xf32>, vector<8x22xf32> -> vector<8x22xf32>
    %67 = arith.addf %62, %66 : vector<8x22xf32>
    %c1_50 = arith.constant 1 : index
    %c0_51 = arith.constant 0 : index
    %c0_52 = arith.constant 0 : index
    %68 = vector.load %arg8[%c1_50, %c0_51, %c0_52] : memref<3x8x8xf32, #tpu.memory_space<vmem>>, vector<1x8x8xf32>
    %69 = vector.shape_cast %68 : vector<1x8x8xf32> to vector<8x8xf32>
    %70 = vector.extract_strided_slice %61 {offsets = [0, 2], sizes = [8, 22], strides = [1, 1]} : vector<8x26xf32> to vector<8x22xf32>
    %cst_53 = arith.constant dense<0.000000e+00> : vector<8x22xf32>
    %71 = tpu.matmul %69, %70, %cst_53 {dimension_numbers = #tpu.dot_dimension_numbers<[1], [0], [0], [1], [0, 0, 1, 1], [], []>} : vector<8x8xf32>, vector<8x22xf32>, vector<8x22xf32> -> vector<8x22xf32>
    %72 = arith.addf %67, %71 : vector<8x22xf32>
    %c2_54 = arith.constant 2 : index
    %c0_55 = arith.constant 0 : index
    %c0_56 = arith.constant 0 : index
    %73 = vector.load %arg8[%c2_54, %c0_55, %c0_56] : memref<3x8x8xf32, #tpu.memory_space<vmem>>, vector<1x8x8xf32>
    %74 = vector.shape_cast %73 : vector<1x8x8xf32> to vector<8x8xf32>
    %75 = vector.extract_strided_slice %61 {offsets = [0, 4], sizes = [8, 22], strides = [1, 1]} : vector<8x26xf32> to vector<8x22xf32>
    %cst_57 = arith.constant dense<0.000000e+00> : vector<8x22xf32>
    %76 = tpu.matmul %74, %75, %cst_57 {dimension_numbers = #tpu.dot_dimension_numbers<[1], [0], [0], [1], [0, 0, 1, 1], [], []>} : vector<8x8xf32>, vector<8x22xf32>, vector<8x22xf32> -> vector<8x22xf32>
    %77 = arith.addf %72, %76 : vector<8x22xf32>
    %78 = vector.broadcast %58 : vector<8x1xf32> to vector<8x22xf32>
    %79 = arith.addf %77, %78 : vector<8x22xf32>
    %cst_58 = arith.constant 0.000000e+00 : f32
    %80 = vector.broadcast %cst_58 : f32 to vector<8x22xf32>
    %81 = arith.maximumf %79, %80 : vector<8x22xf32>
    %cst_59 = arith.constant 0.000000e+00 : f32
    %82 = vector.broadcast %cst_59 : f32 to vector<8x4xf32>
    %83 = tpu.concatenate %82, %81 in 1 : vector<8x4xf32>, vector<8x22xf32> -> vector<8x26xf32>
    %cst_60 = arith.constant 0.000000e+00 : f32
    %84 = vector.broadcast %cst_60 : f32 to vector<8x22xf32>
    %c0_61 = arith.constant 0 : index
    %c0_62 = arith.constant 0 : index
    %c0_63 = arith.constant 0 : index
    %85 = vector.load %arg10[%c0_61, %c0_62, %c0_63] : memref<3x8x8xf32, #tpu.memory_space<vmem>>, vector<1x8x8xf32>
    %86 = vector.shape_cast %85 : vector<1x8x8xf32> to vector<8x8xf32>
    %87 = vector.extract_strided_slice %83 {offsets = [0, 0], sizes = [8, 22], strides = [1, 1]} : vector<8x26xf32> to vector<8x22xf32>
    %cst_64 = arith.constant dense<0.000000e+00> : vector<8x22xf32>
    %88 = tpu.matmul %86, %87, %cst_64 {dimension_numbers = #tpu.dot_dimension_numbers<[1], [0], [0], [1], [0, 0, 1, 1], [], []>} : vector<8x8xf32>, vector<8x22xf32>, vector<8x22xf32> -> vector<8x22xf32>
    %89 = arith.addf %84, %88 : vector<8x22xf32>
    %c1_65 = arith.constant 1 : index
    %c0_66 = arith.constant 0 : index
    %c0_67 = arith.constant 0 : index
    %90 = vector.load %arg10[%c1_65, %c0_66, %c0_67] : memref<3x8x8xf32, #tpu.memory_space<vmem>>, vector<1x8x8xf32>
    %91 = vector.shape_cast %90 : vector<1x8x8xf32> to vector<8x8xf32>
    %92 = vector.extract_strided_slice %83 {offsets = [0, 2], sizes = [8, 22], strides = [1, 1]} : vector<8x26xf32> to vector<8x22xf32>
    %cst_68 = arith.constant dense<0.000000e+00> : vector<8x22xf32>
    %93 = tpu.matmul %91, %92, %cst_68 {dimension_numbers = #tpu.dot_dimension_numbers<[1], [0], [0], [1], [0, 0, 1, 1], [], []>} : vector<8x8xf32>, vector<8x22xf32>, vector<8x22xf32> -> vector<8x22xf32>
    %94 = arith.addf %89, %93 : vector<8x22xf32>
    %c2_69 = arith.constant 2 : index
    %c0_70 = arith.constant 0 : index
    %c0_71 = arith.constant 0 : index
    %95 = vector.load %arg10[%c2_69, %c0_70, %c0_71] : memref<3x8x8xf32, #tpu.memory_space<vmem>>, vector<1x8x8xf32>
    %96 = vector.shape_cast %95 : vector<1x8x8xf32> to vector<8x8xf32>
    %97 = vector.extract_strided_slice %83 {offsets = [0, 4], sizes = [8, 22], strides = [1, 1]} : vector<8x26xf32> to vector<8x22xf32>
    %cst_72 = arith.constant dense<0.000000e+00> : vector<8x22xf32>
    %98 = tpu.matmul %96, %97, %cst_72 {dimension_numbers = #tpu.dot_dimension_numbers<[1], [0], [0], [1], [0, 0, 1, 1], [], []>} : vector<8x8xf32>, vector<8x22xf32>, vector<8x22xf32> -> vector<8x22xf32>
    %99 = arith.addf %94, %98 : vector<8x22xf32>
    %100 = vector.broadcast %59 : vector<8x1xf32> to vector<8x22xf32>
    %101 = arith.addf %99, %100 : vector<8x22xf32>
    %cst_73 = arith.constant 0.000000e+00 : f32
    %102 = vector.broadcast %cst_73 : f32 to vector<8x22xf32>
    %103 = arith.maximumf %101, %102 : vector<8x22xf32>
    %cst_74 = arith.constant 0.000000e+00 : f32
    %104 = vector.broadcast %cst_74 : f32 to vector<8x4xf32>
    %105 = tpu.concatenate %57, %104 in 1 : vector<8x18xf32>, vector<8x4xf32> -> vector<8x22xf32>
    %106 = arith.addf %103, %105 : vector<8x22xf32>
    %cst_75 = arith.constant 0.000000e+00 : f32
    %107 = vector.broadcast %cst_75 : f32 to vector<8x22xf32>
    %108 = arith.maximumf %106, %107 : vector<8x22xf32>
    %c0_76 = arith.constant 0 : index
    %c0_77 = arith.constant 0 : index
    %109 = vector.load %arg13[%c0_76, %c0_77] : memref<8x1xf32, #tpu.memory_space<vmem>>, vector<8x1xf32>
    %c0_78 = arith.constant 0 : index
    %c0_79 = arith.constant 0 : index
    %110 = vector.load %arg15[%c0_78, %c0_79] : memref<8x1xf32, #tpu.memory_space<vmem>>, vector<8x1xf32>
    %cst_80 = arith.constant 0.000000e+00 : f32
    %111 = vector.broadcast %cst_80 : f32 to vector<8x8xf32>
    %112 = tpu.concatenate %111, %108, %111 in 1 : vector<8x8xf32>, vector<8x22xf32>, vector<8x8xf32> -> vector<8x38xf32>
    %cst_81 = arith.constant 0.000000e+00 : f32
    %113 = vector.broadcast %cst_81 : f32 to vector<8x30xf32>
    %c0_82 = arith.constant 0 : index
    %c0_83 = arith.constant 0 : index
    %c0_84 = arith.constant 0 : index
    %114 = vector.load %arg12[%c0_82, %c0_83, %c0_84] : memref<3x8x8xf32, #tpu.memory_space<vmem>>, vector<1x8x8xf32>
    %115 = vector.shape_cast %114 : vector<1x8x8xf32> to vector<8x8xf32>
    %116 = vector.extract_strided_slice %112 {offsets = [0, 0], sizes = [8, 30], strides = [1, 1]} : vector<8x38xf32> to vector<8x30xf32>
    %cst_85 = arith.constant dense<0.000000e+00> : vector<8x30xf32>
    %117 = tpu.matmul %115, %116, %cst_85 {dimension_numbers = #tpu.dot_dimension_numbers<[1], [0], [0], [1], [0, 0, 1, 1], [], []>} : vector<8x8xf32>, vector<8x30xf32>, vector<8x30xf32> -> vector<8x30xf32>
    %118 = arith.addf %113, %117 : vector<8x30xf32>
    %c1_86 = arith.constant 1 : index
    %c0_87 = arith.constant 0 : index
    %c0_88 = arith.constant 0 : index
    %119 = vector.load %arg12[%c1_86, %c0_87, %c0_88] : memref<3x8x8xf32, #tpu.memory_space<vmem>>, vector<1x8x8xf32>
    %120 = vector.shape_cast %119 : vector<1x8x8xf32> to vector<8x8xf32>
    %121 = vector.extract_strided_slice %112 {offsets = [0, 4], sizes = [8, 30], strides = [1, 1]} : vector<8x38xf32> to vector<8x30xf32>
    %cst_89 = arith.constant dense<0.000000e+00> : vector<8x30xf32>
    %122 = tpu.matmul %120, %121, %cst_89 {dimension_numbers = #tpu.dot_dimension_numbers<[1], [0], [0], [1], [0, 0, 1, 1], [], []>} : vector<8x8xf32>, vector<8x30xf32>, vector<8x30xf32> -> vector<8x30xf32>
    %123 = arith.addf %118, %122 : vector<8x30xf32>
    %c2_90 = arith.constant 2 : index
    %c0_91 = arith.constant 0 : index
    %c0_92 = arith.constant 0 : index
    %124 = vector.load %arg12[%c2_90, %c0_91, %c0_92] : memref<3x8x8xf32, #tpu.memory_space<vmem>>, vector<1x8x8xf32>
    %125 = vector.shape_cast %124 : vector<1x8x8xf32> to vector<8x8xf32>
    %126 = vector.extract_strided_slice %112 {offsets = [0, 8], sizes = [8, 30], strides = [1, 1]} : vector<8x38xf32> to vector<8x30xf32>
    %cst_93 = arith.constant dense<0.000000e+00> : vector<8x30xf32>
    %127 = tpu.matmul %125, %126, %cst_93 {dimension_numbers = #tpu.dot_dimension_numbers<[1], [0], [0], [1], [0, 0, 1, 1], [], []>} : vector<8x8xf32>, vector<8x30xf32>, vector<8x30xf32> -> vector<8x30xf32>
    %128 = arith.addf %123, %127 : vector<8x30xf32>
    %129 = vector.broadcast %109 : vector<8x1xf32> to vector<8x30xf32>
    %130 = arith.addf %128, %129 : vector<8x30xf32>
    %cst_94 = arith.constant 0.000000e+00 : f32
    %131 = vector.broadcast %cst_94 : f32 to vector<8x30xf32>
    %132 = arith.maximumf %130, %131 : vector<8x30xf32>
    %cst_95 = arith.constant 0.000000e+00 : f32
    %133 = vector.broadcast %cst_95 : f32 to vector<8x8xf32>
    %134 = tpu.concatenate %133, %132 in 1 : vector<8x8xf32>, vector<8x30xf32> -> vector<8x38xf32>
    %cst_96 = arith.constant 0.000000e+00 : f32
    %135 = vector.broadcast %cst_96 : f32 to vector<8x30xf32>
    %c0_97 = arith.constant 0 : index
    %c0_98 = arith.constant 0 : index
    %c0_99 = arith.constant 0 : index
    %136 = vector.load %arg14[%c0_97, %c0_98, %c0_99] : memref<3x8x8xf32, #tpu.memory_space<vmem>>, vector<1x8x8xf32>
    %137 = vector.shape_cast %136 : vector<1x8x8xf32> to vector<8x8xf32>
    %138 = vector.extract_strided_slice %134 {offsets = [0, 0], sizes = [8, 30], strides = [1, 1]} : vector<8x38xf32> to vector<8x30xf32>
    %cst_100 = arith.constant dense<0.000000e+00> : vector<8x30xf32>
    %139 = tpu.matmul %137, %138, %cst_100 {dimension_numbers = #tpu.dot_dimension_numbers<[1], [0], [0], [1], [0, 0, 1, 1], [], []>} : vector<8x8xf32>, vector<8x30xf32>, vector<8x30xf32> -> vector<8x30xf32>
    %140 = arith.addf %135, %139 : vector<8x30xf32>
    %c1_101 = arith.constant 1 : index
    %c0_102 = arith.constant 0 : index
    %c0_103 = arith.constant 0 : index
    %141 = vector.load %arg14[%c1_101, %c0_102, %c0_103] : memref<3x8x8xf32, #tpu.memory_space<vmem>>, vector<1x8x8xf32>
    %142 = vector.shape_cast %141 : vector<1x8x8xf32> to vector<8x8xf32>
    %143 = vector.extract_strided_slice %134 {offsets = [0, 4], sizes = [8, 30], strides = [1, 1]} : vector<8x38xf32> to vector<8x30xf32>
    %cst_104 = arith.constant dense<0.000000e+00> : vector<8x30xf32>
    %144 = tpu.matmul %142, %143, %cst_104 {dimension_numbers = #tpu.dot_dimension_numbers<[1], [0], [0], [1], [0, 0, 1, 1], [], []>} : vector<8x8xf32>, vector<8x30xf32>, vector<8x30xf32> -> vector<8x30xf32>
    %145 = arith.addf %140, %144 : vector<8x30xf32>
    %c2_105 = arith.constant 2 : index
    %c0_106 = arith.constant 0 : index
    %c0_107 = arith.constant 0 : index
    %146 = vector.load %arg14[%c2_105, %c0_106, %c0_107] : memref<3x8x8xf32, #tpu.memory_space<vmem>>, vector<1x8x8xf32>
    %147 = vector.shape_cast %146 : vector<1x8x8xf32> to vector<8x8xf32>
    %148 = vector.extract_strided_slice %134 {offsets = [0, 8], sizes = [8, 30], strides = [1, 1]} : vector<8x38xf32> to vector<8x30xf32>
    %cst_108 = arith.constant dense<0.000000e+00> : vector<8x30xf32>
    %149 = tpu.matmul %147, %148, %cst_108 {dimension_numbers = #tpu.dot_dimension_numbers<[1], [0], [0], [1], [0, 0, 1, 1], [], []>} : vector<8x8xf32>, vector<8x30xf32>, vector<8x30xf32> -> vector<8x30xf32>
    %150 = arith.addf %145, %149 : vector<8x30xf32>
    %151 = vector.broadcast %110 : vector<8x1xf32> to vector<8x30xf32>
    %152 = arith.addf %150, %151 : vector<8x30xf32>
    %cst_109 = arith.constant 0.000000e+00 : f32
    %153 = vector.broadcast %cst_109 : f32 to vector<8x30xf32>
    %154 = arith.maximumf %152, %153 : vector<8x30xf32>
    %cst_110 = arith.constant 0.000000e+00 : f32
    %155 = vector.broadcast %cst_110 : f32 to vector<8x8xf32>
    %156 = tpu.concatenate %108, %155 in 1 : vector<8x22xf32>, vector<8x8xf32> -> vector<8x30xf32>
    %157 = arith.addf %154, %156 : vector<8x30xf32>
    %cst_111 = arith.constant 0.000000e+00 : f32
    %158 = vector.broadcast %cst_111 : f32 to vector<8x30xf32>
    %159 = arith.maximumf %157, %158 : vector<8x30xf32>
    %c0_112 = arith.constant 0 : index
    %c0_113 = arith.constant 0 : index
    %160 = vector.load %arg17[%c0_112, %c0_113] : memref<8x1xf32, #tpu.memory_space<vmem>>, vector<8x1xf32>
    %c0_114 = arith.constant 0 : index
    %c0_115 = arith.constant 0 : index
    %161 = vector.load %arg19[%c0_114, %c0_115] : memref<8x1xf32, #tpu.memory_space<vmem>>, vector<8x1xf32>
    %cst_116 = arith.constant 0.000000e+00 : f32
    %162 = vector.broadcast %cst_116 : f32 to vector<8x16xf32>
    %163 = tpu.concatenate %162, %159, %162 in 1 : vector<8x16xf32>, vector<8x30xf32>, vector<8x16xf32> -> vector<8x62xf32>
    %cst_117 = arith.constant 0.000000e+00 : f32
    %164 = vector.broadcast %cst_117 : f32 to vector<8x46xf32>
    %c0_118 = arith.constant 0 : index
    %c0_119 = arith.constant 0 : index
    %c0_120 = arith.constant 0 : index
    %165 = vector.load %arg16[%c0_118, %c0_119, %c0_120] : memref<3x8x8xf32, #tpu.memory_space<vmem>>, vector<1x8x8xf32>
    %166 = vector.shape_cast %165 : vector<1x8x8xf32> to vector<8x8xf32>
    %167 = vector.extract_strided_slice %163 {offsets = [0, 0], sizes = [8, 46], strides = [1, 1]} : vector<8x62xf32> to vector<8x46xf32>
    %cst_121 = arith.constant dense<0.000000e+00> : vector<8x46xf32>
    %168 = tpu.matmul %166, %167, %cst_121 {dimension_numbers = #tpu.dot_dimension_numbers<[1], [0], [0], [1], [0, 0, 1, 1], [], []>} : vector<8x8xf32>, vector<8x46xf32>, vector<8x46xf32> -> vector<8x46xf32>
    %169 = arith.addf %164, %168 : vector<8x46xf32>
    %c1_122 = arith.constant 1 : index
    %c0_123 = arith.constant 0 : index
    %c0_124 = arith.constant 0 : index
    %170 = vector.load %arg16[%c1_122, %c0_123, %c0_124] : memref<3x8x8xf32, #tpu.memory_space<vmem>>, vector<1x8x8xf32>
    %171 = vector.shape_cast %170 : vector<1x8x8xf32> to vector<8x8xf32>
    %172 = vector.extract_strided_slice %163 {offsets = [0, 8], sizes = [8, 46], strides = [1, 1]} : vector<8x62xf32> to vector<8x46xf32>
    %cst_125 = arith.constant dense<0.000000e+00> : vector<8x46xf32>
    %173 = tpu.matmul %171, %172, %cst_125 {dimension_numbers = #tpu.dot_dimension_numbers<[1], [0], [0], [1], [0, 0, 1, 1], [], []>} : vector<8x8xf32>, vector<8x46xf32>, vector<8x46xf32> -> vector<8x46xf32>
    %174 = arith.addf %169, %173 : vector<8x46xf32>
    %c2_126 = arith.constant 2 : index
    %c0_127 = arith.constant 0 : index
    %c0_128 = arith.constant 0 : index
    %175 = vector.load %arg16[%c2_126, %c0_127, %c0_128] : memref<3x8x8xf32, #tpu.memory_space<vmem>>, vector<1x8x8xf32>
    %176 = vector.shape_cast %175 : vector<1x8x8xf32> to vector<8x8xf32>
    %177 = vector.extract_strided_slice %163 {offsets = [0, 16], sizes = [8, 46], strides = [1, 1]} : vector<8x62xf32> to vector<8x46xf32>
    %cst_129 = arith.constant dense<0.000000e+00> : vector<8x46xf32>
    %178 = tpu.matmul %176, %177, %cst_129 {dimension_numbers = #tpu.dot_dimension_numbers<[1], [0], [0], [1], [0, 0, 1, 1], [], []>} : vector<8x8xf32>, vector<8x46xf32>, vector<8x46xf32> -> vector<8x46xf32>
    %179 = arith.addf %174, %178 : vector<8x46xf32>
    %180 = vector.broadcast %160 : vector<8x1xf32> to vector<8x46xf32>
    %181 = arith.addf %179, %180 : vector<8x46xf32>
    %cst_130 = arith.constant 0.000000e+00 : f32
    %182 = vector.broadcast %cst_130 : f32 to vector<8x46xf32>
    %183 = arith.maximumf %181, %182 : vector<8x46xf32>
    %cst_131 = arith.constant 0.000000e+00 : f32
    %184 = vector.broadcast %cst_131 : f32 to vector<8x16xf32>
    %185 = tpu.concatenate %184, %183 in 1 : vector<8x16xf32>, vector<8x46xf32> -> vector<8x62xf32>
    %cst_132 = arith.constant 0.000000e+00 : f32
    %186 = vector.broadcast %cst_132 : f32 to vector<8x46xf32>
    %c0_133 = arith.constant 0 : index
    %c0_134 = arith.constant 0 : index
    %c0_135 = arith.constant 0 : index
    %187 = vector.load %arg18[%c0_133, %c0_134, %c0_135] : memref<3x8x8xf32, #tpu.memory_space<vmem>>, vector<1x8x8xf32>
    %188 = vector.shape_cast %187 : vector<1x8x8xf32> to vector<8x8xf32>
    %189 = vector.extract_strided_slice %185 {offsets = [0, 0], sizes = [8, 46], strides = [1, 1]} : vector<8x62xf32> to vector<8x46xf32>
    %cst_136 = arith.constant dense<0.000000e+00> : vector<8x46xf32>
    %190 = tpu.matmul %188, %189, %cst_136 {dimension_numbers = #tpu.dot_dimension_numbers<[1], [0], [0], [1], [0, 0, 1, 1], [], []>} : vector<8x8xf32>, vector<8x46xf32>, vector<8x46xf32> -> vector<8x46xf32>
    %191 = arith.addf %186, %190 : vector<8x46xf32>
    %c1_137 = arith.constant 1 : index
    %c0_138 = arith.constant 0 : index
    %c0_139 = arith.constant 0 : index
    %192 = vector.load %arg18[%c1_137, %c0_138, %c0_139] : memref<3x8x8xf32, #tpu.memory_space<vmem>>, vector<1x8x8xf32>
    %193 = vector.shape_cast %192 : vector<1x8x8xf32> to vector<8x8xf32>
    %194 = vector.extract_strided_slice %185 {offsets = [0, 8], sizes = [8, 46], strides = [1, 1]} : vector<8x62xf32> to vector<8x46xf32>
    %cst_140 = arith.constant dense<0.000000e+00> : vector<8x46xf32>
    %195 = tpu.matmul %193, %194, %cst_140 {dimension_numbers = #tpu.dot_dimension_numbers<[1], [0], [0], [1], [0, 0, 1, 1], [], []>} : vector<8x8xf32>, vector<8x46xf32>, vector<8x46xf32> -> vector<8x46xf32>
    %196 = arith.addf %191, %195 : vector<8x46xf32>
    %c2_141 = arith.constant 2 : index
    %c0_142 = arith.constant 0 : index
    %c0_143 = arith.constant 0 : index
    %197 = vector.load %arg18[%c2_141, %c0_142, %c0_143] : memref<3x8x8xf32, #tpu.memory_space<vmem>>, vector<1x8x8xf32>
    %198 = vector.shape_cast %197 : vector<1x8x8xf32> to vector<8x8xf32>
    %199 = vector.extract_strided_slice %185 {offsets = [0, 16], sizes = [8, 46], strides = [1, 1]} : vector<8x62xf32> to vector<8x46xf32>
    %cst_144 = arith.constant dense<0.000000e+00> : vector<8x46xf32>
    %200 = tpu.matmul %198, %199, %cst_144 {dimension_numbers = #tpu.dot_dimension_numbers<[1], [0], [0], [1], [0, 0, 1, 1], [], []>} : vector<8x8xf32>, vector<8x46xf32>, vector<8x46xf32> -> vector<8x46xf32>
    %201 = arith.addf %196, %200 : vector<8x46xf32>
    %202 = vector.broadcast %161 : vector<8x1xf32> to vector<8x46xf32>
    %203 = arith.addf %201, %202 : vector<8x46xf32>
    %cst_145 = arith.constant 0.000000e+00 : f32
    %204 = vector.broadcast %cst_145 : f32 to vector<8x46xf32>
    %205 = arith.maximumf %203, %204 : vector<8x46xf32>
    %cst_146 = arith.constant 0.000000e+00 : f32
    %206 = vector.broadcast %cst_146 : f32 to vector<8x16xf32>
    %207 = tpu.concatenate %159, %206 in 1 : vector<8x30xf32>, vector<8x16xf32> -> vector<8x46xf32>
    %208 = arith.addf %205, %207 : vector<8x46xf32>
    %cst_147 = arith.constant 0.000000e+00 : f32
    %209 = vector.broadcast %cst_147 : f32 to vector<8x46xf32>
    %210 = arith.maximumf %208, %209 : vector<8x46xf32>
    %c0_148 = arith.constant 0 : index
    %c0_149 = arith.constant 0 : index
    %211 = vector.load %arg20[%c0_148, %c0_149] : memref<1x8xf32, #tpu.memory_space<vmem>>, vector<1x8xf32>
    %c0_150 = arith.constant 0 : index
    %c0_151 = arith.constant 0 : index
    %212 = vector.load %arg21[%c0_150, %c0_151] : memref<1x1xf32, #tpu.memory_space<vmem>>, vector<1x1xf32>
    %213 = vector.extract_strided_slice %210 {offsets = [0, 45], sizes = [8, 1], strides = [1, 1]} : vector<8x46xf32> to vector<8x1xf32>
    %cst_152 = arith.constant dense<0.000000e+00> : vector<1x1xf32>
    %214 = tpu.matmul %211, %213, %cst_152 {dimension_numbers = #tpu.dot_dimension_numbers<[1], [0], [0], [1], [0, 0, 1, 1], [], []>} : vector<1x8xf32>, vector<8x1xf32>, vector<1x1xf32> -> vector<1x1xf32>
    %215 = arith.addf %214, %212 : vector<1x1xf32>
    %216 = vector.shape_cast %215 : vector<1x1xf32> to vector<1x1x1xf32>
    %217 = vector.shape_cast %216 : vector<1x1x1xf32> to vector<1x1x1xf32>
    %218 = vector.broadcast %217 : vector<1x1x1xf32> to vector<1x1x128xf32>
    %c0_153 = arith.constant 0 : index
    %c0_154 = arith.constant 0 : index
    %c0_155 = arith.constant 0 : index
    %219 = vector.load %arg22[%c0_153, %c0_154, %c0_155] : memref<1x1x128xf32, #tpu.memory_space<vmem>>, vector<1x1x128xf32>
    tpu.vector_store %arg22[%c0_153, %c0_154, %c0_155], %218 {strides = array<i32>} : memref<1x1x128xf32, #tpu.memory_space<vmem>>, vector<1x1x128xf32>,
    return
  }
  func.func @transform_0(%arg0: i32) -> (i32, i32, i32) {
    %c0_i32 = arith.constant 0 : i32
    %c0_i32_0 = arith.constant 0 : i32
    %c0_i32_1 = arith.constant 0 : i32
    return %arg0, %c0_i32, %c0_i32_0 : i32, i32, i32
  }
  func.func @transform_1(%arg0: i32) -> (i32, i32, i32) {
    %c0_i32 = arith.constant 0 : i32
    %c0_i32_0 = arith.constant 0 : i32
    %c0_i32_1 = arith.constant 0 : i32
    %c0_i32_2 = arith.constant 0 : i32
    return %c0_i32, %c0_i32_0, %c0_i32_1 : i32, i32, i32
  }
  func.func @transform_2(%arg0: i32) -> (i32, i32) {
    %c0_i32 = arith.constant 0 : i32
    %c0_i32_0 = arith.constant 0 : i32
    %c0_i32_1 = arith.constant 0 : i32
    return %c0_i32, %c0_i32_0 : i32, i32
  }
  func.func @transform_3(%arg0: i32) -> (i32, i32, i32) {
    %c0_i32 = arith.constant 0 : i32
    %c0_i32_0 = arith.constant 0 : i32
    %c0_i32_1 = arith.constant 0 : i32
    %c0_i32_2 = arith.constant 0 : i32
    return %c0_i32, %c0_i32_0, %c0_i32_1 : i32, i32, i32
  }
  func.func @transform_4(%arg0: i32) -> (i32, i32) {
    %c0_i32 = arith.constant 0 : i32
    %c0_i32_0 = arith.constant 0 : i32
    %c0_i32_1 = arith.constant 0 : i32
    return %c0_i32, %c0_i32_0 : i32, i32
  }
  func.func @transform_5(%arg0: i32) -> (i32, i32) {
    %c0_i32 = arith.constant 0 : i32
    %c0_i32_0 = arith.constant 0 : i32
    %c0_i32_1 = arith.constant 0 : i32
    return %c0_i32, %c0_i32_0 : i32, i32
  }
  func.func @transform_6(%arg0: i32) -> (i32, i32) {
    %c0_i32 = arith.constant 0 : i32
    %c0_i32_0 = arith.constant 0 : i32
    %c0_i32_1 = arith.constant 0 : i32
    return %c0_i32, %c0_i32_0 : i32, i32
  }
  func.func @transform_7(%arg0: i32) -> (i32, i32, i32) {
    %c0_i32 = arith.constant 0 : i32
    %c0_i32_0 = arith.constant 0 : i32
    %c0_i32_1 = arith.constant 0 : i32
    %c0_i32_2 = arith.constant 0 : i32
    return %c0_i32, %c0_i32_0, %c0_i32_1 : i32, i32, i32
  }
  func.func @transform_8(%arg0: i32) -> (i32, i32) {
    %c0_i32 = arith.constant 0 : i32
    %c0_i32_0 = arith.constant 0 : i32
    %c0_i32_1 = arith.constant 0 : i32
    return %c0_i32, %c0_i32_0 : i32, i32
  }
  func.func @transform_9(%arg0: i32) -> (i32, i32, i32) {
    %c0_i32 = arith.constant 0 : i32
    %c0_i32_0 = arith.constant 0 : i32
    %c0_i32_1 = arith.constant 0 : i32
    %c0_i32_2 = arith.constant 0 : i32
    return %c0_i32, %c0_i32_0, %c0_i32_1 : i32, i32, i32
  }
  func.func @transform_10(%arg0: i32) -> (i32, i32) {
    %c0_i32 = arith.constant 0 : i32
    %c0_i32_0 = arith.constant 0 : i32
    %c0_i32_1 = arith.constant 0 : i32
    return %c0_i32, %c0_i32_0 : i32, i32
  }
  func.func @transform_11(%arg0: i32) -> (i32, i32, i32) {
    %c0_i32 = arith.constant 0 : i32
    %c0_i32_0 = arith.constant 0 : i32
    %c0_i32_1 = arith.constant 0 : i32
    %c0_i32_2 = arith.constant 0 : i32
    return %c0_i32, %c0_i32_0, %c0_i32_1 : i32, i32, i32
  }
  func.func @transform_12(%arg0: i32) -> (i32, i32) {
    %c0_i32 = arith.constant 0 : i32
    %c0_i32_0 = arith.constant 0 : i32
    %c0_i32_1 = arith.constant 0 : i32
    return %c0_i32, %c0_i32_0 : i32, i32
  }
  func.func @transform_13(%arg0: i32) -> (i32, i32, i32) {
    %c0_i32 = arith.constant 0 : i32
    %c0_i32_0 = arith.constant 0 : i32
    %c0_i32_1 = arith.constant 0 : i32
    %c0_i32_2 = arith.constant 0 : i32
    return %c0_i32, %c0_i32_0, %c0_i32_1 : i32, i32, i32
  }
  func.func @transform_14(%arg0: i32) -> (i32, i32) {
    %c0_i32 = arith.constant 0 : i32
    %c0_i32_0 = arith.constant 0 : i32
    %c0_i32_1 = arith.constant 0 : i32
    return %c0_i32, %c0_i32_0 : i32, i32
  }
  func.func @transform_15(%arg0: i32) -> (i32, i32, i32) {
    %c0_i32 = arith.constant 0 : i32
    %c0_i32_0 = arith.constant 0 : i32
    %c0_i32_1 = arith.constant 0 : i32
    %c0_i32_2 = arith.constant 0 : i32
    return %c0_i32, %c0_i32_0, %c0_i32_1 : i32, i32, i32
  }
  func.func @transform_16(%arg0: i32) -> (i32, i32) {
    %c0_i32 = arith.constant 0 : i32
    %c0_i32_0 = arith.constant 0 : i32
    %c0_i32_1 = arith.constant 0 : i32
    return %c0_i32, %c0_i32_0 : i32, i32
  }
  func.func @transform_17(%arg0: i32) -> (i32, i32, i32) {
    %c0_i32 = arith.constant 0 : i32
    %c0_i32_0 = arith.constant 0 : i32
    %c0_i32_1 = arith.constant 0 : i32
    %c0_i32_2 = arith.constant 0 : i32
    return %c0_i32, %c0_i32_0, %c0_i32_1 : i32, i32, i32
  }
  func.func @transform_18(%arg0: i32) -> (i32, i32) {
    %c0_i32 = arith.constant 0 : i32
    %c0_i32_0 = arith.constant 0 : i32
    %c0_i32_1 = arith.constant 0 : i32
    return %c0_i32, %c0_i32_0 : i32, i32
  }
  func.func @transform_19(%arg0: i32) -> (i32, i32) {
    %c0_i32 = arith.constant 0 : i32
    %c0_i32_0 = arith.constant 0 : i32
    %c0_i32_1 = arith.constant 0 : i32
    return %c0_i32, %c0_i32_0 : i32, i32
  }
  func.func @transform_20(%arg0: i32) -> (i32, i32) {
    %c0_i32 = arith.constant 0 : i32
    %c0_i32_0 = arith.constant 0 : i32
    %c0_i32_1 = arith.constant 0 : i32
    return %c0_i32, %c0_i32_0 : i32, i32
  }
  func.func @transform_21(%arg0: i32) -> (i32, i32, i32) {
    %c0_i32 = arith.constant 0 : i32
    %c0_i32_0 = arith.constant 0 : i32
    %c0_i32_1 = arith.constant 0 : i32
    return %arg0, %c0_i32, %c0_i32_0 : i32, i32, i32
  }
}

</mosaic_0001>

<llo_original>
// kernel: temporal_conv_net_forward.1
$region0: #{temporal_conv_net_forward.1}
  #allocation0 [shape = 'u32[]', space=smem, size = 0x4, offset = 0x4, fixed_abs, tag = 'smem constant byte address 0x4 - core index']
  #allocation1 [shape = 'u32[144,128]{1,0:T(1,128)}', space=vmem, size = 0x12000, scoped, tag = 'internal scratch']
  #allocation2 [shape = 'f32[1,1]{1,0:T(1,128)S(1)}', space=vmem, size = 0x200, scoped, tag = 'scoped memory for temporal_conv_net_forward.1']
  %s0 = inlined_call_operand.vmem [shape: f32[2,4,16], index: 0, kind: input, shape index: {}]
  %s1 = inlined_call_operand.vmem [shape: f32[3,8,4], index: 1, kind: input, shape index: {}]
  %s2 = inlined_call_operand.vmem [shape: f32[8,1], index: 2, kind: input, shape index: {}]
  %s3 = inlined_call_operand.vmem [shape: f32[3,8,8], index: 3, kind: input, shape index: {}]
  %s4 = inlined_call_operand.vmem [shape: f32[8,1], index: 4, kind: input, shape index: {}]
  %s5 = inlined_call_operand.vmem [shape: f32[8,4], index: 5, kind: input, shape index: {}]
  %s6 = inlined_call_operand.vmem [shape: f32[8,1], index: 6, kind: input, shape index: {}]
  %s7 = inlined_call_operand.vmem [shape: f32[3,8,8], index: 7, kind: input, shape index: {}]
  %s8 = inlined_call_operand.vmem [shape: f32[8,1], index: 8, kind: input, shape index: {}]
  %s9 = inlined_call_operand.vmem [shape: f32[3,8,8], index: 9, kind: input, shape index: {}]
  %s10 = inlined_call_operand.vmem [shape: f32[8,1], index: 10, kind: input, shape index: {}]
  %s11 = inlined_call_operand.vmem [shape: f32[3,8,8], index: 11, kind: input, shape index: {}]
  %s12 = inlined_call_operand.vmem [shape: f32[8,1], index: 12, kind: input, shape index: {}]
  %s13 = inlined_call_operand.vmem [shape: f32[3,8,8], index: 13, kind: input, shape index: {}]
  %s14 = inlined_call_operand.vmem [shape: f32[8,1], index: 14, kind: input, shape index: {}]
  %s15 = inlined_call_operand.vmem [shape: f32[3,8,8], index: 15, kind: input, shape index: {}]
  %s16 = inlined_call_operand.vmem [shape: f32[8,1], index: 16, kind: input, shape index: {}]
  %s17 = inlined_call_operand.vmem [shape: f32[3,8,8], index: 17, kind: input, shape index: {}]
  %s18 = inlined_call_operand.vmem [shape: f32[8,1], index: 18, kind: input, shape index: {}]
  %s19 = inlined_call_operand.vmem [shape: f32[1,8], index: 19, kind: input, shape index: {}]
  %s20 = inlined_call_operand.<no memory space> [shape: f32[1,1], index: 20, kind: input, shape index: {}]
  %s21 = inlined_call_operand.vmem [shape: f32[2,1,128], index: 21, kind: output, shape index: {}]
  %s22 = sld [smem:[#allocation0]]
  $region117: #{temporal_conv_net_forward.1} parent=0
    _
  %s24 = ssub.s32 1, %s22
  %s25 = scalar_select 0, %s24, %s22
  %v26 = vstv %s20
  %27 = vst [vmem:[#allocation2] sm:$0x1] %v26
  loop: start=0, step=1, limit=4
  $region2: #{temporal_conv_net_forward.1} parent=0 // loop_pre_header
    _
  $region3: #{temporal_conv_net_forward.1} parent=0 // loop_header
    %s29 = sphi 0, %s33
    %p30 = scmp.ge.s32.totalorder %s29, 4
    %s39 = sphi 0, %s41
    %s42 = sphi 0, %s39
    %s43 = sphi 0, %s42
    %s59 = sphi 0, %s43
    %s63 = sphi 0, %s63
    %s65 = sphi 0, %s63
    %s66 = sphi 0, %s65
    %s80 = sphi 0, %s66
    %s84 = sphi 0, %s84
    %s86 = sphi 0, %s84
    %s87 = sphi 0, %s86
    %s101 = sphi 0, %s87
    %s105 = sphi 0, %s105
    %s107 = sphi 0, %s105
    %s108 = sphi 0, %s107
    %s122 = sphi 0, %s108
    %s126 = sphi 0, %s126
    %s128 = sphi 0, %s126
    %s129 = sphi 0, %s128
    %s143 = sphi 0, %s129
    %s147 = sphi 0, %s147
    %s149 = sphi 0, %s147
    %s150 = sphi 0, %s149
    %s164 = sphi 0, %s150
    %s168 = sphi 0, %s168
    %s170 = sphi 0, %s168
    %s171 = sphi 0, %s170
    %s185 = sphi 0, %s171
    %s189 = sphi 0, %s189
    %s191 = sphi 0, %s189
    %s192 = sphi 0, %s191
    %s206 = sphi 0, %s192
    %s210 = sphi 0, %s210
    %s212 = sphi 0, %s210
    %s213 = sphi 0, %s212
    %s227 = sphi 0, %s213
    %s231 = sphi 0, %s231
    %s233 = sphi 0, %s231
    %s234 = sphi 0, %s233
    %s248 = sphi 0, %s234
    %s252 = sphi 0, %s252
    %s254 = sphi 0, %s252
    %s255 = sphi 0, %s254
    %s269 = sphi 0, %s255
    %s273 = sphi 0, %s273
    %s275 = sphi 0, %s273
    %s276 = sphi 0, %s275
    %s290 = sphi 0, %s276
    %s294 = sphi 0, %s294
    %s296 = sphi 0, %s294
    %s297 = sphi 0, %s296
    %s311 = sphi 0, %s297
    %s315 = sphi 0, %s315
    %s317 = sphi 0, %s315
    %s318 = sphi 0, %s317
    %s332 = sphi 0, %s318
    %s336 = sphi 0, %s336
    %s338 = sphi 0, %s336
    %s339 = sphi 0, %s338
    %s353 = sphi 0, %s339
    %s357 = sphi 0, %s357
    %s359 = sphi 0, %s357
    %s360 = sphi 0, %s359
    %s374 = sphi 0, %s360
    %s378 = sphi 0, %s378
    %s380 = sphi 0, %s378
    %s381 = sphi 0, %s380
    %s395 = sphi 0, %s381
    %s399 = sphi 0, %s399
    %s401 = sphi 0, %s399
    %s402 = sphi 0, %s401
    %s416 = sphi 0, %s402
    %s420 = sphi 0, %s420
    %s422 = sphi 0, %s420
    %s423 = sphi 0, %s422
    %s437 = sphi 0, %s423
    %s441 = sphi 0, %s441
    %s443 = sphi 0, %s441
    %s444 = sphi 0, %s443
    %s458 = sphi 0, %s444
    %s462 = sphi 0, %s462
    %s464 = sphi 0, %s462
    %s465 = sphi 0, %s464
    %s479 = sphi 0, %s465
    %s485 = sphi 0, %s487
    %s488 = sphi 0, %s485
    %s489 = sphi 0, %s488
    %s505 = sphi 0, %s489
  $region4: #{temporal_conv_net_forward.1} parent=0 // loop_header_branch
    %32 = sbr.rel (%p30) target = $region8
  $region5: #{temporal_conv_net_forward.1} parent=0 // loop_body
    %s34 = ssub.s32 %s29, 1
    %s35 = ssub.s32 %s29, 2
    %s36 = sadd.s32 %s29, 1
    %s37 = ssub.s32 %s29, %s36
    %p38 = scmp.eq.s32.totalorder %s37, 0
    %s40 = sadd.s32 %s39, 1
    %s41 = scalar_select %p38, %s39, %s40
    %p44 = pneg %p38
    %p45 = scmp.eq.s32.totalorder %s29, 1
    %p46 = por %p44, %p45
    %p47 = scmp.ne.s32.totalorder %s39, %s42
    %p48 = scmp.eq.s32.totalorder %s29, 0
    %p49 = por %p47, %p48
    %p50 = scmp.ne.s32.totalorder %s39, %s42
    %p51 = scmp.eq.s32.totalorder %s34, 1
    %p52 = por %p50, %p51
    %p53 = scmp.ne.s32.totalorder %s42, %s43
    %p54 = scmp.eq.s32.totalorder %s34, 0
    %p55 = por %p53, %p54
    %p56 = scmp.ne.s32.totalorder %s42, %s43
    %p57 = scmp.eq.s32.totalorder %s35, 1
    %p58 = por %p56, %p57
    %p60 = scmp.ne.s32.totalorder %s43, %s59
    %p61 = scmp.eq.s32.totalorder %s35, 0
    %p62 = por %p60, %p61
    %s64 = sadd.s32 %s63, 1
    %p67 = scmp.eq.s32.totalorder %s29, 1
    %p68 = scmp.ne.s32.totalorder %s63, %s65
    %p69 = scmp.eq.s32.totalorder %s29, 0
    %p70 = por %p68, %p69
    %p71 = scmp.ne.s32.totalorder %s63, %s65
    %p72 = scmp.eq.s32.totalorder %s34, 1
    %p73 = por %p71, %p72
    %p74 = scmp.ne.s32.totalorder %s65, %s66
    %p75 = scmp.eq.s32.totalorder %s34, 0
    %p76 = por %p74, %p75
    %p77 = scmp.ne.s32.totalorder %s65, %s66
    %p78 = scmp.eq.s32.totalorder %s35, 1
    %p79 = por %p77, %p78
    %p81 = scmp.ne.s32.totalorder %s66, %s80
    %p82 = scmp.eq.s32.totalorder %s35, 0
    %p83 = por %p81, %p82
    %s85 = sadd.s32 %s84, 1
    %p88 = scmp.eq.s32.totalorder %s29, 1
    %p89 = scmp.ne.s32.totalorder %s84, %s86
    %p90 = scmp.eq.s32.totalorder %s29, 0
    %p91 = por %p89, %p90
    %p92 = scmp.ne.s32.totalorder %s84, %s86
    %p93 = scmp.eq.s32.totalorder %s34, 1
    %p94 = por %p92, %p93
    %p95 = scmp.ne.s32.totalorder %s86, %s87
    %p96 = scmp.eq.s32.totalorder %s34, 0
    %p97 = por %p95, %p96
    %p98 = scmp.ne.s32.totalorder %s86, %s87
    %p99 = scmp.eq.s32.totalorder %s35, 1
    %p100 = por %p98, %p99
    %p102 = scmp.ne.s32.totalorder %s87, %s101
    %p103 = scmp.eq.s32.totalorder %s35, 0
    %p104 = por %p102, %p103
    %s106 = sadd.s32 %s105, 1
    %p109 = scmp.eq.s32.totalorder %s29, 1
    %p110 = scmp.ne.s32.totalorder %s105, %s107
    %p111 = scmp.eq.s32.totalorder %s29, 0
    %p112 = por %p110, %p111
    %p113 = scmp.ne.s32.totalorder %s105, %s107
    %p114 = scmp.eq.s32.totalorder %s34, 1
    %p115 = por %p113, %p114
    %p116 = scmp.ne.s32.totalorder %s107, %s108
    %p117 = scmp.eq.s32.totalorder %s34, 0
    %p118 = por %p116, %p117
    %p119 = scmp.ne.s32.totalorder %s107, %s108
    %p120 = scmp.eq.s32.totalorder %s35, 1
    %p121 = por %p119, %p120
    %p123 = scmp.ne.s32.totalorder %s108, %s122
    %p124 = scmp.eq.s32.totalorder %s35, 0
    %p125 = por %p123, %p124
    %s127 = sadd.s32 %s126, 1
    %p130 = scmp.eq.s32.totalorder %s29, 1
    %p131 = scmp.ne.s32.totalorder %s126, %s128
    %p132 = scmp.eq.s32.totalorder %s29, 0
    %p133 = por %p131, %p132
    %p134 = scmp.ne.s32.totalorder %s126, %s128
    %p135 = scmp.eq.s32.totalorder %s34, 1
    %p136 = por %p134, %p135
    %p137 = scmp.ne.s32.totalorder %s128, %s129
    %p138 = scmp.eq.s32.totalorder %s34, 0
    %p139 = por %p137, %p138
    %p140 = scmp.ne.s32.totalorder %s128, %s129
    %p141 = scmp.eq.s32.totalorder %s35, 1
    %p142 = por %p140, %p141
    %p144 = scmp.ne.s32.totalorder %s129, %s143
    %p145 = scmp.eq.s32.totalorder %s35, 0
    %p146 = por %p144, %p145
    %s148 = sadd.s32 %s147, 1
    %p151 = scmp.eq.s32.totalorder %s29, 1
    %p152 = scmp.ne.s32.totalorder %s147, %s149
    %p153 = scmp.eq.s32.totalorder %s29, 0
    %p154 = por %p152, %p153
    %p155 = scmp.ne.s32.totalorder %s147, %s149
    %p156 = scmp.eq.s32.totalorder %s34, 1
    %p157 = por %p155, %p156
    %p158 = scmp.ne.s32.totalorder %s149, %s150
    %p159 = scmp.eq.s32.totalorder %s34, 0
    %p160 = por %p158, %p159
    %p161 = scmp.ne.s32.totalorder %s149, %s150
    %p162 = scmp.eq.s32.totalorder %s35, 1
    %p163 = por %p161, %p162
    %p165 = scmp.ne.s32.totalorder %s150, %s164
    %p166 = scmp.eq.s32.totalorder %s35, 0
    %p167 = por %p165, %p166
    %s169 = sadd.s32 %s168, 1
    %p172 = scmp.eq.s32.totalorder %s29, 1
    %p173 = scmp.ne.s32.totalorder %s168, %s170
    %p174 = scmp.eq.s32.totalorder %s29, 0
    %p175 = por %p173, %p174
    %p176 = scmp.ne.s32.totalorder %s168, %s170
    %p177 = scmp.eq.s32.totalorder %s34, 1
    %p178 = por %p176, %p177
    %p179 = scmp.ne.s32.totalorder %s170, %s171
    %p180 = scmp.eq.s32.totalorder %s34, 0
    %p181 = por %p179, %p180
    %p182 = scmp.ne.s32.totalorder %s170, %s171
    %p183 = scmp.eq.s32.totalorder %s35, 1
    %p184 = por %p182, %p183
    %p186 = scmp.ne.s32.totalorder %s171, %s185
    %p187 = scmp.eq.s32.totalorder %s35, 0
    %p188 = por %p186, %p187
    %s190 = sadd.s32 %s189, 1
    %p193 = scmp.eq.s32.totalorder %s29, 1
    %p194 = scmp.ne.s32.totalorder %s189, %s191
    %p195 = scmp.eq.s32.totalorder %s29, 0
    %p196 = por %p194, %p195
    %p197 = scmp.ne.s32.totalorder %s189, %s191
    %p198 = scmp.eq.s32.totalorder %s34, 1
    %p199 = por %p197, %p198
    %p200 = scmp.ne.s32.totalorder %s191, %s192
    %p201 = scmp.eq.s32.totalorder %s34, 0
    %p202 = por %p200, %p201
    %p203 = scmp.ne.s32.totalorder %s191, %s192
    %p204 = scmp.eq.s32.totalorder %s35, 1
    %p205 = por %p203, %p204
    %p207 = scmp.ne.s32.totalorder %s192, %s206
    %p208 = scmp.eq.s32.totalorder %s35, 0
    %p209 = por %p207, %p208
    %s211 = sadd.s32 %s210, 1
    %p214 = scmp.eq.s32.totalorder %s29, 1
    %p215 = scmp.ne.s32.totalorder %s210, %s212
    %p216 = scmp.eq.s32.totalorder %s29, 0
    %p217 = por %p215, %p216
    %p218 = scmp.ne.s32.totalorder %s210, %s212
    %p219 = scmp.eq.s32.totalorder %s34, 1
    %p220 = por %p218, %p219
    %p221 = scmp.ne.s32.totalorder %s212, %s213
    %p222 = scmp.eq.s32.totalorder %s34, 0
    %p223 = por %p221, %p222
    %p224 = scmp.ne.s32.totalorder %s212, %s213
    %p225 = scmp.eq.s32.totalorder %s35, 1
    %p226 = por %p224, %p225
    %p228 = scmp.ne.s32.totalorder %s213, %s227
    %p229 = scmp.eq.s32.totalorder %s35, 0
    %p230 = por %p228, %p229
    %s232 = sadd.s32 %s231, 1
    %p235 = scmp.eq.s32.totalorder %s29, 1
    %p236 = scmp.ne.s32.totalorder %s231, %s233
    %p237 = scmp.eq.s32.totalorder %s29, 0
    %p238 = por %p236, %p237
    %p239 = scmp.ne.s32.totalorder %s231, %s233
    %p240 = scmp.eq.s32.totalorder %s34, 1
    %p241 = por %p239, %p240
    %p242 = scmp.ne.s32.totalorder %s233, %s234
    %p243 = scmp.eq.s32.totalorder %s34, 0
    %p244 = por %p242, %p243
    %p245 = scmp.ne.s32.totalorder %s233, %s234
    %p246 = scmp.eq.s32.totalorder %s35, 1
    %p247 = por %p245, %p246
    %p249 = scmp.ne.s32.totalorder %s234, %s248
    %p250 = scmp.eq.s32.totalorder %s35, 0
    %p251 = por %p249, %p250
    %s253 = sadd.s32 %s252, 1
    %p256 = scmp.eq.s32.totalorder %s29, 1
    %p257 = scmp.ne.s32.totalorder %s252, %s254
    %p258 = scmp.eq.s32.totalorder %s29, 0
    %p259 = por %p257, %p258
    %p260 = scmp.ne.s32.totalorder %s252, %s254
    %p261 = scmp.eq.s32.totalorder %s34, 1
    %p262 = por %p260, %p261
    %p263 = scmp.ne.s32.totalorder %s254, %s255
    %p264 = scmp.eq.s32.totalorder %s34, 0
    %p265 = por %p263, %p264
    %p266 = scmp.ne.s32.totalorder %s254, %s255
    %p267 = scmp.eq.s32.totalorder %s35, 1
    %p268 = por %p266, %p267
    %p270 = scmp.ne.s32.totalorder %s255, %s269
    %p271 = scmp.eq.s32.totalorder %s35, 0
    %p272 = por %p270, %p271
    %s274 = sadd.s32 %s273, 1
    %p277 = scmp.eq.s32.totalorder %s29, 1
    %p278 = scmp.ne.s32.totalorder %s273, %s275
    %p279 = scmp.eq.s32.totalorder %s29, 0
    %p280 = por %p278, %p279
    %p281 = scmp.ne.s32.totalorder %s273, %s275
    %p282 = scmp.eq.s32.totalorder %s34, 1
    %p283 = por %p281, %p282
    %p284 = scmp.ne.s32.totalorder %s275, %s276
    %p285 = scmp.eq.s32.totalorder %s34, 0
    %p286 = por %p284, %p285
    %p287 = scmp.ne.s32.totalorder %s275, %s276
    %p288 = scmp.eq.s32.totalorder %s35, 1
    %p289 = por %p287, %p288
    %p291 = scmp.ne.s32.totalorder %s276, %s290
    %p292 = scmp.eq.s32.totalorder %s35, 0
    %p293 = por %p291, %p292
    %s295 = sadd.s32 %s294, 1
    %p298 = scmp.eq.s32.totalorder %s29, 1
    %p299 = scmp.ne.s32.totalorder %s294, %s296
    %p300 = scmp.eq.s32.totalorder %s29, 0
    %p301 = por %p299, %p300
    %p302 = scmp.ne.s32.totalorder %s294, %s296
    %p303 = scmp.eq.s32.totalorder %s34, 1
    %p304 = por %p302, %p303
    %p305 = scmp.ne.s32.totalorder %s296, %s297
    %p306 = scmp.eq.s32.totalorder %s34, 0
    %p307 = por %p305, %p306
    %p308 = scmp.ne.s32.totalorder %s296, %s297
    %p309 = scmp.eq.s32.totalorder %s35, 1
    %p310 = por %p308, %p309
    %p312 = scmp.ne.s32.totalorder %s297, %s311
    %p313 = scmp.eq.s32.totalorder %s35, 0
    %p314 = por %p312, %p313
    %s316 = sadd.s32 %s315, 1
    %p319 = scmp.eq.s32.totalorder %s29, 1
    %p320 = scmp.ne.s32.totalorder %s315, %s317
    %p321 = scmp.eq.s32.totalorder %s29, 0
    %p322 = por %p320, %p321
    %p323 = scmp.ne.s32.totalorder %s315, %s317
    %p324 = scmp.eq.s32.totalorder %s34, 1
    %p325 = por %p323, %p324
    %p326 = scmp.ne.s32.totalorder %s317, %s318
    %p327 = scmp.eq.s32.totalorder %s34, 0
    %p328 = por %p326, %p327
    %p329 = scmp.ne.s32.totalorder %s317, %s318
    %p330 = scmp.eq.s32.totalorder %s35, 1
    %p331 = por %p329, %p330
    %p333 = scmp.ne.s32.totalorder %s318, %s332
    %p334 = scmp.eq.s32.totalorder %s35, 0
    %p335 = por %p333, %p334
    %s337 = sadd.s32 %s336, 1
    %p340 = scmp.eq.s32.totalorder %s29, 1
    %p341 = scmp.ne.s32.totalorder %s336, %s338
    %p342 = scmp.eq.s32.totalorder %s29, 0
    %p343 = por %p341, %p342
    %p344 = scmp.ne.s32.totalorder %s336, %s338
    %p345 = scmp.eq.s32.totalorder %s34, 1
    %p346 = por %p344, %p345
    %p347 = scmp.ne.s32.totalorder %s338, %s339
    %p348 = scmp.eq.s32.totalorder %s34, 0
    %p349 = por %p347, %p348
    %p350 = scmp.ne.s32.totalorder %s338, %s339
    %p351 = scmp.eq.s32.totalorder %s35, 1
    %p352 = por %p350, %p351
    %p354 = scmp.ne.s32.totalorder %s339, %s353
    %p355 = scmp.eq.s32.totalorder %s35, 0
    %p356 = por %p354, %p355
    %s358 = sadd.s32 %s357, 1
    %p361 = scmp.eq.s32.totalorder %s29, 1
    %p362 = scmp.ne.s32.totalorder %s357, %s359
    %p363 = scmp.eq.s32.totalorder %s29, 0
    %p364 = por %p362, %p363
    %p365 = scmp.ne.s32.totalorder %s357, %s359
    %p366 = scmp.eq.s32.totalorder %s34, 1
    %p367 = por %p365, %p366
    %p368 = scmp.ne.s32.totalorder %s359, %s360
    %p369 = scmp.eq.s32.totalorder %s34, 0
    %p370 = por %p368, %p369
    %p371 = scmp.ne.s32.totalorder %s359, %s360
    %p372 = scmp.eq.s32.totalorder %s35, 1
    %p373 = por %p371, %p372
    %p375 = scmp.ne.s32.totalorder %s360, %s374
    %p376 = scmp.eq.s32.totalorder %s35, 0
    %p377 = por %p375, %p376
    %s379 = sadd.s32 %s378, 1
    %p382 = scmp.eq.s32.totalorder %s29, 1
    %p383 = scmp.ne.s32.totalorder %s378, %s380
    %p384 = scmp.eq.s32.totalorder %s29, 0
    %p385 = por %p383, %p384
    %p386 = scmp.ne.s32.totalorder %s378, %s380
    %p387 = scmp.eq.s32.totalorder %s34, 1
    %p388 = por %p386, %p387
    %p389 = scmp.ne.s32.totalorder %s380, %s381
    %p390 = scmp.eq.s32.totalorder %s34, 0
    %p391 = por %p389, %p390
    %p392 = scmp.ne.s32.totalorder %s380, %s381
    %p393 = scmp.eq.s32.totalorder %s35, 1
    %p394 = por %p392, %p393
    %p396 = scmp.ne.s32.totalorder %s381, %s395
    %p397 = scmp.eq.s32.totalorder %s35, 0
    %p398 = por %p396, %p397
    %s400 = sadd.s32 %s399, 1
    %p403 = scmp.eq.s32.totalorder %s29, 1
    %p404 = scmp.ne.s32.totalorder %s399, %s401
    %p405 = scmp.eq.s32.totalorder %s29, 0
    %p406 = por %p404, %p405
    %p407 = scmp.ne.s32.totalorder %s399, %s401
    %p408 = scmp.eq.s32.totalorder %s34, 1
    %p409 = por %p407, %p408
    %p410 = scmp.ne.s32.totalorder %s401, %s402
    %p411 = scmp.eq.s32.totalorder %s34, 0
    %p412 = por %p410, %p411
    %p413 = scmp.ne.s32.totalorder %s401, %s402
    %p414 = scmp.eq.s32.totalorder %s35, 1
    %p415 = por %p413, %p414
    %p417 = scmp.ne.s32.totalorder %s402, %s416
    %p418 = scmp.eq.s32.totalorder %s35, 0
    %p419 = por %p417, %p418
    %s421 = sadd.s32 %s420, 1
    %p424 = scmp.eq.s32.totalorder %s29, 1
    %p425 = scmp.ne.s32.totalorder %s420, %s422
    %p426 = scmp.eq.s32.totalorder %s29, 0
    %p427 = por %p425, %p426
    %p428 = scmp.ne.s32.totalorder %s420, %s422
    %p429 = scmp.eq.s32.totalorder %s34, 1
    %p430 = por %p428, %p429
    %p431 = scmp.ne.s32.totalorder %s422, %s423
    %p432 = scmp.eq.s32.totalorder %s34, 0
    %p433 = por %p431, %p432
    %p434 = scmp.ne.s32.totalorder %s422, %s423
    %p435 = scmp.eq.s32.totalorder %s35, 1
    %p436 = por %p434, %p435
    %p438 = scmp.ne.s32.totalorder %s423, %s437
    %p439 = scmp.eq.s32.totalorder %s35, 0
    %p440 = por %p438, %p439
    %s442 = sadd.s32 %s441, 1
    %p445 = scmp.eq.s32.totalorder %s29, 1
    %p446 = scmp.ne.s32.totalorder %s441, %s443
    %p447 = scmp.eq.s32.totalorder %s29, 0
    %p448 = por %p446, %p447
    %p449 = scmp.ne.s32.totalorder %s441, %s443
    %p450 = scmp.eq.s32.totalorder %s34, 1
    %p451 = por %p449, %p450
    %p452 = scmp.ne.s32.totalorder %s443, %s444
    %p453 = scmp.eq.s32.totalorder %s34, 0
    %p454 = por %p452, %p453
    %p455 = scmp.ne.s32.totalorder %s443, %s444
    %p456 = scmp.eq.s32.totalorder %s35, 1
    %p457 = por %p455, %p456
    %p459 = scmp.ne.s32.totalorder %s444, %s458
    %p460 = scmp.eq.s32.totalorder %s35, 0
    %p461 = por %p459, %p460
    %s463 = sadd.s32 %s462, 1
    %p466 = scmp.eq.s32.totalorder %s29, 1
    %p467 = scmp.ne.s32.totalorder %s462, %s464
    %p468 = scmp.eq.s32.totalorder %s29, 0
    %p469 = por %p467, %p468
    %p470 = scmp.ne.s32.totalorder %s462, %s464
    %p471 = scmp.eq.s32.totalorder %s34, 1
    %p472 = por %p470, %p471
    %p473 = scmp.ne.s32.totalorder %s464, %s465
    %p474 = scmp.eq.s32.totalorder %s34, 0
    %p475 = por %p473, %p474
    %p476 = scmp.ne.s32.totalorder %s464, %s465
    %p477 = scmp.eq.s32.totalorder %s35, 1
    %p478 = por %p476, %p477
    %p480 = scmp.ne.s32.totalorder %s465, %s479
    %p481 = scmp.eq.s32.totalorder %s35, 0
    %p482 = por %p480, %p481
    %s483 = ssub.s32 %s29, %s36
    %p484 = scmp.eq.s32.totalorder %s483, 0
    %s486 = sadd.s32 %s485, 1
    %s487 = scalar_select %p484, %s485, %s486
    %p490 = pneg %p484
    %p491 = scmp.eq.s32.totalorder %s29, 1
    %p492 = por %p490, %p491
    %p493 = scmp.ne.s32.totalorder %s485, %s488
    %p494 = scmp.eq.s32.totalorder %s29, 0
    %p495 = por %p493, %p494
    %p496 = scmp.ne.s32.totalorder %s485, %s488
    %p497 = scmp.eq.s32.totalorder %s34, 1
    %p498 = por %p496, %p497
    %p499 = scmp.ne.s32.totalorder %s488, %s489
    %p500 = scmp.eq.s32.totalorder %s34, 0
    %p501 = por %p499, %p500
    %p502 = scmp.ne.s32.totalorder %s488, %s489
    %p503 = scmp.eq.s32.totalorder %s35, 1
    %p504 = por %p502, %p503
    %p506 = scmp.ne.s32.totalorder %s489, %s505
    %p507 = scmp.eq.s32.totalorder %s35, 0
    %p508 = por %p506, %p507
    %p509 = scmp.le.s32.totalorder 1, %s29
    %p510 = scmp.lt.s32.totalorder %s29, 3
    %p511 = pnand %p509, %p510
    %p512 = pneg %p511
    // Predicated region
    $region9: #{temporal_conv_net_forward.1} parent=5 // pred_check
      _
    $region10: #{temporal_conv_net_forward.1} parent=5 // pred_check_branch
      %514 = sbr.rel (%p511) target = $region12
    $region11: #{temporal_conv_net_forward.1} parent=5 // pred_region
      %s515 = ssub.s32 %s29, 1
      // Predicated region
      $region13: #{temporal_conv_net_forward.1} parent=11 // pred_check
        %p516 = pneg %p76
      $region14: #{temporal_conv_net_forward.1} parent=11 // pred_check_branch
        %518 = sbr.rel (%p516) target = $region16
      $region15: #{temporal_conv_net_forward.1} parent=11 // pred_region
        _
      $region16: #{temporal_conv_net_forward.1} parent=11 // pred_fallthru
        _
      // Predicated region
      $region17: #{temporal_conv_net_forward.1} parent=11 // pred_check
        %p519 = pneg %p97
      $region18: #{temporal_conv_net_forward.1} parent=11 // pred_check_branch
        %521 = sbr.rel (%p519) target = $region20
      $region19: #{temporal_conv_net_forward.1} parent=11 // pred_region
        _
      $region20: #{temporal_conv_net_forward.1} parent=11 // pred_fallthru
        _
      // Predicated region
      $region21: #{temporal_conv_net_forward.1} parent=11 // pred_check
        %p522 = pneg %p118
      $region22: #{temporal_conv_net_forward.1} parent=11 // pred_check_branch
        %524 = sbr.rel (%p522) target = $region24
      $region23: #{temporal_conv_net_forward.1} parent=11 // pred_region
        _
      $region24: #{temporal_conv_net_forward.1} parent=11 // pred_fallthru
        _
      // Predicated region
      $region25: #{temporal_conv_net_forward.1} parent=11 // pred_check
        %p525 = pneg %p139
      $region26: #{temporal_conv_net_forward.1} parent=11 // pred_check_branch
        %527 = sbr.rel (%p525) target = $region28
      $region27: #{temporal_conv_net_forward.1} parent=11 // pred_region
        _
      $region28: #{temporal_conv_net_forward.1} parent=11 // pred_fallthru
        _
      // Predicated region
      $region29: #{temporal_conv_net_forward.1} parent=11 // pred_check
        %p528 = pneg %p160
      $region30: #{temporal_conv_net_forward.1} parent=11 // pred_check_branch
        %530 = sbr.rel (%p528) target = $region32
      $region31: #{temporal_conv_net_forward.1} parent=11 // pred_region
        _
      $region32: #{temporal_conv_net_forward.1} parent=11 // pred_fallthru
        _
      // Predicated region
      $region33: #{temporal_conv_net_forward.1} parent=11 // pred_check
        %p531 = pneg %p181
      $region34: #{temporal_conv_net_forward.1} parent=11 // pred_check_branch
        %533 = sbr.rel (%p531) target = $region36
      $region35: #{temporal_conv_net_forward.1} parent=11 // pred_region
        _
      $region36: #{temporal_conv_net_forward.1} parent=11 // pred_fallthru
        _
      // Predicated region
      $region37: #{temporal_conv_net_forward.1} parent=11 // pred_check
        %p534 = pneg %p202
      $region38: #{temporal_conv_net_forward.1} parent=11 // pred_check_branch
        %536 = sbr.rel (%p534) target = $region40
      $region39: #{temporal_conv_net_forward.1} parent=11 // pred_region
        _
      $region40: #{temporal_conv_net_forward.1} parent=11 // pred_fallthru
        _
      // Predicated region
      $region41: #{temporal_conv_net_forward.1} parent=11 // pred_check
        %p537 = pneg %p223
      $region42: #{temporal_conv_net_forward.1} parent=11 // pred_check_branch
        %539 = sbr.rel (%p537) target = $region44
      $region43: #{temporal_conv_net_forward.1} parent=11 // pred_region
        _
      $region44: #{temporal_conv_net_forward.1} parent=11 // pred_fallthru
        _
      // Predicated region
      $region45: #{temporal_conv_net_forward.1} parent=11 // pred_check
        %p540 = pneg %p244
      $region46: #{temporal_conv_net_forward.1} parent=11 // pred_check_branch
        %542 = sbr.rel (%p540) target = $region48
      $region47: #{temporal_conv_net_forward.1} parent=11 // pred_region
        _
      $region48: #{temporal_conv_net_forward.1} parent=11 // pred_fallthru
        _
      // Predicated region
      $region49: #{temporal_conv_net_forward.1} parent=11 // pred_check
        %p543 = pneg %p265
      $region50: #{temporal_conv_net_forward.1} parent=11 // pred_check_branch
        %545 = sbr.rel (%p543) target = $region52
      $region51: #{temporal_conv_net_forward.1} parent=11 // pred_region
        _
      $region52: #{temporal_conv_net_forward.1} parent=11 // pred_fallthru
        _
      // Predicated region
      $region53: #{temporal_conv_net_forward.1} parent=11 // pred_check
        %p546 = pneg %p286
      $region54: #{temporal_conv_net_forward.1} parent=11 // pred_check_branch
        %548 = sbr.rel (%p546) target = $region56
      $region55: #{temporal_conv_net_forward.1} parent=11 // pred_region
        _
      $region56: #{temporal_conv_net_forward.1} parent=11 // pred_fallthru
        _
      // Predicated region
      $region57: #{temporal_conv_net_forward.1} parent=11 // pred_check
        %p549 = pneg %p307
      $region58: #{temporal_conv_net_forward.1} parent=11 // pred_check_branch
        %551 = sbr.rel (%p549) target = $region60
      $region59: #{temporal_conv_net_forward.1} parent=11 // pred_region
        _
      $region60: #{temporal_conv_net_forward.1} parent=11 // pred_fallthru
        _
      // Predicated region
      $region61: #{temporal_conv_net_forward.1} parent=11 // pred_check
        %p552 = pneg %p328
      $region62: #{temporal_conv_net_forward.1} parent=11 // pred_check_branch
        %554 = sbr.rel (%p552) target = $region64
      $region63: #{temporal_conv_net_forward.1} parent=11 // pred_region
        _
      $region64: #{temporal_conv_net_forward.1} parent=11 // pred_fallthru
        _
      // Predicated region
      $region65: #{temporal_conv_net_forward.1} parent=11 // pred_check
        %p555 = pneg %p349
      $region66: #{temporal_conv_net_forward.1} parent=11 // pred_check_branch
        %557 = sbr.rel (%p555) target = $region68
      $region67: #{temporal_conv_net_forward.1} parent=11 // pred_region
        _
      $region68: #{temporal_conv_net_forward.1} parent=11 // pred_fallthru
        _
      // Predicated region
      $region69: #{temporal_conv_net_forward.1} parent=11 // pred_check
        %p558 = pneg %p370
      $region70: #{temporal_conv_net_forward.1} parent=11 // pred_check_branch
        %560 = sbr.rel (%p558) target = $region72
      $region71: #{temporal_conv_net_forward.1} parent=11 // pred_region
        _
      $region72: #{temporal_conv_net_forward.1} parent=11 // pred_fallthru
        _
      // Predicated region
      $region73: #{temporal_conv_net_forward.1} parent=11 // pred_check
        %p561 = pneg %p391
      $region74: #{temporal_conv_net_forward.1} parent=11 // pred_check_branch
        %563 = sbr.rel (%p561) target = $region76
      $region75: #{temporal_conv_net_forward.1} parent=11 // pred_region
        _
      $region76: #{temporal_conv_net_forward.1} parent=11 // pred_fallthru
        _
      // Predicated region
      $region77: #{temporal_conv_net_forward.1} parent=11 // pred_check
        %p564 = pneg %p412
      $region78: #{temporal_conv_net_forward.1} parent=11 // pred_check_branch
        %566 = sbr.rel (%p564) target = $region80
      $region79: #{temporal_conv_net_forward.1} parent=11 // pred_region
        _
      $region80: #{temporal_conv_net_forward.1} parent=11 // pred_fallthru
        _
      // Predicated region
      $region81: #{temporal_conv_net_forward.1} parent=11 // pred_check
        %p567 = pneg %p433
      $region82: #{temporal_conv_net_forward.1} parent=11 // pred_check_branch
        %569 = sbr.rel (%p567) target = $region84
      $region83: #{temporal_conv_net_forward.1} parent=11 // pred_region
        _
      $region84: #{temporal_conv_net_forward.1} parent=11 // pred_fallthru
        _
      // Predicated region
      $region85: #{temporal_conv_net_forward.1} parent=11 // pred_check
        %p570 = pneg %p454
      $region86: #{temporal_conv_net_forward.1} parent=11 // pred_check_branch
        %572 = sbr.rel (%p570) target = $region88
      $region87: #{temporal_conv_net_forward.1} parent=11 // pred_region
        _
      $region88: #{temporal_conv_net_forward.1} parent=11 // pred_fallthru
        _
      // Predicated region
      $region89: #{temporal_conv_net_forward.1} parent=11 // pred_check
        %p573 = pneg %p475
      $region90: #{temporal_conv_net_forward.1} parent=11 // pred_check_branch
        %575 = sbr.rel (%p573) target = $region92
      $region91: #{temporal_conv_net_forward.1} parent=11 // pred_region
        _
      $region92: #{temporal_conv_net_forward.1} parent=11 // pred_fallthru
        _
    $region12: #{temporal_conv_net_forward.1} parent=5 // pred_fallthru
      _
    %p576 = scmp.lt.s32.totalorder %s29, 2
    // Predicated region
    $region93: #{temporal_conv_net_forward.1} parent=5 // pred_check
      %p577 = pneg %p576
    $region94: #{temporal_conv_net_forward.1} parent=5 // pred_check_branch
      %579 = sbr.rel (%p577) target = $region96
    $region95: #{temporal_conv_net_forward.1} parent=5 // pred_region
      // Predicated region
      $region97: #{temporal_conv_net_forward.1} parent=95 // pred_check
        %p580 = pneg %p49
      $region98: #{temporal_conv_net_forward.1} parent=95 // pred_check_branch
        %582 = sbr.rel (%p580) target = $region100
      $region99: #{temporal_conv_net_forward.1} parent=95 // pred_region
        %p583 = scmp.lt.s32.totalorder %s29, 1
        %s584 = scalar_select %p583, %s29, 1
        %s585 = smul.addr %s584, 4
        %s586 = scalar_lea.vmem %s0, %s585
      $region100: #{temporal_conv_net_forward.1} parent=95 // pred_fallthru
        _
    $region96: #{temporal_conv_net_forward.1} parent=5 // pred_fallthru
      _
    %p587 = scmp.le.s32.totalorder 1, %s29
    %p588 = scmp.lt.s32.totalorder %s29, 3
    %p589 = pnand %p587, %p588
    %p590 = pneg %p589
    // Predicated region
    $region101: #{temporal_conv_net_forward.1} parent=5 // pred_check
      _
    $region102: #{temporal_conv_net_forward.1} parent=5 // pred_check_branch
      %592 = sbr.rel (%p589) target = $region104
    $region103: #{temporal_conv_net_forward.1} parent=5 // pred_region
      %s593 = ssub.s32 %s29, 1
      %p594 = scmp.lt.s32.totalorder %s34, 1
      %s595 = scalar_select %p594, %s34, 1
      %s596 = smul.addr %s595, 4
      %s597 = scalar_lea.vmem %s0, %s596
      %p598 = pneg %p55
      %p599 = pneg %p52
      %p600 = pneg %p76
      %p601 = pneg %p73
      %p602 = pneg %p97
      %p603 = pneg %p94
      %p604 = pneg %p118
      %p605 = pneg %p115
      %p606 = pneg %p139
      %p607 = pneg %p136
      %p608 = pneg %p160
      %p609 = pneg %p157
      %p610 = pneg %p181
      %p611 = pneg %p178
      %p612 = pneg %p202
      %p613 = pneg %p199
      %p614 = pneg %p223
      %p615 = pneg %p220
      %p616 = pneg %p244
      %p617 = pneg %p241
      %p618 = pneg %p265
      %p619 = pneg %p262
      %p620 = pneg %p286
      %p621 = pneg %p283
      %p622 = pneg %p307
      %p623 = pneg %p304
      %p624 = pneg %p328
      %p625 = pneg %p325
      %p626 = pneg %p349
      %p627 = pneg %p346
      %p628 = pneg %p370
      %p629 = pneg %p367
      %p630 = pneg %p391
      %p631 = pneg %p388
      %p632 = pneg %p412
      %p633 = pneg %p409
      %p634 = pneg %p433
      %p635 = pneg %p430
      %p636 = pneg %p454
      %p637 = pneg %p451
      %p638 = pneg %p475
      %p639 = pneg %p472
      %p640 = pneg %p501
      %p641 = pneg %p498
      %p642 = scmp.lt.s32.totalorder %s34, 1
      %s643 = scalar_select %p642, %s34, 1
      %s644 = scalar_lea.vmem %s21, %s643
      %p645 = scmp.lt.s32.totalorder %s34, 1
      %s646 = scalar_select %p645, %s34, 1
      %s647 = smul.addr %s646, 4
      %s648 = scalar_lea.vmem %s0, %s647
      %p649 = scmp.lt.s32.totalorder %s34, 1
      %s650 = scalar_select %p649, %s34, 1
      %s651 = scalar_lea.vmem %s21, %s650
      %v652 = vld [vmem:[%s648] sm:$0xf]
      %v653 = vld [vmem:[%s2] sm:$0xff]
      %v654 = vld [vmem:[%s4] sm:$0xff]
      %v655 = vld [vmem:[%s5] sm:$0xff]
      %v656 = vld [vmem:[%s6] sm:$0xff]
      %658 = vset.pattern.permute.xlu0 0
      %659 = vperm.xlu0 %658, %v656
      %v660 = vpop.permute.xlu0 %659
      %vm662 = vcmask 31744
      %v664 = vsel %vm662, %v655, 0
      %vm666 = vcmask 1043456
      %v668 = vsel %vm666, %v652, 0
      %670 = vmatprep.subr.mxu0 0.0
      %671 = vmatpush1.msra.mxu0 0.0
      %672 = vmatprep.subr.mxu0 0.0
      %673 = vmatpush1.msra.mxu0 0.0
      %674 = vmatprep.subr.mxu0 0.0
      %675 = vmatpush1.msra.mxu0 0.0
      %676 = vmatprep.subr.mxu0 0.0
      %677 = vmatpush1.msra.mxu0 0.0
      %678 = vmatprep.subr.mxu0 0.0
      %679 = vmatpush1.msra.mxu0 0.0
      %680 = vmatprep.subr.mxu0 0.0
      %681 = vmatpush1.msra.mxu0 0.0
      %682 = vmatprep.subr.mxu0 0.0
      %683 = vmatpush1.msra.mxu0 0.0
      %684 = vmatprep.subr.mxu0 0.0
      %685 = vmatpush1.msra.mxu0 0.0
      %686 = vmatprep.subr.mxu0 0.0
      %687 = vmatpush1.msra.mxu0 0.0
      %688 = vmatprep.subr.mxu0 0.0
      %689 = vmatpush1.msra.mxu0 0.0
      %690 = vmatprep.subr.mxu0 0.0
      %691 = vmatpush1.msra.mxu0 0.0
      %692 = vmatprep.subr.mxu0 0.0
      %693 = vmatpush1.msra.mxu0 0.0
      %694 = vmatprep.subr.mxu0 0.0
      %695 = vmatpush1.msra.mxu0 0.0
      %696 = vmatprep.subr.mxu0 0.0
      %697 = vmatpush1.msra.mxu0 0.0
      %698 = vmatprep.subr.mxu0 0.0
      %699 = vmatpush1.msra.mxu0 0.0
      %700 = vmatprep.subr.mxu0 0.0
      %701 = vmatpush1.msra.mxu0 %v668
      %702 = vmatprep.subr.mxu0 0.0
      %703 = vmatpush2.msra.mxu0 0.0
      %704 = vmatprep.subr.mxu0 0.0
      %705 = vmatpush2.msra.mxu0 0.0
      %706 = vmatprep.subr.mxu0 0.0
      %707 = vmatpush2.msra.mxu0 0.0
      %708 = vmatprep.subr.mxu0 0.0
      %709 = vmatpush2.msra.mxu0 0.0
      %710 = vmatprep.subr.mxu0 0.0
      %711 = vmatpush2.msra.mxu0 0.0
      %712 = vmatprep.subr.mxu0 0.0
      %713 = vmatpush2.msra.mxu0 0.0
      %714 = vmatprep.subr.mxu0 0.0
      %715 = vmatpush2.msra.mxu0 0.0
      %716 = vmatprep.subr.mxu0 0.0
      %717 = vmatpush2.msra.mxu0 0.0
      %718 = vmatprep.subr.mxu0 0.0
      %719 = vmatpush2.msra.mxu0 0.0
      %720 = vmatprep.subr.mxu0 0.0
      %721 = vmatpush2.msra.mxu0 0.0
      %722 = vmatprep.subr.mxu0 0.0
      %723 = vmatpush2.msra.mxu0 0.0
      %724 = vmatprep.subr.mxu0 0.0
      %725 = vmatpush2.msra.mxu0 0.0
      %726 = vmatprep.subr.mxu0 0.0
      %727 = vmatpush2.msra.mxu0 0.0
      %728 = vmatprep.subr.mxu0 0.0
      %729 = vmatpush2.msra.mxu0 0.0
      %730 = vmatprep.subr.mxu0 0.0
      %731 = vmatpush2.msra.mxu0 0.0
      %732 = vmatprep.subr.mxu0 0.0
      %733 = vmatpush2.msra.mxu0 0.0
      %734 = vmatprep.mubr.f32.mxu0 0.0
      %735 = vmatmul.mubr.f32.gmra.mxu0 %v664
      %v736 = vpop.f32.mrf.mxu0
      %v737 = vadd.f32 %v660, %v736
      %v738 = vpop.f32.mrf.mxu0
      %739 = vdwg.mxu0
      %740 = vrot.lane.b32.xlu0 %v652, 2
      %v741 = vpop.permute.xlu0 %740
      %vm743 = vcmask 15360
      %v744 = vsel %vm743, 0.0, %v741
      %vm745 = vcmask 146432
      %v746 = vsel %vm745, %v744, 0.0
      %v747 = vld [vmem:[%s1] sm:$0xff]
      %s748 = scalar_lea.vmem %s1, 8
      %v749 = vld [vmem:[%s748] sm:$0xff]
      %751 = vrot.lane.b32.xlu0 %v746, 127
      %v752 = vpop.permute.xlu0 %751
      %v754 = vsel %vm662, %v749, 0
      %v756 = vsel %vm666, %v752, 0
      %758 = vmatprep.subr.mxu0 0.0
      %759 = vmatpush1.msra.mxu0 0.0
      %760 = vmatprep.subr.mxu0 0.0
      %761 = vmatpush1.msra.mxu0 0.0
      %762 = vmatprep.subr.mxu0 0.0
      %763 = vmatpush1.msra.mxu0 0.0
      %764 = vmatprep.subr.mxu0 0.0
      %765 = vmatpush1.msra.mxu0 0.0
      %766 = vmatprep.subr.mxu0 0.0
      %767 = vmatpush1.msra.mxu0 0.0
      %768 = vmatprep.subr.mxu0 0.0
      %769 = vmatpush1.msra.mxu0 0.0
      %770 = vmatprep.subr.mxu0 0.0
      %771 = vmatpush1.msra.mxu0 0.0
      %772 = vmatprep.subr.mxu0 0.0
      %773 = vmatpush1.msra.mxu0 0.0
      %774 = vmatprep.subr.mxu0 0.0
      %775 = vmatpush1.msra.mxu0 0.0
      %776 = vmatprep.subr.mxu0 0.0
      %777 = vmatpush1.msra.mxu0 0.0
      %778 = vmatprep.subr.mxu0 0.0
      %779 = vmatpush1.msra.mxu0 0.0
      %780 = vmatprep.subr.mxu0 0.0
      %781 = vmatpush1.msra.mxu0 0.0
      %782 = vmatprep.subr.mxu0 0.0
      %783 = vmatpush1.msra.mxu0 0.0
      %784 = vmatprep.subr.mxu0 0.0
      %785 = vmatpush1.msra.mxu0 0.0
      %786 = vmatprep.subr.mxu0 0.0
      %787 = vmatpush1.msra.mxu0 0.0
      %788 = vmatprep.subr.mxu0 0.0
      %789 = vmatpush1.msra.mxu0 %v756
      %790 = vmatprep.subr.mxu0 0.0
      %791 = vmatpush2.msra.mxu0 0.0
      %792 = vmatprep.subr.mxu0 0.0
      %793 = vmatpush2.msra.mxu0 0.0
      %794 = vmatprep.subr.mxu0 0.0
      %795 = vmatpush2.msra.mxu0 0.0
      %796 = vmatprep.subr.mxu0 0.0
      %797 = vmatpush2.msra.mxu0 0.0
      %798 = vmatprep.subr.mxu0 0.0
      %799 = vmatpush2.msra.mxu0 0.0
      %800 = vmatprep.subr.mxu0 0.0
      %801 = vmatpush2.msra.mxu0 0.0
      %802 = vmatprep.subr.mxu0 0.0
      %803 = vmatpush2.msra.mxu0 0.0
      %804 = vmatprep.subr.mxu0 0.0
      %805 = vmatpush2.msra.mxu0 0.0
      %806 = vmatprep.subr.mxu0 0.0
      %807 = vmatpush2.msra.mxu0 0.0
      %808 = vmatprep.subr.mxu0 0.0
      %809 = vmatpush2.msra.mxu0 0.0
      %810 = vmatprep.subr.mxu0 0.0
      %811 = vmatpush2.msra.mxu0 0.0
      %812 = vmatprep.subr.mxu0 0.0
      %813 = vmatpush2.msra.mxu0 0.0
      %814 = vmatprep.subr.mxu0 0.0
      %815 = vmatpush2.msra.mxu0 0.0
      %816 = vmatprep.subr.mxu0 0.0
      %817 = vmatpush2.msra.mxu0 0.0
      %818 = vmatprep.subr.mxu0 0.0
      %819 = vmatpush2.msra.mxu0 0.0
      %820 = vmatprep.subr.mxu0 0.0
      %821 = vmatpush2.msra.mxu0 0.0
      %822 = vmatprep.mubr.f32.mxu0 0.0
      %823 = vmatmul.mubr.f32.gmra.mxu0 %v754
      %v824 = vpop.f32.mrf.mxu0
      %v825 = vadd.f32 0.0, %v824
      %v826 = vpop.f32.mrf.mxu0
      %827 = vdwg.mxu0
      %v829 = vsel %vm662, %v747, 0
      %v831 = vsel %vm666, %v746, 0
      %833 = vmatprep.subr.mxu0 0.0
      %834 = vmatpush1.msra.mxu0 0.0
      %835 = vmatprep.subr.mxu0 0.0
      %836 = vmatpush1.msra.mxu0 0.0
      %837 = vmatprep.subr.mxu0 0.0
      %838 = vmatpush1.msra.mxu0 0.0
      %839 = vmatprep.subr.mxu0 0.0
      %840 = vmatpush1.msra.mxu0 0.0
      %841 = vmatprep.subr.mxu0 0.0
      %842 = vmatpush1.msra.mxu0 0.0
      %843 = vmatprep.subr.mxu0 0.0
      %844 = vmatpush1.msra.mxu0 0.0
      %845 = vmatprep.subr.mxu0 0.0
      %846 = vmatpush1.msra.mxu0 0.0
      %847 = vmatprep.subr.mxu0 0.0
      %848 = vmatpush1.msra.mxu0 0.0
      %849 = vmatprep.subr.mxu0 0.0
      %850 = vmatpush1.msra.mxu0 0.0
      %851 = vmatprep.subr.mxu0 0.0
      %852 = vmatpush1.msra.mxu0 0.0
      %853 = vmatprep.subr.mxu0 0.0
      %854 = vmatpush1.msra.mxu0 0.0
      %855 = vmatprep.subr.mxu0 0.0
      %856 = vmatpush1.msra.mxu0 0.0
      %857 = vmatprep.subr.mxu0 0.0
      %858 = vmatpush1.msra.mxu0 0.0
      %859 = vmatprep.subr.mxu0 0.0
      %860 = vmatpush1.msra.mxu0 0.0
      %861 = vmatprep.subr.mxu0 0.0
      %862 = vmatpush1.msra.mxu0 0.0
      %863 = vmatprep.subr.mxu0 0.0
      %864 = vmatpush1.msra.mxu0 %v831
      %865 = vmatprep.subr.mxu0 0.0
      %866 = vmatpush2.msra.mxu0 0.0
      %867 = vmatprep.subr.mxu0 0.0
      %868 = vmatpush2.msra.mxu0 0.0
      %869 = vmatprep.subr.mxu0 0.0
      %870 = vmatpush2.msra.mxu0 0.0
      %871 = vmatprep.subr.mxu0 0.0
      %872 = vmatpush2.msra.mxu0 0.0
      %873 = vmatprep.subr.mxu0 0.0
      %874 = vmatpush2.msra.mxu0 0.0
      %875 = vmatprep.subr.mxu0 0.0
      %876 = vmatpush2.msra.mxu0 0.0
      %877 = vmatprep.subr.mxu0 0.0
      %878 = vmatpush2.msra.mxu0 0.0
      %879 = vmatprep.subr.mxu0 0.0
      %880 = vmatpush2.msra.mxu0 0.0
      %881 = vmatprep.subr.mxu0 0.0
      %882 = vmatpush2.msra.mxu0 0.0
      %883 = vmatprep.subr.mxu0 0.0
      %884 = vmatpush2.msra.mxu0 0.0
      %885 = vmatprep.subr.mxu0 0.0
      %886 = vmatpush2.msra.mxu0 0.0
      %887 = vmatprep.subr.mxu0 0.0
      %888 = vmatpush2.msra.mxu0 0.0
      %889 = vmatprep.subr.mxu0 0.0
      %890 = vmatpush2.msra.mxu0 0.0
      %891 = vmatprep.subr.mxu0 0.0
      %892 = vmatpush2.msra.mxu0 0.0
      %893 = vmatprep.subr.mxu0 0.0
      %894 = vmatpush2.msra.mxu0 0.0
      %895 = vmatprep.subr.mxu0 0.0
      %896 = vmatpush2.msra.mxu0 0.0
      %897 = vmatprep.mubr.f32.mxu0 0.0
      %898 = vmatmul.mubr.f32.gmra.mxu0 %v829
      %v899 = vpop.f32.mrf.mxu0
      %v900 = vadd.f32 %v825, %v899
      %v901 = vpop.f32.mrf.mxu0
      %902 = vdwg.mxu0
      %s903 = scalar_lea.vmem %s1, 16
      %v904 = vld [vmem:[%s903] sm:$0xff]
      %905 = vrot.lane.b32.xlu0 %v746, 126
      %v906 = vpop.permute.xlu0 %905
      %v908 = vsel %vm662, %v904, 0
      %v910 = vsel %vm666, %v906, 0
      %912 = vmatprep.subr.mxu0 0.0
      %913 = vmatpush1.msra.mxu0 0.0
      %914 = vmatprep.subr.mxu0 0.0
      %915 = vmatpush1.msra.mxu0 0.0
      %916 = vmatprep.subr.mxu0 0.0
      %917 = vmatpush1.msra.mxu0 0.0
      %918 = vmatprep.subr.mxu0 0.0
      %919 = vmatpush1.msra.mxu0 0.0
      %920 = vmatprep.subr.mxu0 0.0
      %921 = vmatpush1.msra.mxu0 0.0
      %922 = vmatprep.subr.mxu0 0.0
      %923 = vmatpush1.msra.mxu0 0.0
      %924 = vmatprep.subr.mxu0 0.0
      %925 = vmatpush1.msra.mxu0 0.0
      %926 = vmatprep.subr.mxu0 0.0
      %927 = vmatpush1.msra.mxu0 0.0
      %928 = vmatprep.subr.mxu0 0.0
      %929 = vmatpush1.msra.mxu0 0.0
      %930 = vmatprep.subr.mxu0 0.0
      %931 = vmatpush1.msra.mxu0 0.0
      %932 = vmatprep.subr.mxu0 0.0
      %933 = vmatpush1.msra.mxu0 0.0
      %934 = vmatprep.subr.mxu0 0.0
      %935 = vmatpush1.msra.mxu0 0.0
      %936 = vmatprep.subr.mxu0 0.0
      %937 = vmatpush1.msra.mxu0 0.0
      %938 = vmatprep.subr.mxu0 0.0
      %939 = vmatpush1.msra.mxu0 0.0
      %940 = vmatprep.subr.mxu0 0.0
      %941 = vmatpush1.msra.mxu0 0.0
      %942 = vmatprep.subr.mxu0 0.0
      %943 = vmatpush1.msra.mxu0 %v910
      %944 = vmatprep.subr.mxu0 0.0
      %945 = vmatpush2.msra.mxu0 0.0
      %946 = vmatprep.subr.mxu0 0.0
      %947 = vmatpush2.msra.mxu0 0.0
      %948 = vmatprep.subr.mxu0 0.0
      %949 = vmatpush2.msra.mxu0 0.0
      %950 = vmatprep.subr.mxu0 0.0
      %951 = vmatpush2.msra.mxu0 0.0
      %952 = vmatprep.subr.mxu0 0.0
      %953 = vmatpush2.msra.mxu0 0.0
      %954 = vmatprep.subr.mxu0 0.0
      %955 = vmatpush2.msra.mxu0 0.0
      %956 = vmatprep.subr.mxu0 0.0
      %957 = vmatpush2.msra.mxu0 0.0
      %958 = vmatprep.subr.mxu0 0.0
      %959 = vmatpush2.msra.mxu0 0.0
      %960 = vmatprep.subr.mxu0 0.0
      %961 = vmatpush2.msra.mxu0 0.0
      %962 = vmatprep.subr.mxu0 0.0
      %963 = vmatpush2.msra.mxu0 0.0
      %964 = vmatprep.subr.mxu0 0.0
      %965 = vmatpush2.msra.mxu0 0.0
      %966 = vmatprep.subr.mxu0 0.0
      %967 = vmatpush2.msra.mxu0 0.0
      %968 = vmatprep.subr.mxu0 0.0
      %969 = vmatpush2.msra.mxu0 0.0
      %970 = vmatprep.subr.mxu0 0.0
      %971 = vmatpush2.msra.mxu0 0.0
      %972 = vmatprep.subr.mxu0 0.0
      %973 = vmatpush2.msra.mxu0 0.0
      %974 = vmatprep.subr.mxu0 0.0
      %975 = vmatpush2.msra.mxu0 0.0
      %976 = vmatprep.mubr.f32.mxu0 0.0
      %977 = vmatmul.mubr.f32.gmra.mxu0 %v908
      %v978 = vpop.f32.mrf.mxu0
      %v979 = vadd.f32 0.0, %v978
      %v980 = vpop.f32.mrf.mxu0
      %981 = vdwg.mxu0
      %v982 = vadd.f32 %v900, %v979
      %984 = vset.pattern.permute.xlu0 0
      %985 = vperm.xlu0 %984, %v653
      %v986 = vpop.permute.xlu0 %985
      %v988 = vadd.f32 %v982, %v986
      %v989 = vmax.f32 %v988, 0.0
      %991 = vrot.lane.b32.xlu0 %v989, 2
      %v992 = vpop.permute.xlu0 %991
      %v994 = vsel %vm743, 0.0, %v992
      %v995 = vld [vmem:[%s3] sm:$0xff]
      %s996 = scalar_lea.vmem %s3, 8
      %v997 = vld [vmem:[%s996] sm:$0xff]
      %999 = vrot.lane.b32.xlu0 %v994, 127
      %v1000 = vpop.permute.xlu0 %999
      %vm1002 = vcmask 64512
      %v1004 = vsel %vm1002, %v997, 0
      %1006 = vmatprep.subr.mxu0 0.0
      %1007 = vmatpush1.msra.mxu0 0.0
      %1008 = vmatprep.subr.mxu0 0.0
      %1009 = vmatpush1.msra.mxu0 0.0
      %1010 = vmatprep.subr.mxu0 0.0
      %1011 = vmatpush1.msra.mxu0 0.0
      %1012 = vmatprep.subr.mxu0 0.0
      %1013 = vmatpush1.msra.mxu0 0.0
      %1014 = vmatprep.subr.mxu0 0.0
      %1015 = vmatpush1.msra.mxu0 0.0
      %1016 = vmatprep.subr.mxu0 0.0
      %1017 = vmatpush1.msra.mxu0 0.0
      %1018 = vmatprep.subr.mxu0 0.0
      %1019 = vmatpush1.msra.mxu0 0.0
      %1020 = vmatprep.subr.mxu0 0.0
      %1021 = vmatpush1.msra.mxu0 0.0
      %1022 = vmatprep.subr.mxu0 0.0
      %1023 = vmatpush1.msra.mxu0 0.0
      %1024 = vmatprep.subr.mxu0 0.0
      %1025 = vmatpush1.msra.mxu0 0.0
      %1026 = vmatprep.subr.mxu0 0.0
      %1027 = vmatpush1.msra.mxu0 0.0
      %1028 = vmatprep.subr.mxu0 0.0
      %1029 = vmatpush1.msra.mxu0 0.0
      %1030 = vmatprep.subr.mxu0 0.0
      %1031 = vmatpush1.msra.mxu0 0.0
      %1032 = vmatprep.subr.mxu0 0.0
      %1033 = vmatpush1.msra.mxu0 0.0
      %1034 = vmatprep.subr.mxu0 0.0
      %1035 = vmatpush1.msra.mxu0 0.0
      %1036 = vmatprep.subr.mxu0 0.0
      %1037 = vmatpush1.msra.mxu0 %v1000
      %1038 = vmatprep.subr.mxu0 0.0
      %1039 = vmatpush2.msra.mxu0 0.0
      %1040 = vmatprep.subr.mxu0 0.0
      %1041 = vmatpush2.msra.mxu0 0.0
      %1042 = vmatprep.subr.mxu0 0.0
      %1043 = vmatpush2.msra.mxu0 0.0
      %1044 = vmatprep.subr.mxu0 0.0
      %1045 = vmatpush2.msra.mxu0 0.0
      %1046 = vmatprep.subr.mxu0 0.0
      %1047 = vmatpush2.msra.mxu0 0.0
      %1048 = vmatprep.subr.mxu0 0.0
      %1049 = vmatpush2.msra.mxu0 0.0
      %1050 = vmatprep.subr.mxu0 0.0
      %1051 = vmatpush2.msra.mxu0 0.0
      %1052 = vmatprep.subr.mxu0 0.0
      %1053 = vmatpush2.msra.mxu0 0.0
      %1054 = vmatprep.subr.mxu0 0.0
      %1055 = vmatpush2.msra.mxu0 0.0
      %1056 = vmatprep.subr.mxu0 0.0
      %1057 = vmatpush2.msra.mxu0 0.0
      %1058 = vmatprep.subr.mxu0 0.0
      %1059 = vmatpush2.msra.mxu0 0.0
      %1060 = vmatprep.subr.mxu0 0.0
      %1061 = vmatpush2.msra.mxu0 0.0
      %1062 = vmatprep.subr.mxu0 0.0
      %1063 = vmatpush2.msra.mxu0 0.0
      %1064 = vmatprep.subr.mxu0 0.0
      %1065 = vmatpush2.msra.mxu0 0.0
      %1066 = vmatprep.subr.mxu0 0.0
      %1067 = vmatpush2.msra.mxu0 0.0
      %1068 = vmatprep.subr.mxu0 0.0
      %1069 = vmatpush2.msra.mxu0 0.0
      %1070 = vmatprep.mubr.f32.mxu0 0.0
      %1071 = vmatmul.mubr.f32.gmra.mxu0 %v1004
      %v1072 = vpop.f32.mrf.mxu0
      %v1073 = vadd.f32 0.0, %v1072
      %v1074 = vpop.f32.mrf.mxu0
      %1075 = vdwg.mxu0
      %v1077 = vsel %vm1002, %v995, 0
      %1079 = vmatprep.subr.mxu0 0.0
      %1080 = vmatpush1.msra.mxu0 0.0
      %1081 = vmatprep.subr.mxu0 0.0
      %1082 = vmatpush1.msra.mxu0 0.0
      %1083 = vmatprep.subr.mxu0 0.0
      %1084 = vmatpush1.msra.mxu0 0.0
      %1085 = vmatprep.subr.mxu0 0.0
      %1086 = vmatpush1.msra.mxu0 0.0
      %1087 = vmatprep.subr.mxu0 0.0
      %1088 = vmatpush1.msra.mxu0 0.0
      %1089 = vmatprep.subr.mxu0 0.0
      %1090 = vmatpush1.msra.mxu0 0.0
      %1091 = vmatprep.subr.mxu0 0.0
      %1092 = vmatpush1.msra.mxu0 0.0
      %1093 = vmatprep.subr.mxu0 0.0
      %1094 = vmatpush1.msra.mxu0 0.0
      %1095 = vmatprep.subr.mxu0 0.0
      %1096 = vmatpush1.msra.mxu0 0.0
      %1097 = vmatprep.subr.mxu0 0.0
      %1098 = vmatpush1.msra.mxu0 0.0
      %1099 = vmatprep.subr.mxu0 0.0
      %1100 = vmatpush1.msra.mxu0 0.0
      %1101 = vmatprep.subr.mxu0 0.0
      %1102 = vmatpush1.msra.mxu0 0.0
      %1103 = vmatprep.subr.mxu0 0.0
      %1104 = vmatpush1.msra.mxu0 0.0
      %1105 = vmatprep.subr.mxu0 0.0
      %1106 = vmatpush1.msra.mxu0 0.0
      %1107 = vmatprep.subr.mxu0 0.0
      %1108 = vmatpush1.msra.mxu0 0.0
      %1109 = vmatprep.subr.mxu0 0.0
      %1110 = vmatpush1.msra.mxu0 %v994
      %1111 = vmatprep.subr.mxu0 0.0
      %1112 = vmatpush2.msra.mxu0 0.0
      %1113 = vmatprep.subr.mxu0 0.0
      %1114 = vmatpush2.msra.mxu0 0.0
      %1115 = vmatprep.subr.mxu0 0.0
      %1116 = vmatpush2.msra.mxu0 0.0
      %1117 = vmatprep.subr.mxu0 0.0
      %1118 = vmatpush2.msra.mxu0 0.0
      %1119 = vmatprep.subr.mxu0 0.0
      %1120 = vmatpush2.msra.mxu0 0.0
      %1121 = vmatprep.subr.mxu0 0.0
      %1122 = vmatpush2.msra.mxu0 0.0
      %1123 = vmatprep.subr.mxu0 0.0
      %1124 = vmatpush2.msra.mxu0 0.0
      %1125 = vmatprep.subr.mxu0 0.0
      %1126 = vmatpush2.msra.mxu0 0.0
      %1127 = vmatprep.subr.mxu0 0.0
      %1128 = vmatpush2.msra.mxu0 0.0
      %1129 = vmatprep.subr.mxu0 0.0
      %1130 = vmatpush2.msra.mxu0 0.0
      %1131 = vmatprep.subr.mxu0 0.0
      %1132 = vmatpush2.msra.mxu0 0.0
      %1133 = vmatprep.subr.mxu0 0.0
      %1134 = vmatpush2.msra.mxu0 0.0
      %1135 = vmatprep.subr.mxu0 0.0
      %1136 = vmatpush2.msra.mxu0 0.0
      %1137 = vmatprep.subr.mxu0 0.0
      %1138 = vmatpush2.msra.mxu0 0.0
      %1139 = vmatprep.subr.mxu0 0.0
      %1140 = vmatpush2.msra.mxu0 0.0
      %1141 = vmatprep.subr.mxu0 0.0
      %1142 = vmatpush2.msra.mxu0 0.0
      %1143 = vmatprep.mubr.f32.mxu0 0.0
      %1144 = vmatmul.mubr.f32.gmra.mxu0 %v1077
      %v1145 = vpop.f32.mrf.mxu0
      %v1146 = vadd.f32 %v1073, %v1145
      %v1147 = vpop.f32.mrf.mxu0
      %1148 = vdwg.mxu0
      %s1149 = scalar_lea.vmem %s3, 16
      %v1150 = vld [vmem:[%s1149] sm:$0xff]
      %1151 = vrot.lane.b32.xlu0 %v994, 126
      %v1152 = vpop.permute.xlu0 %1151
      %v1155 = vsel %vm1002, %v1150, 0
      %1157 = vmatprep.subr.mxu0 0.0
      %1158 = vmatpush1.msra.mxu0 0.0
      %1159 = vmatprep.subr.mxu0 0.0
      %1160 = vmatpush1.msra.mxu0 0.0
      %1161 = vmatprep.subr.mxu0 0.0
      %1162 = vmatpush1.msra.mxu0 0.0
      %1163 = vmatprep.subr.mxu0 0.0
      %1164 = vmatpush1.msra.mxu0 0.0
      %1165 = vmatprep.subr.mxu0 0.0
      %1166 = vmatpush1.msra.mxu0 0.0
      %1167 = vmatprep.subr.mxu0 0.0
      %1168 = vmatpush1.msra.mxu0 0.0
      %1169 = vmatprep.subr.mxu0 0.0
      %1170 = vmatpush1.msra.mxu0 0.0
      %1171 = vmatprep.subr.mxu0 0.0
      %1172 = vmatpush1.msra.mxu0 0.0
      %1173 = vmatprep.subr.mxu0 0.0
      %1174 = vmatpush1.msra.mxu0 0.0
      %1175 = vmatprep.subr.mxu0 0.0
      %1176 = vmatpush1.msra.mxu0 0.0
      %1177 = vmatprep.subr.mxu0 0.0
      %1178 = vmatpush1.msra.mxu0 0.0
      %1179 = vmatprep.subr.mxu0 0.0
      %1180 = vmatpush1.msra.mxu0 0.0
      %1181 = vmatprep.subr.mxu0 0.0
      %1182 = vmatpush1.msra.mxu0 0.0
      %1183 = vmatprep.subr.mxu0 0.0
      %1184 = vmatpush1.msra.mxu0 0.0
      %1185 = vmatprep.subr.mxu0 0.0
      %1186 = vmatpush1.msra.mxu0 0.0
      %1187 = vmatprep.subr.mxu0 0.0
      %1188 = vmatpush1.msra.mxu0 %v1152
      %1189 = vmatprep.subr.mxu0 0.0
      %1190 = vmatpush2.msra.mxu0 0.0
      %1191 = vmatprep.subr.mxu0 0.0
      %1192 = vmatpush2.msra.mxu0 0.0
      %1193 = vmatprep.subr.mxu0 0.0
      %1194 = vmatpush2.msra.mxu0 0.0
      %1195 = vmatprep.subr.mxu0 0.0
      %1196 = vmatpush2.msra.mxu0 0.0
      %1197 = vmatprep.subr.mxu0 0.0
      %1198 = vmatpush2.msra.mxu0 0.0
      %1199 = vmatprep.subr.mxu0 0.0
      %1200 = vmatpush2.msra.mxu0 0.0
      %1201 = vmatprep.subr.mxu0 0.0
      %1202 = vmatpush2.msra.mxu0 0.0
      %1203 = vmatprep.subr.mxu0 0.0
      %1204 = vmatpush2.msra.mxu0 0.0
      %1205 = vmatprep.subr.mxu0 0.0
      %1206 = vmatpush2.msra.mxu0 0.0
      %1207 = vmatprep.subr.mxu0 0.0
      %1208 = vmatpush2.msra.mxu0 0.0
      %1209 = vmatprep.subr.mxu0 0.0
      %1210 = vmatpush2.msra.mxu0 0.0
      %1211 = vmatprep.subr.mxu0 0.0
      %1212 = vmatpush2.msra.mxu0 0.0
      %1213 = vmatprep.subr.mxu0 0.0
      %1214 = vmatpush2.msra.mxu0 0.0
      %1215 = vmatprep.subr.mxu0 0.0
      %1216 = vmatpush2.msra.mxu0 0.0
      %1217 = vmatprep.subr.mxu0 0.0
      %1218 = vmatpush2.msra.mxu0 0.0
      %1219 = vmatprep.subr.mxu0 0.0
      %1220 = vmatpush2.msra.mxu0 0.0
      %1221 = vmatprep.mubr.f32.mxu0 0.0
      %1222 = vmatmul.mubr.f32.gmra.mxu0 %v1155
      %v1223 = vpop.f32.mrf.mxu0
      %v1224 = vadd.f32 0.0, %v1223
      %v1225 = vpop.f32.mrf.mxu0
      %1226 = vdwg.mxu0
      %v1227 = vadd.f32 %v1146, %v1224
      %1229 = vset.pattern.permute.xlu0 0
      %1230 = vperm.xlu0 %1229, %v654
      %v1231 = vpop.permute.xlu0 %1230
      %v1233 = vadd.f32 %v1227, %v1231
      %v1234 = vmax.f32 %v1233, 0.0
      %vm1235 = vcmask 130048
      %v1236 = vsel %vm1235, %v737, 0.0
      %v1237 = vadd.f32 %v1234, %v1236
      %v1238 = vmax.f32 %v1237, 0.0
      %v1239 = vld [vmem:[%s8] sm:$0xff]
      %v1240 = vld [vmem:[%s10] sm:$0xff]
      %1242 = vrot.lane.b32.xlu0 %v1238, 4
      %v1243 = vpop.permute.xlu0 %1242
      %v1245 = vsel %vm662, 0.0, %v1243
      %vm1246 = vcmask 179200
      %v1247 = vsel %vm1246, %v1245, 0.0
      %v1248 = vld [vmem:[%s7] sm:$0xff]
      %s1249 = scalar_lea.vmem %s7, 8
      %v1250 = vld [vmem:[%s1249] sm:$0xff]
      %1252 = vrot.lane.b32.xlu0 %v1247, 126
      %v1253 = vpop.permute.xlu0 %1252
      %v1256 = vsel %vm1002, %v1250, 0
      %1258 = vmatprep.subr.mxu0 0.0
      %1259 = vmatpush1.msra.mxu0 0.0
      %1260 = vmatprep.subr.mxu0 0.0
      %1261 = vmatpush1.msra.mxu0 0.0
      %1262 = vmatprep.subr.mxu0 0.0
      %1263 = vmatpush1.msra.mxu0 0.0
      %1264 = vmatprep.subr.mxu0 0.0
      %1265 = vmatpush1.msra.mxu0 0.0
      %1266 = vmatprep.subr.mxu0 0.0
      %1267 = vmatpush1.msra.mxu0 0.0
      %1268 = vmatprep.subr.mxu0 0.0
      %1269 = vmatpush1.msra.mxu0 0.0
      %1270 = vmatprep.subr.mxu0 0.0
      %1271 = vmatpush1.msra.mxu0 0.0
      %1272 = vmatprep.subr.mxu0 0.0
      %1273 = vmatpush1.msra.mxu0 0.0
      %1274 = vmatprep.subr.mxu0 0.0
      %1275 = vmatpush1.msra.mxu0 0.0
      %1276 = vmatprep.subr.mxu0 0.0
      %1277 = vmatpush1.msra.mxu0 0.0
      %1278 = vmatprep.subr.mxu0 0.0
      %1279 = vmatpush1.msra.mxu0 0.0
      %1280 = vmatprep.subr.mxu0 0.0
      %1281 = vmatpush1.msra.mxu0 0.0
      %1282 = vmatprep.subr.mxu0 0.0
      %1283 = vmatpush1.msra.mxu0 0.0
      %1284 = vmatprep.subr.mxu0 0.0
      %1285 = vmatpush1.msra.mxu0 0.0
      %1286 = vmatprep.subr.mxu0 0.0
      %1287 = vmatpush1.msra.mxu0 0.0
      %1288 = vmatprep.subr.mxu0 0.0
      %1289 = vmatpush1.msra.mxu0 %v1253
      %1290 = vmatprep.subr.mxu0 0.0
      %1291 = vmatpush2.msra.mxu0 0.0
      %1292 = vmatprep.subr.mxu0 0.0
      %1293 = vmatpush2.msra.mxu0 0.0
      %1294 = vmatprep.subr.mxu0 0.0
      %1295 = vmatpush2.msra.mxu0 0.0
      %1296 = vmatprep.subr.mxu0 0.0
      %1297 = vmatpush2.msra.mxu0 0.0
      %1298 = vmatprep.subr.mxu0 0.0
      %1299 = vmatpush2.msra.mxu0 0.0
      %1300 = vmatprep.subr.mxu0 0.0
      %1301 = vmatpush2.msra.mxu0 0.0
      %1302 = vmatprep.subr.mxu0 0.0
      %1303 = vmatpush2.msra.mxu0 0.0
      %1304 = vmatprep.subr.mxu0 0.0
      %1305 = vmatpush2.msra.mxu0 0.0
      %1306 = vmatprep.subr.mxu0 0.0
      %1307 = vmatpush2.msra.mxu0 0.0
      %1308 = vmatprep.subr.mxu0 0.0
      %1309 = vmatpush2.msra.mxu0 0.0
      %1310 = vmatprep.subr.mxu0 0.0
      %1311 = vmatpush2.msra.mxu0 0.0
      %1312 = vmatprep.subr.mxu0 0.0
      %1313 = vmatpush2.msra.mxu0 0.0
      %1314 = vmatprep.subr.mxu0 0.0
      %1315 = vmatpush2.msra.mxu0 0.0
      %1316 = vmatprep.subr.mxu0 0.0
      %1317 = vmatpush2.msra.mxu0 0.0
      %1318 = vmatprep.subr.mxu0 0.0
      %1319 = vmatpush2.msra.mxu0 0.0
      %1320 = vmatprep.subr.mxu0 0.0
      %1321 = vmatpush2.msra.mxu0 0.0
      %1322 = vmatprep.mubr.f32.mxu0 0.0
      %1323 = vmatmul.mubr.f32.gmra.mxu0 %v1256
      %v1324 = vpop.f32.mrf.mxu0
      %v1325 = vadd.f32 0.0, %v1324
      %v1326 = vpop.f32.mrf.mxu0
      %1327 = vdwg.mxu0
      %v1329 = vsel %vm1002, %v1248, 0
      %1331 = vmatprep.subr.mxu0 0.0
      %1332 = vmatpush1.msra.mxu0 0.0
      %1333 = vmatprep.subr.mxu0 0.0
      %1334 = vmatpush1.msra.mxu0 0.0
      %1335 = vmatprep.subr.mxu0 0.0
      %1336 = vmatpush1.msra.mxu0 0.0
      %1337 = vmatprep.subr.mxu0 0.0
      %1338 = vmatpush1.msra.mxu0 0.0
      %1339 = vmatprep.subr.mxu0 0.0
      %1340 = vmatpush1.msra.mxu0 0.0
      %1341 = vmatprep.subr.mxu0 0.0
      %1342 = vmatpush1.msra.mxu0 0.0
      %1343 = vmatprep.subr.mxu0 0.0
      %1344 = vmatpush1.msra.mxu0 0.0
      %1345 = vmatprep.subr.mxu0 0.0
      %1346 = vmatpush1.msra.mxu0 0.0
      %1347 = vmatprep.subr.mxu0 0.0
      %1348 = vmatpush1.msra.mxu0 0.0
      %1349 = vmatprep.subr.mxu0 0.0
      %1350 = vmatpush1.msra.mxu0 0.0
      %1351 = vmatprep.subr.mxu0 0.0
      %1352 = vmatpush1.msra.mxu0 0.0
      %1353 = vmatprep.subr.mxu0 0.0
      %1354 = vmatpush1.msra.mxu0 0.0
      %1355 = vmatprep.subr.mxu0 0.0
      %1356 = vmatpush1.msra.mxu0 0.0
      %1357 = vmatprep.subr.mxu0 0.0
      %1358 = vmatpush1.msra.mxu0 0.0
      %1359 = vmatprep.subr.mxu0 0.0
      %1360 = vmatpush1.msra.mxu0 0.0
      %1361 = vmatprep.subr.mxu0 0.0
      %1362 = vmatpush1.msra.mxu0 %v1247
      %1363 = vmatprep.subr.mxu0 0.0
      %1364 = vmatpush2.msra.mxu0 0.0
      %1365 = vmatprep.subr.mxu0 0.0
      %1366 = vmatpush2.msra.mxu0 0.0
      %1367 = vmatprep.subr.mxu0 0.0
      %1368 = vmatpush2.msra.mxu0 0.0
      %1369 = vmatprep.subr.mxu0 0.0
      %1370 = vmatpush2.msra.mxu0 0.0
      %1371 = vmatprep.subr.mxu0 0.0
      %1372 = vmatpush2.msra.mxu0 0.0
      %1373 = vmatprep.subr.mxu0 0.0
      %1374 = vmatpush2.msra.mxu0 0.0
      %1375 = vmatprep.subr.mxu0 0.0
      %1376 = vmatpush2.msra.mxu0 0.0
      %1377 = vmatprep.subr.mxu0 0.0
      %1378 = vmatpush2.msra.mxu0 0.0
      %1379 = vmatprep.subr.mxu0 0.0
      %1380 = vmatpush2.msra.mxu0 0.0
      %1381 = vmatprep.subr.mxu0 0.0
      %1382 = vmatpush2.msra.mxu0 0.0
      %1383 = vmatprep.subr.mxu0 0.0
      %1384 = vmatpush2.msra.mxu0 0.0
      %1385 = vmatprep.subr.mxu0 0.0
      %1386 = vmatpush2.msra.mxu0 0.0
      %1387 = vmatprep.subr.mxu0 0.0
      %1388 = vmatpush2.msra.mxu0 0.0
      %1389 = vmatprep.subr.mxu0 0.0
      %1390 = vmatpush2.msra.mxu0 0.0
      %1391 = vmatprep.subr.mxu0 0.0
      %1392 = vmatpush2.msra.mxu0 0.0
      %1393 = vmatprep.subr.mxu0 0.0
      %1394 = vmatpush2.msra.mxu0 0.0
      %1395 = vmatprep.mubr.f32.mxu0 0.0
      %1396 = vmatmul.mubr.f32.gmra.mxu0 %v1329
      %v1397 = vpop.f32.mrf.mxu0
      %v1398 = vadd.f32 %v1325, %v1397
      %v1399 = vpop.f32.mrf.mxu0
      %1400 = vdwg.mxu0
      %s1401 = scalar_lea.vmem %s7, 16
      %v1402 = vld [vmem:[%s1401] sm:$0xff]
      %1403 = vrot.lane.b32.xlu0 %v1247, 124
      %v1404 = vpop.permute.xlu0 %1403
      %v1407 = vsel %vm1002, %v1402, 0
      %1409 = vmatprep.subr.mxu0 0.0
      %1410 = vmatpush1.msra.mxu0 0.0
      %1411 = vmatprep.subr.mxu0 0.0
      %1412 = vmatpush1.msra.mxu0 0.0
      %1413 = vmatprep.subr.mxu0 0.0
      %1414 = vmatpush1.msra.mxu0 0.0
      %1415 = vmatprep.subr.mxu0 0.0
      %1416 = vmatpush1.msra.mxu0 0.0
      %1417 = vmatprep.subr.mxu0 0.0
      %1418 = vmatpush1.msra.mxu0 0.0
      %1419 = vmatprep.subr.mxu0 0.0
      %1420 = vmatpush1.msra.mxu0 0.0
      %1421 = vmatprep.subr.mxu0 0.0
      %1422 = vmatpush1.msra.mxu0 0.0
      %1423 = vmatprep.subr.mxu0 0.0
      %1424 = vmatpush1.msra.mxu0 0.0
      %1425 = vmatprep.subr.mxu0 0.0
      %1426 = vmatpush1.msra.mxu0 0.0
      %1427 = vmatprep.subr.mxu0 0.0
      %1428 = vmatpush1.msra.mxu0 0.0
      %1429 = vmatprep.subr.mxu0 0.0
      %1430 = vmatpush1.msra.mxu0 0.0
      %1431 = vmatprep.subr.mxu0 0.0
      %1432 = vmatpush1.msra.mxu0 0.0
      %1433 = vmatprep.subr.mxu0 0.0
      %1434 = vmatpush1.msra.mxu0 0.0
      %1435 = vmatprep.subr.mxu0 0.0
      %1436 = vmatpush1.msra.mxu0 0.0
      %1437 = vmatprep.subr.mxu0 0.0
      %1438 = vmatpush1.msra.mxu0 0.0
      %1439 = vmatprep.subr.mxu0 0.0
      %1440 = vmatpush1.msra.mxu0 %v1404
      %1441 = vmatprep.subr.mxu0 0.0
      %1442 = vmatpush2.msra.mxu0 0.0
      %1443 = vmatprep.subr.mxu0 0.0
      %1444 = vmatpush2.msra.mxu0 0.0
      %1445 = vmatprep.subr.mxu0 0.0
      %1446 = vmatpush2.msra.mxu0 0.0
      %1447 = vmatprep.subr.mxu0 0.0
      %1448 = vmatpush2.msra.mxu0 0.0
      %1449 = vmatprep.subr.mxu0 0.0
      %1450 = vmatpush2.msra.mxu0 0.0
      %1451 = vmatprep.subr.mxu0 0.0
      %1452 = vmatpush2.msra.mxu0 0.0
      %1453 = vmatprep.subr.mxu0 0.0
      %1454 = vmatpush2.msra.mxu0 0.0
      %1455 = vmatprep.subr.mxu0 0.0
      %1456 = vmatpush2.msra.mxu0 0.0
      %1457 = vmatprep.subr.mxu0 0.0
      %1458 = vmatpush2.msra.mxu0 0.0
      %1459 = vmatprep.subr.mxu0 0.0
      %1460 = vmatpush2.msra.mxu0 0.0
      %1461 = vmatprep.subr.mxu0 0.0
      %1462 = vmatpush2.msra.mxu0 0.0
      %1463 = vmatprep.subr.mxu0 0.0
      %1464 = vmatpush2.msra.mxu0 0.0
      %1465 = vmatprep.subr.mxu0 0.0
      %1466 = vmatpush2.msra.mxu0 0.0
      %1467 = vmatprep.subr.mxu0 0.0
      %1468 = vmatpush2.msra.mxu0 0.0
      %1469 = vmatprep.subr.mxu0 0.0
      %1470 = vmatpush2.msra.mxu0 0.0
      %1471 = vmatprep.subr.mxu0 0.0
      %1472 = vmatpush2.msra.mxu0 0.0
      %1473 = vmatprep.mubr.f32.mxu0 0.0
      %1474 = vmatmul.mubr.f32.gmra.mxu0 %v1407
      %v1475 = vpop.f32.mrf.mxu0
      %v1476 = vadd.f32 0.0, %v1475
      %v1477 = vpop.f32.mrf.mxu0
      %1478 = vdwg.mxu0
      %v1479 = vadd.f32 %v1398, %v1476
      %1481 = vset.pattern.permute.xlu0 0
      %1482 = vperm.xlu0 %1481, %v1239
      %v1483 = vpop.permute.xlu0 %1482
      %v1485 = vadd.f32 %v1479, %v1483
      %v1486 = vmax.f32 %v1485, 0.0
      %1488 = vrot.lane.b32.xlu0 %v1486, 4
      %v1489 = vpop.permute.xlu0 %1488
      %v1491 = vsel %vm662, 0.0, %v1489
      %v1492 = vld [vmem:[%s9] sm:$0xff]
      %s1493 = scalar_lea.vmem %s9, 8
      %v1494 = vld [vmem:[%s1493] sm:$0xff]
      %1496 = vrot.lane.b32.xlu0 %v1491, 126
      %v1497 = vpop.permute.xlu0 %1496
      %v1500 = vsel %vm1002, %v1494, 0
      %1502 = vmatprep.subr.mxu0 0.0
      %1503 = vmatpush1.msra.mxu0 0.0
      %1504 = vmatprep.subr.mxu0 0.0
      %1505 = vmatpush1.msra.mxu0 0.0
      %1506 = vmatprep.subr.mxu0 0.0
      %1507 = vmatpush1.msra.mxu0 0.0
      %1508 = vmatprep.subr.mxu0 0.0
      %1509 = vmatpush1.msra.mxu0 0.0
      %1510 = vmatprep.subr.mxu0 0.0
      %1511 = vmatpush1.msra.mxu0 0.0
      %1512 = vmatprep.subr.mxu0 0.0
      %1513 = vmatpush1.msra.mxu0 0.0
      %1514 = vmatprep.subr.mxu0 0.0
      %1515 = vmatpush1.msra.mxu0 0.0
      %1516 = vmatprep.subr.mxu0 0.0
      %1517 = vmatpush1.msra.mxu0 0.0
      %1518 = vmatprep.subr.mxu0 0.0
      %1519 = vmatpush1.msra.mxu0 0.0
      %1520 = vmatprep.subr.mxu0 0.0
      %1521 = vmatpush1.msra.mxu0 0.0
      %1522 = vmatprep.subr.mxu0 0.0
      %1523 = vmatpush1.msra.mxu0 0.0
      %1524 = vmatprep.subr.mxu0 0.0
      %1525 = vmatpush1.msra.mxu0 0.0
      %1526 = vmatprep.subr.mxu0 0.0
      %1527 = vmatpush1.msra.mxu0 0.0
      %1528 = vmatprep.subr.mxu0 0.0
      %1529 = vmatpush1.msra.mxu0 0.0
      %1530 = vmatprep.subr.mxu0 0.0
      %1531 = vmatpush1.msra.mxu0 0.0
      %1532 = vmatprep.subr.mxu0 0.0
      %1533 = vmatpush1.msra.mxu0 %v1497
      %1534 = vmatprep.subr.mxu0 0.0
      %1535 = vmatpush2.msra.mxu0 0.0
      %1536 = vmatprep.subr.mxu0 0.0
      %1537 = vmatpush2.msra.mxu0 0.0
      %1538 = vmatprep.subr.mxu0 0.0
      %1539 = vmatpush2.msra.mxu0 0.0
      %1540 = vmatprep.subr.mxu0 0.0
      %1541 = vmatpush2.msra.mxu0 0.0
      %1542 = vmatprep.subr.mxu0 0.0
      %1543 = vmatpush2.msra.mxu0 0.0
      %1544 = vmatprep.subr.mxu0 0.0
      %1545 = vmatpush2.msra.mxu0 0.0
      %1546 = vmatprep.subr.mxu0 0.0
      %1547 = vmatpush2.msra.mxu0 0.0
      %1548 = vmatprep.subr.mxu0 0.0
      %1549 = vmatpush2.msra.mxu0 0.0
      %1550 = vmatprep.subr.mxu0 0.0
      %1551 = vmatpush2.msra.mxu0 0.0
      %1552 = vmatprep.subr.mxu0 0.0
      %1553 = vmatpush2.msra.mxu0 0.0
      %1554 = vmatprep.subr.mxu0 0.0
      %1555 = vmatpush2.msra.mxu0 0.0
      %1556 = vmatprep.subr.mxu0 0.0
      %1557 = vmatpush2.msra.mxu0 0.0
      %1558 = vmatprep.subr.mxu0 0.0
      %1559 = vmatpush2.msra.mxu0 0.0
      %1560 = vmatprep.subr.mxu0 0.0
      %1561 = vmatpush2.msra.mxu0 0.0
      %1562 = vmatprep.subr.mxu0 0.0
      %1563 = vmatpush2.msra.mxu0 0.0
      %1564 = vmatprep.subr.mxu0 0.0
      %1565 = vmatpush2.msra.mxu0 0.0
      %1566 = vmatprep.mubr.f32.mxu0 0.0
      %1567 = vmatmul.mubr.f32.gmra.mxu0 %v1500
      %v1568 = vpop.f32.mrf.mxu0
      %v1569 = vadd.f32 0.0, %v1568
      %v1570 = vpop.f32.mrf.mxu0
      %1571 = vdwg.mxu0
      %v1573 = vsel %vm1002, %v1492, 0
      %1575 = vmatprep.subr.mxu0 0.0
      %1576 = vmatpush1.msra.mxu0 0.0
      %1577 = vmatprep.subr.mxu0 0.0
      %1578 = vmatpush1.msra.mxu0 0.0
      %1579 = vmatprep.subr.mxu0 0.0
      %1580 = vmatpush1.msra.mxu0 0.0
      %1581 = vmatprep.subr.mxu0 0.0
      %1582 = vmatpush1.msra.mxu0 0.0
      %1583 = vmatprep.subr.mxu0 0.0
      %1584 = vmatpush1.msra.mxu0 0.0
      %1585 = vmatprep.subr.mxu0 0.0
      %1586 = vmatpush1.msra.mxu0 0.0
      %1587 = vmatprep.subr.mxu0 0.0
      %1588 = vmatpush1.msra.mxu0 0.0
      %1589 = vmatprep.subr.mxu0 0.0
      %1590 = vmatpush1.msra.mxu0 0.0
      %1591 = vmatprep.subr.mxu0 0.0
      %1592 = vmatpush1.msra.mxu0 0.0
      %1593 = vmatprep.subr.mxu0 0.0
      %1594 = vmatpush1.msra.mxu0 0.0
      %1595 = vmatprep.subr.mxu0 0.0
      %1596 = vmatpush1.msra.mxu0 0.0
      %1597 = vmatprep.subr.mxu0 0.0
      %1598 = vmatpush1.msra.mxu0 0.0
      %1599 = vmatprep.subr.mxu0 0.0
      %1600 = vmatpush1.msra.mxu0 0.0
      %1601 = vmatprep.subr.mxu0 0.0
      %1602 = vmatpush1.msra.mxu0 0.0
      %1603 = vmatprep.subr.mxu0 0.0
      %1604 = vmatpush1.msra.mxu0 0.0
      %1605 = vmatprep.subr.mxu0 0.0
      %1606 = vmatpush1.msra.mxu0 %v1491
      %1607 = vmatprep.subr.mxu0 0.0
      %1608 = vmatpush2.msra.mxu0 0.0
      %1609 = vmatprep.subr.mxu0 0.0
      %1610 = vmatpush2.msra.mxu0 0.0
      %1611 = vmatprep.subr.mxu0 0.0
      %1612 = vmatpush2.msra.mxu0 0.0
      %1613 = vmatprep.subr.mxu0 0.0
      %1614 = vmatpush2.msra.mxu0 0.0
      %1615 = vmatprep.subr.mxu0 0.0
      %1616 = vmatpush2.msra.mxu0 0.0
      %1617 = vmatprep.subr.mxu0 0.0
      %1618 = vmatpush2.msra.mxu0 0.0
      %1619 = vmatprep.subr.mxu0 0.0
      %1620 = vmatpush2.msra.mxu0 0.0
      %1621 = vmatprep.subr.mxu0 0.0
      %1622 = vmatpush2.msra.mxu0 0.0
      %1623 = vmatprep.subr.mxu0 0.0
      %1624 = vmatpush2.msra.mxu0 0.0
      %1625 = vmatprep.subr.mxu0 0.0
      %1626 = vmatpush2.msra.mxu0 0.0
      %1627 = vmatprep.subr.mxu0 0.0
      %1628 = vmatpush2.msra.mxu0 0.0
      %1629 = vmatprep.subr.mxu0 0.0
      %1630 = vmatpush2.msra.mxu0 0.0
      %1631 = vmatprep.subr.mxu0 0.0
      %1632 = vmatpush2.msra.mxu0 0.0
      %1633 = vmatprep.subr.mxu0 0.0
      %1634 = vmatpush2.msra.mxu0 0.0
      %1635 = vmatprep.subr.mxu0 0.0
      %1636 = vmatpush2.msra.mxu0 0.0
      %1637 = vmatprep.subr.mxu0 0.0
      %1638 = vmatpush2.msra.mxu0 0.0
      %1639 = vmatprep.mubr.f32.mxu0 0.0
      %1640 = vmatmul.mubr.f32.gmra.mxu0 %v1573
      %v1641 = vpop.f32.mrf.mxu0
      %v1642 = vadd.f32 %v1569, %v1641
      %v1643 = vpop.f32.mrf.mxu0
      %1644 = vdwg.mxu0
      %s1645 = scalar_lea.vmem %s9, 16
      %v1646 = vld [vmem:[%s1645] sm:$0xff]
      %1647 = vrot.lane.b32.xlu0 %v1491, 124
      %v1648 = vpop.permute.xlu0 %1647
      %v1651 = vsel %vm1002, %v1646, 0
      %1653 = vmatprep.subr.mxu0 0.0
      %1654 = vmatpush1.msra.mxu0 0.0
      %1655 = vmatprep.subr.mxu0 0.0
      %1656 = vmatpush1.msra.mxu0 0.0
      %1657 = vmatprep.subr.mxu0 0.0
      %1658 = vmatpush1.msra.mxu0 0.0
      %1659 = vmatprep.subr.mxu0 0.0
      %1660 = vmatpush1.msra.mxu0 0.0
      %1661 = vmatprep.subr.mxu0 0.0
      %1662 = vmatpush1.msra.mxu0 0.0
      %1663 = vmatprep.subr.mxu0 0.0
      %1664 = vmatpush1.msra.mxu0 0.0
      %1665 = vmatprep.subr.mxu0 0.0
      %1666 = vmatpush1.msra.mxu0 0.0
      %1667 = vmatprep.subr.mxu0 0.0
      %1668 = vmatpush1.msra.mxu0 0.0
      %1669 = vmatprep.subr.mxu0 0.0
      %1670 = vmatpush1.msra.mxu0 0.0
      %1671 = vmatprep.subr.mxu0 0.0
      %1672 = vmatpush1.msra.mxu0 0.0
      %1673 = vmatprep.subr.mxu0 0.0
      %1674 = vmatpush1.msra.mxu0 0.0
      %1675 = vmatprep.subr.mxu0 0.0
      %1676 = vmatpush1.msra.mxu0 0.0
      %1677 = vmatprep.subr.mxu0 0.0
      %1678 = vmatpush1.msra.mxu0 0.0
      %1679 = vmatprep.subr.mxu0 0.0
      %1680 = vmatpush1.msra.mxu0 0.0
      %1681 = vmatprep.subr.mxu0 0.0
      %1682 = vmatpush1.msra.mxu0 0.0
      %1683 = vmatprep.subr.mxu0 0.0
      %1684 = vmatpush1.msra.mxu0 %v1648
      %1685 = vmatprep.subr.mxu0 0.0
      %1686 = vmatpush2.msra.mxu0 0.0
      %1687 = vmatprep.subr.mxu0 0.0
      %1688 = vmatpush2.msra.mxu0 0.0
      %1689 = vmatprep.subr.mxu0 0.0
      %1690 = vmatpush2.msra.mxu0 0.0
      %1691 = vmatprep.subr.mxu0 0.0
      %1692 = vmatpush2.msra.mxu0 0.0
      %1693 = vmatprep.subr.mxu0 0.0
      %1694 = vmatpush2.msra.mxu0 0.0
      %1695 = vmatprep.subr.mxu0 0.0
      %1696 = vmatpush2.msra.mxu0 0.0
      %1697 = vmatprep.subr.mxu0 0.0
      %1698 = vmatpush2.msra.mxu0 0.0
      %1699 = vmatprep.subr.mxu0 0.0
      %1700 = vmatpush2.msra.mxu0 0.0
      %1701 = vmatprep.subr.mxu0 0.0
      %1702 = vmatpush2.msra.mxu0 0.0
      %1703 = vmatprep.subr.mxu0 0.0
      %1704 = vmatpush2.msra.mxu0 0.0
      %1705 = vmatprep.subr.mxu0 0.0
      %1706 = vmatpush2.msra.mxu0 0.0
      %1707 = vmatprep.subr.mxu0 0.0
      %1708 = vmatpush2.msra.mxu0 0.0
      %1709 = vmatprep.subr.mxu0 0.0
      %1710 = vmatpush2.msra.mxu0 0.0
      %1711 = vmatprep.subr.mxu0 0.0
      %1712 = vmatpush2.msra.mxu0 0.0
      %1713 = vmatprep.subr.mxu0 0.0
      %1714 = vmatpush2.msra.mxu0 0.0
      %1715 = vmatprep.subr.mxu0 0.0
      %1716 = vmatpush2.msra.mxu0 0.0
      %1717 = vmatprep.mubr.f32.mxu0 0.0
      %1718 = vmatmul.mubr.f32.gmra.mxu0 %v1651
      %v1719 = vpop.f32.mrf.mxu0
      %v1720 = vadd.f32 0.0, %v1719
      %v1721 = vpop.f32.mrf.mxu0
      %1722 = vdwg.mxu0
      %v1723 = vadd.f32 %v1642, %v1720
      %1725 = vset.pattern.permute.xlu0 0
      %1726 = vperm.xlu0 %1725, %v1240
      %v1727 = vpop.permute.xlu0 %1726
      %v1729 = vadd.f32 %v1723, %v1727
      %v1730 = vmax.f32 %v1729, 0.0
      %v1731 = vsel %vm745, %v1238, 0.0
      %v1732 = vadd.f32 %v1730, %v1731
      %v1733 = vmax.f32 %v1732, 0.0
      %v1734 = vld [vmem:[%s12] sm:$0xff]
      %v1735 = vld [vmem:[%s14] sm:$0xff]
      %1737 = vrot.lane.b32.xlu0 %v1733, 8
      %v1738 = vpop.permute.xlu0 %1737
      %v1740 = vsel %vm1002, 0.0, %v1738
      %vm1741 = vcmask 244736
      %v1742 = vsel %vm1741, %v1740, 0.0
      %v1743 = vld [vmem:[%s11] sm:$0xff]
      %s1744 = scalar_lea.vmem %s11, 8
      %v1745 = vld [vmem:[%s1744] sm:$0xff]
      %1747 = vrot.lane.b32.xlu0 %v1742, 124
      %v1748 = vpop.permute.xlu0 %1747
      %v1751 = vsel %vm1002, %v1745, 0
      %1753 = vmatprep.subr.mxu0 0.0
      %1754 = vmatpush1.msra.mxu0 0.0
      %1755 = vmatprep.subr.mxu0 0.0
      %1756 = vmatpush1.msra.mxu0 0.0
      %1757 = vmatprep.subr.mxu0 0.0
      %1758 = vmatpush1.msra.mxu0 0.0
      %1759 = vmatprep.subr.mxu0 0.0
      %1760 = vmatpush1.msra.mxu0 0.0
      %1761 = vmatprep.subr.mxu0 0.0
      %1762 = vmatpush1.msra.mxu0 0.0
      %1763 = vmatprep.subr.mxu0 0.0
      %1764 = vmatpush1.msra.mxu0 0.0
      %1765 = vmatprep.subr.mxu0 0.0
      %1766 = vmatpush1.msra.mxu0 0.0
      %1767 = vmatprep.subr.mxu0 0.0
      %1768 = vmatpush1.msra.mxu0 0.0
      %1769 = vmatprep.subr.mxu0 0.0
      %1770 = vmatpush1.msra.mxu0 0.0
      %1771 = vmatprep.subr.mxu0 0.0
      %1772 = vmatpush1.msra.mxu0 0.0
      %1773 = vmatprep.subr.mxu0 0.0
      %1774 = vmatpush1.msra.mxu0 0.0
      %1775 = vmatprep.subr.mxu0 0.0
      %1776 = vmatpush1.msra.mxu0 0.0
      %1777 = vmatprep.subr.mxu0 0.0
      %1778 = vmatpush1.msra.mxu0 0.0
      %1779 = vmatprep.subr.mxu0 0.0
      %1780 = vmatpush1.msra.mxu0 0.0
      %1781 = vmatprep.subr.mxu0 0.0
      %1782 = vmatpush1.msra.mxu0 0.0
      %1783 = vmatprep.subr.mxu0 0.0
      %1784 = vmatpush1.msra.mxu0 %v1748
      %1785 = vmatprep.subr.mxu0 0.0
      %1786 = vmatpush2.msra.mxu0 0.0
      %1787 = vmatprep.subr.mxu0 0.0
      %1788 = vmatpush2.msra.mxu0 0.0
      %1789 = vmatprep.subr.mxu0 0.0
      %1790 = vmatpush2.msra.mxu0 0.0
      %1791 = vmatprep.subr.mxu0 0.0
      %1792 = vmatpush2.msra.mxu0 0.0
      %1793 = vmatprep.subr.mxu0 0.0
      %1794 = vmatpush2.msra.mxu0 0.0
      %1795 = vmatprep.subr.mxu0 0.0
      %1796 = vmatpush2.msra.mxu0 0.0
      %1797 = vmatprep.subr.mxu0 0.0
      %1798 = vmatpush2.msra.mxu0 0.0
      %1799 = vmatprep.subr.mxu0 0.0
      %1800 = vmatpush2.msra.mxu0 0.0
      %1801 = vmatprep.subr.mxu0 0.0
      %1802 = vmatpush2.msra.mxu0 0.0
      %1803 = vmatprep.subr.mxu0 0.0
      %1804 = vmatpush2.msra.mxu0 0.0
      %1805 = vmatprep.subr.mxu0 0.0
      %1806 = vmatpush2.msra.mxu0 0.0
      %1807 = vmatprep.subr.mxu0 0.0
      %1808 = vmatpush2.msra.mxu0 0.0
      %1809 = vmatprep.subr.mxu0 0.0
      %1810 = vmatpush2.msra.mxu0 0.0
      %1811 = vmatprep.subr.mxu0 0.0
      %1812 = vmatpush2.msra.mxu0 0.0
      %1813 = vmatprep.subr.mxu0 0.0
      %1814 = vmatpush2.msra.mxu0 0.0
      %1815 = vmatprep.subr.mxu0 0.0
      %1816 = vmatpush2.msra.mxu0 0.0
      %1817 = vmatprep.mubr.f32.mxu0 0.0
      %1818 = vmatmul.mubr.f32.gmra.mxu0 %v1751
      %v1819 = vpop.f32.mrf.mxu0
      %v1820 = vadd.f32 0.0, %v1819
      %v1821 = vpop.f32.mrf.mxu0
      %1822 = vdwg.mxu0
      %v1824 = vsel %vm1002, %v1743, 0
      %1826 = vmatprep.subr.mxu0 0.0
      %1827 = vmatpush1.msra.mxu0 0.0
      %1828 = vmatprep.subr.mxu0 0.0
      %1829 = vmatpush1.msra.mxu0 0.0
      %1830 = vmatprep.subr.mxu0 0.0
      %1831 = vmatpush1.msra.mxu0 0.0
      %1832 = vmatprep.subr.mxu0 0.0
      %1833 = vmatpush1.msra.mxu0 0.0
      %1834 = vmatprep.subr.mxu0 0.0
      %1835 = vmatpush1.msra.mxu0 0.0
      %1836 = vmatprep.subr.mxu0 0.0
      %1837 = vmatpush1.msra.mxu0 0.0
      %1838 = vmatprep.subr.mxu0 0.0
      %1839 = vmatpush1.msra.mxu0 0.0
      %1840 = vmatprep.subr.mxu0 0.0
      %1841 = vmatpush1.msra.mxu0 0.0
      %1842 = vmatprep.subr.mxu0 0.0
      %1843 = vmatpush1.msra.mxu0 0.0
      %1844 = vmatprep.subr.mxu0 0.0
      %1845 = vmatpush1.msra.mxu0 0.0
      %1846 = vmatprep.subr.mxu0 0.0
      %1847 = vmatpush1.msra.mxu0 0.0
      %1848 = vmatprep.subr.mxu0 0.0
      %1849 = vmatpush1.msra.mxu0 0.0
      %1850 = vmatprep.subr.mxu0 0.0
      %1851 = vmatpush1.msra.mxu0 0.0
      %1852 = vmatprep.subr.mxu0 0.0
      %1853 = vmatpush1.msra.mxu0 0.0
      %1854 = vmatprep.subr.mxu0 0.0
      %1855 = vmatpush1.msra.mxu0 0.0
      %1856 = vmatprep.subr.mxu0 0.0
      %1857 = vmatpush1.msra.mxu0 %v1742
      %1858 = vmatprep.subr.mxu0 0.0
      %1859 = vmatpush2.msra.mxu0 0.0
      %1860 = vmatprep.subr.mxu0 0.0
      %1861 = vmatpush2.msra.mxu0 0.0
      %1862 = vmatprep.subr.mxu0 0.0
      %1863 = vmatpush2.msra.mxu0 0.0
      %1864 = vmatprep.subr.mxu0 0.0
      %1865 = vmatpush2.msra.mxu0 0.0
      %1866 = vmatprep.subr.mxu0 0.0
      %1867 = vmatpush2.msra.mxu0 0.0
      %1868 = vmatprep.subr.mxu0 0.0
      %1869 = vmatpush2.msra.mxu0 0.0
      %1870 = vmatprep.subr.mxu0 0.0
      %1871 = vmatpush2.msra.mxu0 0.0
      %1872 = vmatprep.subr.mxu0 0.0
      %1873 = vmatpush2.msra.mxu0 0.0
      %1874 = vmatprep.subr.mxu0 0.0
      %1875 = vmatpush2.msra.mxu0 0.0
      %1876 = vmatprep.subr.mxu0 0.0
      %1877 = vmatpush2.msra.mxu0 0.0
      %1878 = vmatprep.subr.mxu0 0.0
      %1879 = vmatpush2.msra.mxu0 0.0
      %1880 = vmatprep.subr.mxu0 0.0
      %1881 = vmatpush2.msra.mxu0 0.0
      %1882 = vmatprep.subr.mxu0 0.0
      %1883 = vmatpush2.msra.mxu0 0.0
      %1884 = vmatprep.subr.mxu0 0.0
      %1885 = vmatpush2.msra.mxu0 0.0
      %1886 = vmatprep.subr.mxu0 0.0
      %1887 = vmatpush2.msra.mxu0 0.0
      %1888 = vmatprep.subr.mxu0 0.0
      %1889 = vmatpush2.msra.mxu0 0.0
      %1890 = vmatprep.mubr.f32.mxu0 0.0
      %1891 = vmatmul.mubr.f32.gmra.mxu0 %v1824
      %v1892 = vpop.f32.mrf.mxu0
      %v1893 = vadd.f32 %v1820, %v1892
      %v1894 = vpop.f32.mrf.mxu0
      %1895 = vdwg.mxu0
      %s1896 = scalar_lea.vmem %s11, 16
      %v1897 = vld [vmem:[%s1896] sm:$0xff]
      %1898 = vrot.lane.b32.xlu0 %v1742, 120
      %v1899 = vpop.permute.xlu0 %1898
      %v1902 = vsel %vm1002, %v1897, 0
      %1904 = vmatprep.subr.mxu0 0.0
      %1905 = vmatpush1.msra.mxu0 0.0
      %1906 = vmatprep.subr.mxu0 0.0
      %1907 = vmatpush1.msra.mxu0 0.0
      %1908 = vmatprep.subr.mxu0 0.0
      %1909 = vmatpush1.msra.mxu0 0.0
      %1910 = vmatprep.subr.mxu0 0.0
      %1911 = vmatpush1.msra.mxu0 0.0
      %1912 = vmatprep.subr.mxu0 0.0
      %1913 = vmatpush1.msra.mxu0 0.0
      %1914 = vmatprep.subr.mxu0 0.0
      %1915 = vmatpush1.msra.mxu0 0.0
      %1916 = vmatprep.subr.mxu0 0.0
      %1917 = vmatpush1.msra.mxu0 0.0
      %1918 = vmatprep.subr.mxu0 0.0
      %1919 = vmatpush1.msra.mxu0 0.0
      %1920 = vmatprep.subr.mxu0 0.0
      %1921 = vmatpush1.msra.mxu0 0.0
      %1922 = vmatprep.subr.mxu0 0.0
      %1923 = vmatpush1.msra.mxu0 0.0
      %1924 = vmatprep.subr.mxu0 0.0
      %1925 = vmatpush1.msra.mxu0 0.0
      %1926 = vmatprep.subr.mxu0 0.0
      %1927 = vmatpush1.msra.mxu0 0.0
      %1928 = vmatprep.subr.mxu0 0.0
      %1929 = vmatpush1.msra.mxu0 0.0
      %1930 = vmatprep.subr.mxu0 0.0
      %1931 = vmatpush1.msra.mxu0 0.0
      %1932 = vmatprep.subr.mxu0 0.0
      %1933 = vmatpush1.msra.mxu0 0.0
      %1934 = vmatprep.subr.mxu0 0.0
      %1935 = vmatpush1.msra.mxu0 %v1899
      %1936 = vmatprep.subr.mxu0 0.0
      %1937 = vmatpush2.msra.mxu0 0.0
      %1938 = vmatprep.subr.mxu0 0.0
      %1939 = vmatpush2.msra.mxu0 0.0
      %1940 = vmatprep.subr.mxu0 0.0
      %1941 = vmatpush2.msra.mxu0 0.0
      %1942 = vmatprep.subr.mxu0 0.0
      %1943 = vmatpush2.msra.mxu0 0.0
      %1944 = vmatprep.subr.mxu0 0.0
      %1945 = vmatpush2.msra.mxu0 0.0
      %1946 = vmatprep.subr.mxu0 0.0
      %1947 = vmatpush2.msra.mxu0 0.0
      %1948 = vmatprep.subr.mxu0 0.0
      %1949 = vmatpush2.msra.mxu0 0.0
      %1950 = vmatprep.subr.mxu0 0.0
      %1951 = vmatpush2.msra.mxu0 0.0
      %1952 = vmatprep.subr.mxu0 0.0
      %1953 = vmatpush2.msra.mxu0 0.0
      %1954 = vmatprep.subr.mxu0 0.0
      %1955 = vmatpush2.msra.mxu0 0.0
      %1956 = vmatprep.subr.mxu0 0.0
      %1957 = vmatpush2.msra.mxu0 0.0
      %1958 = vmatprep.subr.mxu0 0.0
      %1959 = vmatpush2.msra.mxu0 0.0
      %1960 = vmatprep.subr.mxu0 0.0
      %1961 = vmatpush2.msra.mxu0 0.0
      %1962 = vmatprep.subr.mxu0 0.0
      %1963 = vmatpush2.msra.mxu0 0.0
      %1964 = vmatprep.subr.mxu0 0.0
      %1965 = vmatpush2.msra.mxu0 0.0
      %1966 = vmatprep.subr.mxu0 0.0
      %1967 = vmatpush2.msra.mxu0 0.0
      %1968 = vmatprep.mubr.f32.mxu0 0.0
      %1969 = vmatmul.mubr.f32.gmra.mxu0 %v1902
      %v1970 = vpop.f32.mrf.mxu0
      %v1971 = vadd.f32 0.0, %v1970
      %v1972 = vpop.f32.mrf.mxu0
      %1973 = vdwg.mxu0
      %v1974 = vadd.f32 %v1893, %v1971
      %1976 = vset.pattern.permute.xlu0 0
      %1977 = vperm.xlu0 %1976, %v1734
      %v1978 = vpop.permute.xlu0 %1977
      %v1980 = vadd.f32 %v1974, %v1978
      %v1981 = vmax.f32 %v1980, 0.0
      %1983 = vrot.lane.b32.xlu0 %v1981, 8
      %v1984 = vpop.permute.xlu0 %1983
      %v1986 = vsel %vm1002, 0.0, %v1984
      %v1987 = vld [vmem:[%s13] sm:$0xff]
      %s1988 = scalar_lea.vmem %s13, 8
      %v1989 = vld [vmem:[%s1988] sm:$0xff]
      %1991 = vrot.lane.b32.xlu0 %v1986, 124
      %v1992 = vpop.permute.xlu0 %1991
      %v1995 = vsel %vm1002, %v1989, 0
      %1997 = vmatprep.subr.mxu0 0.0
      %1998 = vmatpush1.msra.mxu0 0.0
      %1999 = vmatprep.subr.mxu0 0.0
      %2000 = vmatpush1.msra.mxu0 0.0
      %2001 = vmatprep.subr.mxu0 0.0
      %2002 = vmatpush1.msra.mxu0 0.0
      %2003 = vmatprep.subr.mxu0 0.0
      %2004 = vmatpush1.msra.mxu0 0.0
      %2005 = vmatprep.subr.mxu0 0.0
      %2006 = vmatpush1.msra.mxu0 0.0
      %2007 = vmatprep.subr.mxu0 0.0
      %2008 = vmatpush1.msra.mxu0 0.0
      %2009 = vmatprep.subr.mxu0 0.0
      %2010 = vmatpush1.msra.mxu0 0.0
      %2011 = vmatprep.subr.mxu0 0.0
      %2012 = vmatpush1.msra.mxu0 0.0
      %2013 = vmatprep.subr.mxu0 0.0
      %2014 = vmatpush1.msra.mxu0 0.0
      %2015 = vmatprep.subr.mxu0 0.0
      %2016 = vmatpush1.msra.mxu0 0.0
      %2017 = vmatprep.subr.mxu0 0.0
      %2018 = vmatpush1.msra.mxu0 0.0
      %2019 = vmatprep.subr.mxu0 0.0
      %2020 = vmatpush1.msra.mxu0 0.0
      %2021 = vmatprep.subr.mxu0 0.0
      %2022 = vmatpush1.msra.mxu0 0.0
      %2023 = vmatprep.subr.mxu0 0.0
      %2024 = vmatpush1.msra.mxu0 0.0
      %2025 = vmatprep.subr.mxu0 0.0
      %2026 = vmatpush1.msra.mxu0 0.0
      %2027 = vmatprep.subr.mxu0 0.0
      %2028 = vmatpush1.msra.mxu0 %v1992
      %2029 = vmatprep.subr.mxu0 0.0
      %2030 = vmatpush2.msra.mxu0 0.0
      %2031 = vmatprep.subr.mxu0 0.0
      %2032 = vmatpush2.msra.mxu0 0.0
      %2033 = vmatprep.subr.mxu0 0.0
      %2034 = vmatpush2.msra.mxu0 0.0
      %2035 = vmatprep.subr.mxu0 0.0
      %2036 = vmatpush2.msra.mxu0 0.0
      %2037 = vmatprep.subr.mxu0 0.0
      %2038 = vmatpush2.msra.mxu0 0.0
      %2039 = vmatprep.subr.mxu0 0.0
      %2040 = vmatpush2.msra.mxu0 0.0
      %2041 = vmatprep.subr.mxu0 0.0
      %2042 = vmatpush2.msra.mxu0 0.0
      %2043 = vmatprep.subr.mxu0 0.0
      %2044 = vmatpush2.msra.mxu0 0.0
      %2045 = vmatprep.subr.mxu0 0.0
      %2046 = vmatpush2.msra.mxu0 0.0
      %2047 = vmatprep.subr.mxu0 0.0
      %2048 = vmatpush2.msra.mxu0 0.0
      %2049 = vmatprep.subr.mxu0 0.0
      %2050 = vmatpush2.msra.mxu0 0.0
      %2051 = vmatprep.subr.mxu0 0.0
      %2052 = vmatpush2.msra.mxu0 0.0
      %2053 = vmatprep.subr.mxu0 0.0
      %2054 = vmatpush2.msra.mxu0 0.0
      %2055 = vmatprep.subr.mxu0 0.0
      %2056 = vmatpush2.msra.mxu0 0.0
      %2057 = vmatprep.subr.mxu0 0.0
      %2058 = vmatpush2.msra.mxu0 0.0
      %2059 = vmatprep.subr.mxu0 0.0
      %2060 = vmatpush2.msra.mxu0 0.0
      %2061 = vmatprep.mubr.f32.mxu0 0.0
      %2062 = vmatmul.mubr.f32.gmra.mxu0 %v1995
      %v2063 = vpop.f32.mrf.mxu0
      %v2064 = vadd.f32 0.0, %v2063
      %v2065 = vpop.f32.mrf.mxu0
      %2066 = vdwg.mxu0
      %v2068 = vsel %vm1002, %v1987, 0
      %2070 = vmatprep.subr.mxu0 0.0
      %2071 = vmatpush1.msra.mxu0 0.0
      %2072 = vmatprep.subr.mxu0 0.0
      %2073 = vmatpush1.msra.mxu0 0.0
      %2074 = vmatprep.subr.mxu0 0.0
      %2075 = vmatpush1.msra.mxu0 0.0
      %2076 = vmatprep.subr.mxu0 0.0
      %2077 = vmatpush1.msra.mxu0 0.0
      %2078 = vmatprep.subr.mxu0 0.0
      %2079 = vmatpush1.msra.mxu0 0.0
      %2080 = vmatprep.subr.mxu0 0.0
      %2081 = vmatpush1.msra.mxu0 0.0
      %2082 = vmatprep.subr.mxu0 0.0
      %2083 = vmatpush1.msra.mxu0 0.0
      %2084 = vmatprep.subr.mxu0 0.0
      %2085 = vmatpush1.msra.mxu0 0.0
      %2086 = vmatprep.subr.mxu0 0.0
      %2087 = vmatpush1.msra.mxu0 0.0
      %2088 = vmatprep.subr.mxu0 0.0
      %2089 = vmatpush1.msra.mxu0 0.0
      %2090 = vmatprep.subr.mxu0 0.0
      %2091 = vmatpush1.msra.mxu0 0.0
      %2092 = vmatprep.subr.mxu0 0.0
      %2093 = vmatpush1.msra.mxu0 0.0
      %2094 = vmatprep.subr.mxu0 0.0
      %2095 = vmatpush1.msra.mxu0 0.0
      %2096 = vmatprep.subr.mxu0 0.0
      %2097 = vmatpush1.msra.mxu0 0.0
      %2098 = vmatprep.subr.mxu0 0.0
      %2099 = vmatpush1.msra.mxu0 0.0
      %2100 = vmatprep.subr.mxu0 0.0
      %2101 = vmatpush1.msra.mxu0 %v1986
      %2102 = vmatprep.subr.mxu0 0.0
      %2103 = vmatpush2.msra.mxu0 0.0
      %2104 = vmatprep.subr.mxu0 0.0
      %2105 = vmatpush2.msra.mxu0 0.0
      %2106 = vmatprep.subr.mxu0 0.0
      %2107 = vmatpush2.msra.mxu0 0.0
      %2108 = vmatprep.subr.mxu0 0.0
      %2109 = vmatpush2.msra.mxu0 0.0
      %2110 = vmatprep.subr.mxu0 0.0
      %2111 = vmatpush2.msra.mxu0 0.0
      %2112 = vmatprep.subr.mxu0 0.0
      %2113 = vmatpush2.msra.mxu0 0.0
      %2114 = vmatprep.subr.mxu0 0.0
      %2115 = vmatpush2.msra.mxu0 0.0
      %2116 = vmatprep.subr.mxu0 0.0
      %2117 = vmatpush2.msra.mxu0 0.0
      %2118 = vmatprep.subr.mxu0 0.0
      %2119 = vmatpush2.msra.mxu0 0.0
      %2120 = vmatprep.subr.mxu0 0.0
      %2121 = vmatpush2.msra.mxu0 0.0
      %2122 = vmatprep.subr.mxu0 0.0
      %2123 = vmatpush2.msra.mxu0 0.0
      %2124 = vmatprep.subr.mxu0 0.0
      %2125 = vmatpush2.msra.mxu0 0.0
      %2126 = vmatprep.subr.mxu0 0.0
      %2127 = vmatpush2.msra.mxu0 0.0
      %2128 = vmatprep.subr.mxu0 0.0
      %2129 = vmatpush2.msra.mxu0 0.0
      %2130 = vmatprep.subr.mxu0 0.0
      %2131 = vmatpush2.msra.mxu0 0.0
      %2132 = vmatprep.subr.mxu0 0.0
      %2133 = vmatpush2.msra.mxu0 0.0
      %2134 = vmatprep.mubr.f32.mxu0 0.0
      %2135 = vmatmul.mubr.f32.gmra.mxu0 %v2068
      %v2136 = vpop.f32.mrf.mxu0
      %v2137 = vadd.f32 %v2064, %v2136
      %v2138 = vpop.f32.mrf.mxu0
      %2139 = vdwg.mxu0
      %s2140 = scalar_lea.vmem %s13, 16
      %v2141 = vld [vmem:[%s2140] sm:$0xff]
      %2142 = vrot.lane.b32.xlu0 %v1986, 120
      %v2143 = vpop.permute.xlu0 %2142
      %v2146 = vsel %vm1002, %v2141, 0
      %2148 = vmatprep.subr.mxu0 0.0
      %2149 = vmatpush1.msra.mxu0 0.0
      %2150 = vmatprep.subr.mxu0 0.0
      %2151 = vmatpush1.msra.mxu0 0.0
      %2152 = vmatprep.subr.mxu0 0.0
      %2153 = vmatpush1.msra.mxu0 0.0
      %2154 = vmatprep.subr.mxu0 0.0
      %2155 = vmatpush1.msra.mxu0 0.0
      %2156 = vmatprep.subr.mxu0 0.0
      %2157 = vmatpush1.msra.mxu0 0.0
      %2158 = vmatprep.subr.mxu0 0.0
      %2159 = vmatpush1.msra.mxu0 0.0
      %2160 = vmatprep.subr.mxu0 0.0
      %2161 = vmatpush1.msra.mxu0 0.0
      %2162 = vmatprep.subr.mxu0 0.0
      %2163 = vmatpush1.msra.mxu0 0.0
      %2164 = vmatprep.subr.mxu0 0.0
      %2165 = vmatpush1.msra.mxu0 0.0
      %2166 = vmatprep.subr.mxu0 0.0
      %2167 = vmatpush1.msra.mxu0 0.0
      %2168 = vmatprep.subr.mxu0 0.0
      %2169 = vmatpush1.msra.mxu0 0.0
      %2170 = vmatprep.subr.mxu0 0.0
      %2171 = vmatpush1.msra.mxu0 0.0
      %2172 = vmatprep.subr.mxu0 0.0
      %2173 = vmatpush1.msra.mxu0 0.0
      %2174 = vmatprep.subr.mxu0 0.0
      %2175 = vmatpush1.msra.mxu0 0.0
      %2176 = vmatprep.subr.mxu0 0.0
      %2177 = vmatpush1.msra.mxu0 0.0
      %2178 = vmatprep.subr.mxu0 0.0
      %2179 = vmatpush1.msra.mxu0 %v2143
      %2180 = vmatprep.subr.mxu0 0.0
      %2181 = vmatpush2.msra.mxu0 0.0
      %2182 = vmatprep.subr.mxu0 0.0
      %2183 = vmatpush2.msra.mxu0 0.0
      %2184 = vmatprep.subr.mxu0 0.0
      %2185 = vmatpush2.msra.mxu0 0.0
      %2186 = vmatprep.subr.mxu0 0.0
      %2187 = vmatpush2.msra.mxu0 0.0
      %2188 = vmatprep.subr.mxu0 0.0
      %2189 = vmatpush2.msra.mxu0 0.0
      %2190 = vmatprep.subr.mxu0 0.0
      %2191 = vmatpush2.msra.mxu0 0.0
      %2192 = vmatprep.subr.mxu0 0.0
      %2193 = vmatpush2.msra.mxu0 0.0
      %2194 = vmatprep.subr.mxu0 0.0
      %2195 = vmatpush2.msra.mxu0 0.0
      %2196 = vmatprep.subr.mxu0 0.0
      %2197 = vmatpush2.msra.mxu0 0.0
      %2198 = vmatprep.subr.mxu0 0.0
      %2199 = vmatpush2.msra.mxu0 0.0
      %2200 = vmatprep.subr.mxu0 0.0
      %2201 = vmatpush2.msra.mxu0 0.0
      %2202 = vmatprep.subr.mxu0 0.0
      %2203 = vmatpush2.msra.mxu0 0.0
      %2204 = vmatprep.subr.mxu0 0.0
      %2205 = vmatpush2.msra.mxu0 0.0
      %2206 = vmatprep.subr.mxu0 0.0
      %2207 = vmatpush2.msra.mxu0 0.0
      %2208 = vmatprep.subr.mxu0 0.0
      %2209 = vmatpush2.msra.mxu0 0.0
      %2210 = vmatprep.subr.mxu0 0.0
      %2211 = vmatpush2.msra.mxu0 0.0
      %2212 = vmatprep.mubr.f32.mxu0 0.0
      %2213 = vmatmul.mubr.f32.gmra.mxu0 %v2146
      %v2214 = vpop.f32.mrf.mxu0
      %v2215 = vadd.f32 0.0, %v2214
      %v2216 = vpop.f32.mrf.mxu0
      %2217 = vdwg.mxu0
      %v2218 = vadd.f32 %v2137, %v2215
      %2220 = vset.pattern.permute.xlu0 0
      %2221 = vperm.xlu0 %2220, %v1735
      %v2222 = vpop.permute.xlu0 %2221
      %v2224 = vadd.f32 %v2218, %v2222
      %v2225 = vmax.f32 %v2224, 0.0
      %v2226 = vsel %vm1246, %v1733, 0.0
      %v2227 = vadd.f32 %v2225, %v2226
      %v2228 = vmax.f32 %v2227, 0.0
      %v2229 = vld [vmem:[%s16] sm:$0xff]
      %v2230 = vld [vmem:[%s18] sm:$0xff]
      %2232 = vrot.lane.b32.xlu0 %v2228, 16
      %v2233 = vpop.permute.xlu0 %2232
      %v2235 = vsel %vm1235, 0.0, %v2233
      %vm2236 = vcmask 375808
      %v2237 = vsel %vm2236, %v2235, 0.0
      %v2238 = vld [vmem:[%s15] sm:$0xff]
      %s2239 = scalar_lea.vmem %s15, 8
      %v2240 = vld [vmem:[%s2239] sm:$0xff]
      %2242 = vrot.lane.b32.xlu0 %v2237, 120
      %v2243 = vpop.permute.xlu0 %2242
      %v2246 = vsel %vm1002, %v2240, 0
      %2248 = vmatprep.subr.mxu0 0.0
      %2249 = vmatpush1.msra.mxu0 0.0
      %2250 = vmatprep.subr.mxu0 0.0
      %2251 = vmatpush1.msra.mxu0 0.0
      %2252 = vmatprep.subr.mxu0 0.0
      %2253 = vmatpush1.msra.mxu0 0.0
      %2254 = vmatprep.subr.mxu0 0.0
      %2255 = vmatpush1.msra.mxu0 0.0
      %2256 = vmatprep.subr.mxu0 0.0
      %2257 = vmatpush1.msra.mxu0 0.0
      %2258 = vmatprep.subr.mxu0 0.0
      %2259 = vmatpush1.msra.mxu0 0.0
      %2260 = vmatprep.subr.mxu0 0.0
      %2261 = vmatpush1.msra.mxu0 0.0
      %2262 = vmatprep.subr.mxu0 0.0
      %2263 = vmatpush1.msra.mxu0 0.0
      %2264 = vmatprep.subr.mxu0 0.0
      %2265 = vmatpush1.msra.mxu0 0.0
      %2266 = vmatprep.subr.mxu0 0.0
      %2267 = vmatpush1.msra.mxu0 0.0
      %2268 = vmatprep.subr.mxu0 0.0
      %2269 = vmatpush1.msra.mxu0 0.0
      %2270 = vmatprep.subr.mxu0 0.0
      %2271 = vmatpush1.msra.mxu0 0.0
      %2272 = vmatprep.subr.mxu0 0.0
      %2273 = vmatpush1.msra.mxu0 0.0
      %2274 = vmatprep.subr.mxu0 0.0
      %2275 = vmatpush1.msra.mxu0 0.0
      %2276 = vmatprep.subr.mxu0 0.0
      %2277 = vmatpush1.msra.mxu0 0.0
      %2278 = vmatprep.subr.mxu0 0.0
      %2279 = vmatpush1.msra.mxu0 %v2243
      %2280 = vmatprep.subr.mxu0 0.0
      %2281 = vmatpush2.msra.mxu0 0.0
      %2282 = vmatprep.subr.mxu0 0.0
      %2283 = vmatpush2.msra.mxu0 0.0
      %2284 = vmatprep.subr.mxu0 0.0
      %2285 = vmatpush2.msra.mxu0 0.0
      %2286 = vmatprep.subr.mxu0 0.0
      %2287 = vmatpush2.msra.mxu0 0.0
      %2288 = vmatprep.subr.mxu0 0.0
      %2289 = vmatpush2.msra.mxu0 0.0
      %2290 = vmatprep.subr.mxu0 0.0
      %2291 = vmatpush2.msra.mxu0 0.0
      %2292 = vmatprep.subr.mxu0 0.0
      %2293 = vmatpush2.msra.mxu0 0.0
      %2294 = vmatprep.subr.mxu0 0.0
      %2295 = vmatpush2.msra.mxu0 0.0
      %2296 = vmatprep.subr.mxu0 0.0
      %2297 = vmatpush2.msra.mxu0 0.0
      %2298 = vmatprep.subr.mxu0 0.0
      %2299 = vmatpush2.msra.mxu0 0.0
      %2300 = vmatprep.subr.mxu0 0.0
      %2301 = vmatpush2.msra.mxu0 0.0
      %2302 = vmatprep.subr.mxu0 0.0
      %2303 = vmatpush2.msra.mxu0 0.0
      %2304 = vmatprep.subr.mxu0 0.0
      %2305 = vmatpush2.msra.mxu0 0.0
      %2306 = vmatprep.subr.mxu0 0.0
      %2307 = vmatpush2.msra.mxu0 0.0
      %2308 = vmatprep.subr.mxu0 0.0
      %2309 = vmatpush2.msra.mxu0 0.0
      %2310 = vmatprep.subr.mxu0 0.0
      %2311 = vmatpush2.msra.mxu0 0.0
      %2312 = vmatprep.mubr.f32.mxu0 0.0
      %2313 = vmatmul.mubr.f32.gmra.mxu0 %v2246
      %v2314 = vpop.f32.mrf.mxu0
      %v2315 = vadd.f32 0.0, %v2314
      %v2316 = vpop.f32.mrf.mxu0
      %2317 = vdwg.mxu0
      %v2319 = vsel %vm1002, %v2238, 0
      %2321 = vmatprep.subr.mxu0 0.0
      %2322 = vmatpush1.msra.mxu0 0.0
      %2323 = vmatprep.subr.mxu0 0.0
      %2324 = vmatpush1.msra.mxu0 0.0
      %2325 = vmatprep.subr.mxu0 0.0
      %2326 = vmatpush1.msra.mxu0 0.0
      %2327 = vmatprep.subr.mxu0 0.0
      %2328 = vmatpush1.msra.mxu0 0.0
      %2329 = vmatprep.subr.mxu0 0.0
      %2330 = vmatpush1.msra.mxu0 0.0
      %2331 = vmatprep.subr.mxu0 0.0
      %2332 = vmatpush1.msra.mxu0 0.0
      %2333 = vmatprep.subr.mxu0 0.0
      %2334 = vmatpush1.msra.mxu0 0.0
      %2335 = vmatprep.subr.mxu0 0.0
      %2336 = vmatpush1.msra.mxu0 0.0
      %2337 = vmatprep.subr.mxu0 0.0
      %2338 = vmatpush1.msra.mxu0 0.0
      %2339 = vmatprep.subr.mxu0 0.0
      %2340 = vmatpush1.msra.mxu0 0.0
      %2341 = vmatprep.subr.mxu0 0.0
      %2342 = vmatpush1.msra.mxu0 0.0
      %2343 = vmatprep.subr.mxu0 0.0
      %2344 = vmatpush1.msra.mxu0 0.0
      %2345 = vmatprep.subr.mxu0 0.0
      %2346 = vmatpush1.msra.mxu0 0.0
      %2347 = vmatprep.subr.mxu0 0.0
      %2348 = vmatpush1.msra.mxu0 0.0
      %2349 = vmatprep.subr.mxu0 0.0
      %2350 = vmatpush1.msra.mxu0 0.0
      %2351 = vmatprep.subr.mxu0 0.0
      %2352 = vmatpush1.msra.mxu0 %v2237
      %2353 = vmatprep.subr.mxu0 0.0
      %2354 = vmatpush2.msra.mxu0 0.0
      %2355 = vmatprep.subr.mxu0 0.0
      %2356 = vmatpush2.msra.mxu0 0.0
      %2357 = vmatprep.subr.mxu0 0.0
      %2358 = vmatpush2.msra.mxu0 0.0
      %2359 = vmatprep.subr.mxu0 0.0
      %2360 = vmatpush2.msra.mxu0 0.0
      %2361 = vmatprep.subr.mxu0 0.0
      %2362 = vmatpush2.msra.mxu0 0.0
      %2363 = vmatprep.subr.mxu0 0.0
      %2364 = vmatpush2.msra.mxu0 0.0
      %2365 = vmatprep.subr.mxu0 0.0
      %2366 = vmatpush2.msra.mxu0 0.0
      %2367 = vmatprep.subr.mxu0 0.0
      %2368 = vmatpush2.msra.mxu0 0.0
      %2369 = vmatprep.subr.mxu0 0.0
      %2370 = vmatpush2.msra.mxu0 0.0
      %2371 = vmatprep.subr.mxu0 0.0
      %2372 = vmatpush2.msra.mxu0 0.0
      %2373 = vmatprep.subr.mxu0 0.0
      %2374 = vmatpush2.msra.mxu0 0.0
      %2375 = vmatprep.subr.mxu0 0.0
      %2376 = vmatpush2.msra.mxu0 0.0
      %2377 = vmatprep.subr.mxu0 0.0
      %2378 = vmatpush2.msra.mxu0 0.0
      %2379 = vmatprep.subr.mxu0 0.0
      %2380 = vmatpush2.msra.mxu0 0.0
      %2381 = vmatprep.subr.mxu0 0.0
      %2382 = vmatpush2.msra.mxu0 0.0
      %2383 = vmatprep.subr.mxu0 0.0
      %2384 = vmatpush2.msra.mxu0 0.0
      %2385 = vmatprep.mubr.f32.mxu0 0.0
      %2386 = vmatmul.mubr.f32.gmra.mxu0 %v2319
      %v2387 = vpop.f32.mrf.mxu0
      %v2388 = vadd.f32 %v2315, %v2387
      %v2389 = vpop.f32.mrf.mxu0
      %2390 = vdwg.mxu0
      %s2391 = scalar_lea.vmem %s15, 16
      %v2392 = vld [vmem:[%s2391] sm:$0xff]
      %2393 = vrot.lane.b32.xlu0 %v2237, 112
      %v2394 = vpop.permute.xlu0 %2393
      %v2397 = vsel %vm1002, %v2392, 0
      %2399 = vmatprep.subr.mxu0 0.0
      %2400 = vmatpush1.msra.mxu0 0.0
      %2401 = vmatprep.subr.mxu0 0.0
      %2402 = vmatpush1.msra.mxu0 0.0
      %2403 = vmatprep.subr.mxu0 0.0
      %2404 = vmatpush1.msra.mxu0 0.0
      %2405 = vmatprep.subr.mxu0 0.0
      %2406 = vmatpush1.msra.mxu0 0.0
      %2407 = vmatprep.subr.mxu0 0.0
      %2408 = vmatpush1.msra.mxu0 0.0
      %2409 = vmatprep.subr.mxu0 0.0
      %2410 = vmatpush1.msra.mxu0 0.0
      %2411 = vmatprep.subr.mxu0 0.0
      %2412 = vmatpush1.msra.mxu0 0.0
      %2413 = vmatprep.subr.mxu0 0.0
      %2414 = vmatpush1.msra.mxu0 0.0
      %2415 = vmatprep.subr.mxu0 0.0
      %2416 = vmatpush1.msra.mxu0 0.0
      %2417 = vmatprep.subr.mxu0 0.0
      %2418 = vmatpush1.msra.mxu0 0.0
      %2419 = vmatprep.subr.mxu0 0.0
      %2420 = vmatpush1.msra.mxu0 0.0
      %2421 = vmatprep.subr.mxu0 0.0
      %2422 = vmatpush1.msra.mxu0 0.0
      %2423 = vmatprep.subr.mxu0 0.0
      %2424 = vmatpush1.msra.mxu0 0.0
      %2425 = vmatprep.subr.mxu0 0.0
      %2426 = vmatpush1.msra.mxu0 0.0
      %2427 = vmatprep.subr.mxu0 0.0
      %2428 = vmatpush1.msra.mxu0 0.0
      %2429 = vmatprep.subr.mxu0 0.0
      %2430 = vmatpush1.msra.mxu0 %v2394
      %2431 = vmatprep.subr.mxu0 0.0
      %2432 = vmatpush2.msra.mxu0 0.0
      %2433 = vmatprep.subr.mxu0 0.0
      %2434 = vmatpush2.msra.mxu0 0.0
      %2435 = vmatprep.subr.mxu0 0.0
      %2436 = vmatpush2.msra.mxu0 0.0
      %2437 = vmatprep.subr.mxu0 0.0
      %2438 = vmatpush2.msra.mxu0 0.0
      %2439 = vmatprep.subr.mxu0 0.0
      %2440 = vmatpush2.msra.mxu0 0.0
      %2441 = vmatprep.subr.mxu0 0.0
      %2442 = vmatpush2.msra.mxu0 0.0
      %2443 = vmatprep.subr.mxu0 0.0
      %2444 = vmatpush2.msra.mxu0 0.0
      %2445 = vmatprep.subr.mxu0 0.0
      %2446 = vmatpush2.msra.mxu0 0.0
      %2447 = vmatprep.subr.mxu0 0.0
      %2448 = vmatpush2.msra.mxu0 0.0
      %2449 = vmatprep.subr.mxu0 0.0
      %2450 = vmatpush2.msra.mxu0 0.0
      %2451 = vmatprep.subr.mxu0 0.0
      %2452 = vmatpush2.msra.mxu0 0.0
      %2453 = vmatprep.subr.mxu0 0.0
      %2454 = vmatpush2.msra.mxu0 0.0
      %2455 = vmatprep.subr.mxu0 0.0
      %2456 = vmatpush2.msra.mxu0 0.0
      %2457 = vmatprep.subr.mxu0 0.0
      %2458 = vmatpush2.msra.mxu0 0.0
      %2459 = vmatprep.subr.mxu0 0.0
      %2460 = vmatpush2.msra.mxu0 0.0
      %2461 = vmatprep.subr.mxu0 0.0
      %2462 = vmatpush2.msra.mxu0 0.0
      %2463 = vmatprep.mubr.f32.mxu0 0.0
      %2464 = vmatmul.mubr.f32.gmra.mxu0 %v2397
      %v2465 = vpop.f32.mrf.mxu0
      %v2466 = vadd.f32 0.0, %v2465
      %v2467 = vpop.f32.mrf.mxu0
      %2468 = vdwg.mxu0
      %v2469 = vadd.f32 %v2388, %v2466
      %2471 = vset.pattern.permute.xlu0 0
      %2472 = vperm.xlu0 %2471, %v2229
      %v2473 = vpop.permute.xlu0 %2472
      %v2475 = vadd.f32 %v2469, %v2473
      %v2476 = vmax.f32 %v2475, 0.0
      %2478 = vrot.lane.b32.xlu0 %v2476, 16
      %v2479 = vpop.permute.xlu0 %2478
      %v2481 = vsel %vm1235, 0.0, %v2479
      %v2482 = vld [vmem:[%s17] sm:$0xff]
      %s2483 = scalar_lea.vmem %s17, 8
      %v2484 = vld [vmem:[%s2483] sm:$0xff]
      %2486 = vrot.lane.b32.xlu0 %v2481, 120
      %v2487 = vpop.permute.xlu0 %2486
      %v2490 = vsel %vm1002, %v2484, 0
      %2492 = vmatprep.subr.mxu0 0.0
      %2493 = vmatpush1.msra.mxu0 0.0
      %2494 = vmatprep.subr.mxu0 0.0
      %2495 = vmatpush1.msra.mxu0 0.0
      %2496 = vmatprep.subr.mxu0 0.0
      %2497 = vmatpush1.msra.mxu0 0.0
      %2498 = vmatprep.subr.mxu0 0.0
      %2499 = vmatpush1.msra.mxu0 0.0
      %2500 = vmatprep.subr.mxu0 0.0
      %2501 = vmatpush1.msra.mxu0 0.0
      %2502 = vmatprep.subr.mxu0 0.0
      %2503 = vmatpush1.msra.mxu0 0.0
      %2504 = vmatprep.subr.mxu0 0.0
      %2505 = vmatpush1.msra.mxu0 0.0
      %2506 = vmatprep.subr.mxu0 0.0
      %2507 = vmatpush1.msra.mxu0 0.0
      %2508 = vmatprep.subr.mxu0 0.0
      %2509 = vmatpush1.msra.mxu0 0.0
      %2510 = vmatprep.subr.mxu0 0.0
      %2511 = vmatpush1.msra.mxu0 0.0
      %2512 = vmatprep.subr.mxu0 0.0
      %2513 = vmatpush1.msra.mxu0 0.0
      %2514 = vmatprep.subr.mxu0 0.0
      %2515 = vmatpush1.msra.mxu0 0.0
      %2516 = vmatprep.subr.mxu0 0.0
      %2517 = vmatpush1.msra.mxu0 0.0
      %2518 = vmatprep.subr.mxu0 0.0
      %2519 = vmatpush1.msra.mxu0 0.0
      %2520 = vmatprep.subr.mxu0 0.0
      %2521 = vmatpush1.msra.mxu0 0.0
      %2522 = vmatprep.subr.mxu0 0.0
      %2523 = vmatpush1.msra.mxu0 %v2487
      %2524 = vmatprep.subr.mxu0 0.0
      %2525 = vmatpush2.msra.mxu0 0.0
      %2526 = vmatprep.subr.mxu0 0.0
      %2527 = vmatpush2.msra.mxu0 0.0
      %2528 = vmatprep.subr.mxu0 0.0
      %2529 = vmatpush2.msra.mxu0 0.0
      %2530 = vmatprep.subr.mxu0 0.0
      %2531 = vmatpush2.msra.mxu0 0.0
      %2532 = vmatprep.subr.mxu0 0.0
      %2533 = vmatpush2.msra.mxu0 0.0
      %2534 = vmatprep.subr.mxu0 0.0
      %2535 = vmatpush2.msra.mxu0 0.0
      %2536 = vmatprep.subr.mxu0 0.0
      %2537 = vmatpush2.msra.mxu0 0.0
      %2538 = vmatprep.subr.mxu0 0.0
      %2539 = vmatpush2.msra.mxu0 0.0
      %2540 = vmatprep.subr.mxu0 0.0
      %2541 = vmatpush2.msra.mxu0 0.0
      %2542 = vmatprep.subr.mxu0 0.0
      %2543 = vmatpush2.msra.mxu0 0.0
      %2544 = vmatprep.subr.mxu0 0.0
      %2545 = vmatpush2.msra.mxu0 0.0
      %2546 = vmatprep.subr.mxu0 0.0
      %2547 = vmatpush2.msra.mxu0 0.0
      %2548 = vmatprep.subr.mxu0 0.0
      %2549 = vmatpush2.msra.mxu0 0.0
      %2550 = vmatprep.subr.mxu0 0.0
      %2551 = vmatpush2.msra.mxu0 0.0
      %2552 = vmatprep.subr.mxu0 0.0
      %2553 = vmatpush2.msra.mxu0 0.0
      %2554 = vmatprep.subr.mxu0 0.0
      %2555 = vmatpush2.msra.mxu0 0.0
      %2556 = vmatprep.mubr.f32.mxu0 0.0
      %2557 = vmatmul.mubr.f32.gmra.mxu0 %v2490
      %v2558 = vpop.f32.mrf.mxu0
      %v2559 = vadd.f32 0.0, %v2558
      %v2560 = vpop.f32.mrf.mxu0
      %2561 = vdwg.mxu0
      %v2563 = vsel %vm1002, %v2482, 0
      %2565 = vmatprep.subr.mxu0 0.0
      %2566 = vmatpush1.msra.mxu0 0.0
      %2567 = vmatprep.subr.mxu0 0.0
      %2568 = vmatpush1.msra.mxu0 0.0
      %2569 = vmatprep.subr.mxu0 0.0
      %2570 = vmatpush1.msra.mxu0 0.0
      %2571 = vmatprep.subr.mxu0 0.0
      %2572 = vmatpush1.msra.mxu0 0.0
      %2573 = vmatprep.subr.mxu0 0.0
      %2574 = vmatpush1.msra.mxu0 0.0
      %2575 = vmatprep.subr.mxu0 0.0
      %2576 = vmatpush1.msra.mxu0 0.0
      %2577 = vmatprep.subr.mxu0 0.0
      %2578 = vmatpush1.msra.mxu0 0.0
      %2579 = vmatprep.subr.mxu0 0.0
      %2580 = vmatpush1.msra.mxu0 0.0
      %2581 = vmatprep.subr.mxu0 0.0
      %2582 = vmatpush1.msra.mxu0 0.0
      %2583 = vmatprep.subr.mxu0 0.0
      %2584 = vmatpush1.msra.mxu0 0.0
      %2585 = vmatprep.subr.mxu0 0.0
      %2586 = vmatpush1.msra.mxu0 0.0
      %2587 = vmatprep.subr.mxu0 0.0
      %2588 = vmatpush1.msra.mxu0 0.0
      %2589 = vmatprep.subr.mxu0 0.0
      %2590 = vmatpush1.msra.mxu0 0.0
      %2591 = vmatprep.subr.mxu0 0.0
      %2592 = vmatpush1.msra.mxu0 0.0
      %2593 = vmatprep.subr.mxu0 0.0
      %2594 = vmatpush1.msra.mxu0 0.0
      %2595 = vmatprep.subr.mxu0 0.0
      %2596 = vmatpush1.msra.mxu0 %v2481
      %2597 = vmatprep.subr.mxu0 0.0
      %2598 = vmatpush2.msra.mxu0 0.0
      %2599 = vmatprep.subr.mxu0 0.0
      %2600 = vmatpush2.msra.mxu0 0.0
      %2601 = vmatprep.subr.mxu0 0.0
      %2602 = vmatpush2.msra.mxu0 0.0
      %2603 = vmatprep.subr.mxu0 0.0
      %2604 = vmatpush2.msra.mxu0 0.0
      %2605 = vmatprep.subr.mxu0 0.0
      %2606 = vmatpush2.msra.mxu0 0.0
      %2607 = vmatprep.subr.mxu0 0.0
      %2608 = vmatpush2.msra.mxu0 0.0
      %2609 = vmatprep.subr.mxu0 0.0
      %2610 = vmatpush2.msra.mxu0 0.0
      %2611 = vmatprep.subr.mxu0 0.0
      %2612 = vmatpush2.msra.mxu0 0.0
      %2613 = vmatprep.subr.mxu0 0.0
      %2614 = vmatpush2.msra.mxu0 0.0
      %2615 = vmatprep.subr.mxu0 0.0
      %2616 = vmatpush2.msra.mxu0 0.0
      %2617 = vmatprep.subr.mxu0 0.0
      %2618 = vmatpush2.msra.mxu0 0.0
      %2619 = vmatprep.subr.mxu0 0.0
      %2620 = vmatpush2.msra.mxu0 0.0
      %2621 = vmatprep.subr.mxu0 0.0
      %2622 = vmatpush2.msra.mxu0 0.0
      %2623 = vmatprep.subr.mxu0 0.0
      %2624 = vmatpush2.msra.mxu0 0.0
      %2625 = vmatprep.subr.mxu0 0.0
      %2626 = vmatpush2.msra.mxu0 0.0
      %2627 = vmatprep.subr.mxu0 0.0
      %2628 = vmatpush2.msra.mxu0 0.0
      %2629 = vmatprep.mubr.f32.mxu0 0.0
      %2630 = vmatmul.mubr.f32.gmra.mxu0 %v2563
      %v2631 = vpop.f32.mrf.mxu0
      %v2632 = vadd.f32 %v2559, %v2631
      %v2633 = vpop.f32.mrf.mxu0
      %2634 = vdwg.mxu0
      %s2635 = scalar_lea.vmem %s17, 16
      %v2636 = vld [vmem:[%s2635] sm:$0xff]
      %2637 = vrot.lane.b32.xlu0 %v2481, 112
      %v2638 = vpop.permute.xlu0 %2637
      %v2641 = vsel %vm1002, %v2636, 0
      %2643 = vmatprep.subr.mxu0 0.0
      %2644 = vmatpush1.msra.mxu0 0.0
      %2645 = vmatprep.subr.mxu0 0.0
      %2646 = vmatpush1.msra.mxu0 0.0
      %2647 = vmatprep.subr.mxu0 0.0
      %2648 = vmatpush1.msra.mxu0 0.0
      %2649 = vmatprep.subr.mxu0 0.0
      %2650 = vmatpush1.msra.mxu0 0.0
      %2651 = vmatprep.subr.mxu0 0.0
      %2652 = vmatpush1.msra.mxu0 0.0
      %2653 = vmatprep.subr.mxu0 0.0
      %2654 = vmatpush1.msra.mxu0 0.0
      %2655 = vmatprep.subr.mxu0 0.0
      %2656 = vmatpush1.msra.mxu0 0.0
      %2657 = vmatprep.subr.mxu0 0.0
      %2658 = vmatpush1.msra.mxu0 0.0
      %2659 = vmatprep.subr.mxu0 0.0
      %2660 = vmatpush1.msra.mxu0 0.0
      %2661 = vmatprep.subr.mxu0 0.0
      %2662 = vmatpush1.msra.mxu0 0.0
      %2663 = vmatprep.subr.mxu0 0.0
      %2664 = vmatpush1.msra.mxu0 0.0
      %2665 = vmatprep.subr.mxu0 0.0
      %2666 = vmatpush1.msra.mxu0 0.0
      %2667 = vmatprep.subr.mxu0 0.0
      %2668 = vmatpush1.msra.mxu0 0.0
      %2669 = vmatprep.subr.mxu0 0.0
      %2670 = vmatpush1.msra.mxu0 0.0
      %2671 = vmatprep.subr.mxu0 0.0
      %2672 = vmatpush1.msra.mxu0 0.0
      %2673 = vmatprep.subr.mxu0 0.0
      %2674 = vmatpush1.msra.mxu0 %v2638
      %2675 = vmatprep.subr.mxu0 0.0
      %2676 = vmatpush2.msra.mxu0 0.0
      %2677 = vmatprep.subr.mxu0 0.0
      %2678 = vmatpush2.msra.mxu0 0.0
      %2679 = vmatprep.subr.mxu0 0.0
      %2680 = vmatpush2.msra.mxu0 0.0
      %2681 = vmatprep.subr.mxu0 0.0
      %2682 = vmatpush2.msra.mxu0 0.0
      %2683 = vmatprep.subr.mxu0 0.0
      %2684 = vmatpush2.msra.mxu0 0.0
      %2685 = vmatprep.subr.mxu0 0.0
      %2686 = vmatpush2.msra.mxu0 0.0
      %2687 = vmatprep.subr.mxu0 0.0
      %2688 = vmatpush2.msra.mxu0 0.0
      %2689 = vmatprep.subr.mxu0 0.0
      %2690 = vmatpush2.msra.mxu0 0.0
      %2691 = vmatprep.subr.mxu0 0.0
      %2692 = vmatpush2.msra.mxu0 0.0
      %2693 = vmatprep.subr.mxu0 0.0
      %2694 = vmatpush2.msra.mxu0 0.0
      %2695 = vmatprep.subr.mxu0 0.0
      %2696 = vmatpush2.msra.mxu0 0.0
      %2697 = vmatprep.subr.mxu0 0.0
      %2698 = vmatpush2.msra.mxu0 0.0
      %2699 = vmatprep.subr.mxu0 0.0
      %2700 = vmatpush2.msra.mxu0 0.0
      %2701 = vmatprep.subr.mxu0 0.0
      %2702 = vmatpush2.msra.mxu0 0.0
      %2703 = vmatprep.subr.mxu0 0.0
      %2704 = vmatpush2.msra.mxu0 0.0
      %2705 = vmatprep.subr.mxu0 0.0
      %2706 = vmatpush2.msra.mxu0 0.0
      %2707 = vmatprep.mubr.f32.mxu0 0.0
      %2708 = vmatmul.mubr.f32.gmra.mxu0 %v2641
      %v2709 = vpop.f32.mrf.mxu0
      %v2710 = vadd.f32 0.0, %v2709
      %v2711 = vpop.f32.mrf.mxu0
      %2712 = vdwg.mxu0
      %v2713 = vadd.f32 %v2632, %v2710
      %2715 = vset.pattern.permute.xlu0 0
      %2716 = vperm.xlu0 %2715, %v2230
      %v2717 = vpop.permute.xlu0 %2716
      %v2719 = vadd.f32 %v2713, %v2717
      %v2720 = vmax.f32 %v2719, 0.0
      %v2721 = vsel %vm1741, %v2228, 0.0
      %v2722 = vadd.f32 %v2720, %v2721
      %v2723 = vmax.f32 %v2722, 0.0
      %v2724 = vld [vmem:[%s19] sm:$0x1]
      %v2725 = vld [vmem:[#allocation2] sm:$0x1]
      %2727 = vrot.lane.b32.xlu0 %v2723, 83
      %v2728 = vpop.permute.xlu0 %2727
      %v2731 = vsel %vm1002, %v2724, 0
      %2733 = vmatprep.subr.mxu0 0.0
      %2734 = vmatpush1.msra.mxu0 0.0
      %2735 = vmatprep.subr.mxu0 0.0
      %2736 = vmatpush1.msra.mxu0 0.0
      %2737 = vmatprep.subr.mxu0 0.0
      %2738 = vmatpush1.msra.mxu0 0.0
      %2739 = vmatprep.subr.mxu0 0.0
      %2740 = vmatpush1.msra.mxu0 0.0
      %2741 = vmatprep.subr.mxu0 0.0
      %2742 = vmatpush1.msra.mxu0 0.0
      %2743 = vmatprep.subr.mxu0 0.0
      %2744 = vmatpush1.msra.mxu0 0.0
      %2745 = vmatprep.subr.mxu0 0.0
      %2746 = vmatpush1.msra.mxu0 0.0
      %2747 = vmatprep.subr.mxu0 0.0
      %2748 = vmatpush1.msra.mxu0 0.0
      %2749 = vmatprep.subr.mxu0 0.0
      %2750 = vmatpush1.msra.mxu0 0.0
      %2751 = vmatprep.subr.mxu0 0.0
      %2752 = vmatpush1.msra.mxu0 0.0
      %2753 = vmatprep.subr.mxu0 0.0
      %2754 = vmatpush1.msra.mxu0 0.0
      %2755 = vmatprep.subr.mxu0 0.0
      %2756 = vmatpush1.msra.mxu0 0.0
      %2757 = vmatprep.subr.mxu0 0.0
      %2758 = vmatpush1.msra.mxu0 0.0
      %2759 = vmatprep.subr.mxu0 0.0
      %2760 = vmatpush1.msra.mxu0 0.0
      %2761 = vmatprep.subr.mxu0 0.0
      %2762 = vmatpush1.msra.mxu0 0.0
      %2763 = vmatprep.subr.mxu0 0.0
      %2764 = vmatpush1.msra.mxu0 %v2728
      %2765 = vmatprep.subr.mxu0 0.0
      %2766 = vmatpush2.msra.mxu0 0.0
      %2767 = vmatprep.subr.mxu0 0.0
      %2768 = vmatpush2.msra.mxu0 0.0
      %2769 = vmatprep.subr.mxu0 0.0
      %2770 = vmatpush2.msra.mxu0 0.0
      %2771 = vmatprep.subr.mxu0 0.0
      %2772 = vmatpush2.msra.mxu0 0.0
      %2773 = vmatprep.subr.mxu0 0.0
      %2774 = vmatpush2.msra.mxu0 0.0
      %2775 = vmatprep.subr.mxu0 0.0
      %2776 = vmatpush2.msra.mxu0 0.0
      %2777 = vmatprep.subr.mxu0 0.0
      %2778 = vmatpush2.msra.mxu0 0.0
      %2779 = vmatprep.subr.mxu0 0.0
      %2780 = vmatpush2.msra.mxu0 0.0
      %2781 = vmatprep.subr.mxu0 0.0
      %2782 = vmatpush2.msra.mxu0 0.0
      %2783 = vmatprep.subr.mxu0 0.0
      %2784 = vmatpush2.msra.mxu0 0.0
      %2785 = vmatprep.subr.mxu0 0.0
      %2786 = vmatpush2.msra.mxu0 0.0
      %2787 = vmatprep.subr.mxu0 0.0
      %2788 = vmatpush2.msra.mxu0 0.0
      %2789 = vmatprep.subr.mxu0 0.0
      %2790 = vmatpush2.msra.mxu0 0.0
      %2791 = vmatprep.subr.mxu0 0.0
      %2792 = vmatpush2.msra.mxu0 0.0
      %2793 = vmatprep.subr.mxu0 0.0
      %2794 = vmatpush2.msra.mxu0 0.0
      %2795 = vmatprep.subr.mxu0 0.0
      %2796 = vmatpush2.msra.mxu0 0.0
      %2797 = vmatprep.mubr.f32.mxu0 0.0
      %2798 = vmatmul.mubr.f32.gmra.mxu0 %v2731
      %v2799 = vpop.f32.mrf.mxu0
      %v2800 = vadd.f32 %v2725, %v2799
      %v2801 = vpop.f32.mrf.mxu0
      %2802 = vdwg.mxu0
      %2804 = vset.pattern.permute.xlu0 0
      %2805 = vperm.xlu0 %2804, %v2800
      %v2806 = vpop.permute.xlu0 %2805
      %2808 = vst [vmem:[%s651] sm:$0x1] %v2806
      %p2809 = scmp.lt.s32.totalorder %s34, 1
      %s2810 = scalar_select %p2809, %s34, 1
      %s2811 = scalar_lea.vmem %s21, %s2810
      // Predicated region
      $region105: #{temporal_conv_net_forward.1} parent=103 // pred_check
        %p2812 = pneg %p498
      $region106: #{temporal_conv_net_forward.1} parent=103 // pred_check_branch
        %2814 = sbr.rel (%p2812) target = $region108
      $region107: #{temporal_conv_net_forward.1} parent=103 // pred_region
        _
      $region108: #{temporal_conv_net_forward.1} parent=103 // pred_fallthru
        _
    $region104: #{temporal_conv_net_forward.1} parent=5 // pred_fallthru
      _
    %p2815 = scmp.le.s32.totalorder 2, %s29
    // Predicated region
    $region109: #{temporal_conv_net_forward.1} parent=5 // pred_check
      %p2816 = pneg %p2815
    $region110: #{temporal_conv_net_forward.1} parent=5 // pred_check_branch
      %2818 = sbr.rel (%p2816) target = $region112
    $region111: #{temporal_conv_net_forward.1} parent=5 // pred_region
      %s2819 = ssub.s32 %s29, 2
      // Predicated region
      $region113: #{temporal_conv_net_forward.1} parent=111 // pred_check
        %p2820 = pneg %p504
      $region114: #{temporal_conv_net_forward.1} parent=111 // pred_check_branch
        %2822 = sbr.rel (%p2820) target = $region116
      $region115: #{temporal_conv_net_forward.1} parent=111 // pred_region
        %p2823 = scmp.lt.s32.totalorder %s35, 1
        %s2824 = scalar_select %p2823, %s35, 1
        %s2825 = scalar_lea.vmem %s21, %s2824
      $region116: #{temporal_conv_net_forward.1} parent=111 // pred_fallthru
        _
    $region112: #{temporal_conv_net_forward.1} parent=5 // pred_fallthru
      _
  $region6: #{temporal_conv_net_forward.1} parent=0 // loop_footer
    %s33 = sadd.s32 1, %s29
  $region7: #{temporal_conv_net_forward.1} parent=0 // loop_footer_branch
    %28 = sbr.rel target = $region3
  $region8: #{temporal_conv_net_forward.1} parent=0 // loop_exit
    _

</llo_original>
